<compile_context>
chip_gen: v6e
topology: v6e:2x2x1
jax: 0.10.0
libtpu: 0.0.40
codegen_flags: <defaults>
</compile_context>

<pallas_src>
import functools

import numpy as np
import jax
import jax.numpy as jnp
from jax import lax
from jax.experimental import pallas as pl
from jax.experimental.pallas import tpu as pltpu


def _sstcn_kernel(x_ref, m_ref, w_in_ref, b_in_ref, wdf_ref, bd_ref, w1_ref,
                  b1_ref, w_out_ref, b_out_ref, out_ref, final_ref, stack_ref,
                  *, t_valid, t_seg):
    F, Tc = out_ref.shape                        # chunk = whole segments, Tc % 128 == 0
    L = wdf_ref.shape[0]
    K = wdf_ref.shape[2] // F

    m = m_ref[...]                               # (1, Tc) f32, mask[:, 0:1, :] fused

    # Per-segment lane position, hoisted once; (1, Tc) broadcasts into every shift
    # mask so rolls never leak across segment (batch) boundaries.
    seg_pos = lax.broadcasted_iota(jnp.int32, (1, Tc), 1) % t_seg

    # out = self.conv_1x1(x)      (bf16 MXU, f32 accumulate; bias add on VPU)
    h = jnp.dot(w_in_ref[...], x_ref[...],
                preferred_element_type=jnp.float32) + b_in_ref[...]
    if t_valid != t_seg:
        # Zero each segment's lane-padding tail (the conv bias made it nonzero) so it
        # cannot leak into valid frames through the time shifts; the mask (zero in the
        # pad tail) keeps it zero after every layer.
        h = jnp.where(seg_pos < t_valid, h, 0.0)

    def shift(v, off):
        # y[:, s*t_seg + p] = v[:, s*t_seg + p + off] if 0 <= p+off < t_seg else 0.
        # `off` is static; |off| < t_seg is asserted in the wrapper.
        if off == 0:
            return v
        rolled = pltpu.roll(v, shift=(-off) % Tc, axis=1)
        if off > 0:
            return jnp.where(seg_pos < t_seg - off, rolled, 0.0)
        return jnp.where(seg_pos >= -off, rolled, 0.0)

    # Dilated residual layers (dropout == identity in eval mode).
    for l in range(L):
        dil = 2 ** l
        pad = dil + dil * (K - 3) // 2           # PyTorch: int(d + d*(k-3)/2)
        # Stage the K time-shifted taps into one bf16 VMEM tile -> ONE fused matmul.
        for k in range(K):
            stack_ref[k * F:(k + 1) * F, :] = (
                shift(h, k * dil - pad).astype(stack_ref.dtype))
        acc = jnp.dot(wdf_ref[l], stack_ref[...],
                      preferred_element_type=jnp.float32) + bd_ref[l]
        a = jnp.maximum(acc, 0.0)                                          # ReLU (f32)
        a = jnp.dot(w1_ref[l], a.astype(w1_ref.dtype),
                    preferred_element_type=jnp.float32) + b1_ref[l]
        h = (h + a) * m                                                    # residual * mask

    out_ref[...] = h.astype(out_ref.dtype)

    # final_out = self.conv_out(out) * mask[:, 0:1, :]
    fo = jnp.dot(w_out_ref[...], h.astype(w_out_ref.dtype),
                 preferred_element_type=jnp.float32) + b_out_ref[...]
    final_ref[...] = (fo * m).astype(final_ref.dtype)


def single_stage_model(x, mask, params):
    """x: (B, dim, T), mask: (B, num_classes, T). Returns (out, final_out)."""
    B, D, T = x.shape
    out_dtype = x.dtype
    F = params["w_in"].shape[0]
    C = params["w_out"].shape[0]
    L, _, _, K = params["wd"].shape
    bf = jnp.bfloat16

    # Lane-dense per-segment length: pad T up to a multiple of 128 (tail is zero).
    T_seg = ((T + 127) // 128) * 128
    dil_max = 2 ** (L - 1)
    pad_max = dil_max + dil_max * (K - 3) // 2
    off_max = max(pad_max, (K - 1) * dil_max - pad_max)
    assert off_max < T_seg, "roll-and-mask shift requires |offset| < segment length"

    m = mask[:, 0:1, :].astype(jnp.float32)
    if T_seg != T:
        x = jnp.pad(x, ((0, 0), (0, 0), (0, T_seg - T)))
        m = jnp.pad(m, ((0, 0), (0, 0), (0, T_seg - T)))

    # Fuse batch into the lane axis (layout plumbing outside the kernel).
    x_f = jnp.transpose(x, (1, 0, 2)).reshape(D, B * T_seg).astype(bf)
    m_f = jnp.transpose(m, (1, 0, 2)).reshape(1, B * T_seg)

    # Chunk the fused axis at segment boundaries (segments are independent -> no halos).
    lane_budget = 4096
    segs = max(1, min(B, lane_budget // T_seg))
    while B % segs:
        segs -= 1
    Tc = segs * T_seg
    n_chunks = B // segs

    # Weight prep: fused tap-major dilated-conv weights (L, F, K*F); matmul weights bf16,
    # biases kept f32 as (…, 1) columns for VPU adds.
    w_in = params["w_in"].astype(bf)                                        # (F, D)
    wdf = jnp.transpose(params["wd"], (0, 1, 3, 2)).reshape(L, F, K * F).astype(bf)
    w1 = params["w1"].astype(bf)                                            # (L, F, F)
    w_out = params["w_out"].astype(bf)                                      # (C, F)
    b_in = params["b_in"][:, None].astype(jnp.float32)                      # (F, 1)
    bd = params["bd"][..., None].astype(jnp.float32)                        # (L, F, 1)
    b1 = params["b1"][..., None].astype(jnp.float32)                        # (L, F, 1)
    b_out = params["b_out"][:, None].astype(jnp.float32)                    # (C, 1)

    def full_spec(shape):
        n = len(shape)
        return pl.BlockSpec(shape, lambda i, _n=n: (0,) * _n)

    in_specs = [
        pl.BlockSpec((D, Tc), lambda i: (0, i)),     # x (fused, bf16)
        pl.BlockSpec((1, Tc), lambda i: (0, i)),     # mask channel 0 (fused, f32)
        full_spec((F, D)), full_spec((F, 1)),        # conv_1x1 in
        full_spec((L, F, K * F)), full_spec((L, F, 1)),   # fused dilated convs + bias
        full_spec((L, F, F)), full_spec((L, F, 1)),  # per-layer 1x1 convs
        full_spec((C, F)), full_spec((C, 1)),        # conv_out
    ]
    out_specs = (
        pl.BlockSpec((F, Tc), lambda i: (0, i)),
        pl.BlockSpec((C, Tc), lambda i: (0, i)),
    )
    out_shapes = (
        jax.ShapeDtypeStruct((F, B * T_seg), jnp.float32),
        jax.ShapeDtypeStruct((C, B * T_seg), jnp.float32),
    )

    flops = 2 * B * T_seg * (D * F + L * (K * F * F + F * F) + F * C)
    bytes_accessed = (
        x_f.size * 2 + m_f.size * 4
        + (F + C) * B * T_seg * 4
        + (w_in.size + wdf.size + w1.size + w_out.size) * 2
        + (b_in.size + bd.size + b1.size + b_out.size) * 4)
    cost = pl.CostEstimate(flops=int(flops), transcendentals=0,
                           bytes_accessed=int(bytes_accessed))

    out_f, fin_f = pl.pallas_call(
        functools.partial(_sstcn_kernel, t_valid=T, t_seg=T_seg),
        out_shape=out_shapes,
        grid=(n_chunks,),
        in_specs=in_specs,
        out_specs=out_specs,
        scratch_shapes=[pltpu.VMEM((K * F, Tc), bf)],
        compiler_params=pltpu.CompilerParams(dimension_semantics=("parallel",)),
        cost_estimate=cost,
    )(x_f, m_f, w_in, b_in, wdf, bd, w1, b1, w_out, b_out)

    # Un-fuse the lane axis back to (B, C, T) and drop the lane padding.
    out = jnp.transpose(out_f.reshape(F, B, T_seg), (1, 0, 2))[:, :, :T]
    final = jnp.transpose(fin_f.reshape(C, B, T_seg), (1, 0, 2))[:, :, :T]
    return out.astype(out_dtype), final.astype(out_dtype)


def ref_forward(x, mask, params):
    """Pure-JAX reference (mirrors the PyTorch forward in eval mode), f32 HIGHEST."""
    hp = lax.Precision.HIGHEST
    m = mask[:, 0:1, :]
    out = jnp.einsum("fd,bdt->bft", params["w_in"], x, precision=hp) \
        + params["b_in"][None, :, None]
    L = params["wd"].shape[0]
    K = params["wd"].shape[-1]
    for l in range(L):
        dil = 2 ** l
        pad = dil + dil * (K - 3) // 2
        h = lax.conv_general_dilated(
            out, params["wd"][l], window_strides=(1,), padding=[(pad, pad)],
            rhs_dilation=(dil,), dimension_numbers=("NCH", "OIH", "NCH"),
            precision=hp)
        h = jax.nn.relu(h + params["bd"][l][None, :, None])
        h = jnp.einsum("fg,bgt->bft", params["w1"][l], h, precision=hp) \
            + params["b1"][l][None, :, None]
        out = (out + h) * m
    fo = jnp.einsum("cf,bft->bct", params["w_out"], out, precision=hp) \
        + params["b_out"][None, :, None]
    return out, fo * m


if __name__ == "__main__":
    B, T = 2, 200                                  # T not a multiple of 128 on purpose
    num_layers, num_f_maps, dim, num_classes, kernel_size = 4, 32, 16, 8, 3

    key = jax.random.PRNGKey(0)
    ks = jax.random.split(key, 10)
    sc = 0.1
    params = {
        "w_in": sc * jax.random.normal(ks[0], (num_f_maps, dim), jnp.float32),
        "b_in": sc * jax.random.normal(ks[1], (num_f_maps,), jnp.float32),
        "wd": sc * jax.random.normal(
            ks[2], (num_layers, num_f_maps, num_f_maps, kernel_size), jnp.float32),
        "bd": sc * jax.random.normal(ks[3], (num_layers, num_f_maps), jnp.float32),
        "w1": sc * jax.random.normal(
            ks[4], (num_layers, num_f_maps, num_f_maps), jnp.float32),
        "b1": sc * jax.random.normal(ks[5], (num_layers, num_f_maps), jnp.float32),
        "w_out": sc * jax.random.normal(ks[6], (num_classes, num_f_maps), jnp.float32),
        "b_out": sc * jax.random.normal(ks[7], (num_classes,), jnp.float32),
    }

    x = jax.random.normal(ks[8], (B, dim, T), jnp.float32)
    mask = jnp.ones((B, num_classes, T), jnp.float32)
    mask = mask.at[1, :, 150:].set(0.0)            # ragged sequence lengths

    out, final_out = jax.block_until_ready(single_stage_model(x, mask, params))

    ref_out, ref_final = ref_forward(x, mask, params)
    # Tolerance sized for the bf16 MXU path (weights/activations quantized to bf16,
    # f32 accumulation) vs. a HIGHEST-precision f32 reference.
    np.testing.assert_allclose(np.asarray(out), np.asarray(ref_out),
                               rtol=2e-2, atol=2e-2)
    np.testing.assert_allclose(np.asarray(final_out), np.asarray(ref_final),
                               rtol=2e-2, atol=2e-2)

    print("KERNEL_OK")
</pallas_src>

<mosaic_0001>
module attributes {stable_mosaic.version = 11 : i64} {
  func.func @_sstcn_kernel(%arg0: i32, %arg1: memref<16x512xbf16, #tpu.memory_space<vmem>>, %arg2: memref<1x512xf32, #tpu.memory_space<vmem>>, %arg3: memref<32x16xbf16, #tpu.memory_space<vmem>>, %arg4: memref<32x1xf32, #tpu.memory_space<vmem>>, %arg5: memref<4x32x96xbf16, #tpu.memory_space<vmem>>, %arg6: memref<4x32x1xf32, #tpu.memory_space<vmem>>, %arg7: memref<4x32x32xbf16, #tpu.memory_space<vmem>>, %arg8: memref<4x32x1xf32, #tpu.memory_space<vmem>>, %arg9: memref<8x32xbf16, #tpu.memory_space<vmem>>, %arg10: memref<8x1xf32, #tpu.memory_space<vmem>>, %arg11: memref<32x512xf32, #tpu.memory_space<vmem>>, %arg12: memref<8x512xf32, #tpu.memory_space<vmem>>, %arg13: memref<96x512xbf16, #tpu.memory_space<vmem>>) attributes {dimension_semantics = [#tpu.dimension_semantics<parallel>], iteration_bounds = array<i64: 1>, scalar_prefetch = 0 : i64, scratch_operands = 1 : i64, tpu.core_type = #tpu.core_type<tc>, window_params = [{transform_indices = @transform_0, window_bounds = array<i64: 16, 512>}, {transform_indices = @transform_1, window_bounds = array<i64: 1, 512>}, {pipeline_mode = #tpu.pipeline_mode<synchronous>, transform_indices = @transform_2, window_bounds = array<i64: 32, 16>}, {pipeline_mode = #tpu.pipeline_mode<synchronous>, transform_indices = @transform_3, window_bounds = array<i64: 32, 1>}, {pipeline_mode = #tpu.pipeline_mode<synchronous>, transform_indices = @transform_4, window_bounds = array<i64: 4, 32, 96>}, {pipeline_mode = #tpu.pipeline_mode<synchronous>, transform_indices = @transform_5, window_bounds = array<i64: 4, 32, 1>}, {pipeline_mode = #tpu.pipeline_mode<synchronous>, transform_indices = @transform_6, window_bounds = array<i64: 4, 32, 32>}, {pipeline_mode = #tpu.pipeline_mode<synchronous>, transform_indices = @transform_7, window_bounds = array<i64: 4, 32, 1>}, {pipeline_mode = #tpu.pipeline_mode<synchronous>, transform_indices = @transform_8, window_bounds = array<i64: 8, 32>}, {pipeline_mode = #tpu.pipeline_mode<synchronous>, transform_indices = @transform_9, window_bounds = array<i64: 8, 1>}, {transform_indices = @transform_10, window_bounds = array<i64: 32, 512>}, {transform_indices = @transform_11, window_bounds = array<i64: 8, 512>}]} {
    %c0 = arith.constant 0 : index
    %c0_0 = arith.constant 0 : index
    %0 = vector.load %arg2[%c0, %c0_0] : memref<1x512xf32, #tpu.memory_space<vmem>>, vector<1x512xf32>
    %1 = tpu.iota {dimensions = array<i32: 1>} : vector<1x512xi32>
    %c256_i32 = arith.constant 256 : i32
    %c0_i32 = arith.constant 0 : i32
    %2 = arith.cmpi eq, %c256_i32, %c0_i32 : i32
    %c1_i32 = arith.constant 1 : i32
    %3 = arith.select %2, %c1_i32, %c256_i32 : i32
    %4 = vector.broadcast %3 : i32 to vector<1x512xi32>
    %5 = arith.remsi %1, %4 : vector<1x512xi32>
    %c0_i32_1 = arith.constant 0 : i32
    %6 = vector.broadcast %c0_i32_1 : i32 to vector<1x512xi32>
    %7 = arith.cmpi ne, %5, %6 : vector<1x512xi32>
    %c0_i32_2 = arith.constant 0 : i32
    %8 = vector.broadcast %c0_i32_2 : i32 to vector<1x512xi32>
    %9 = arith.cmpi slt, %5, %8 : vector<1x512xi32>
    %c0_i32_3 = arith.constant 0 : i32
    %10 = arith.cmpi slt, %3, %c0_i32_3 : i32
    %11 = vector.broadcast %10 : i1 to vector<1x512xi1>
    %12 = vector.broadcast %11 : vector<1x512xi1> to vector<1x512xi1>
    %13 = arith.xori %9, %12 : vector<1x512xi1>
    %14 = arith.andi %13, %7 : vector<1x512xi1>
    %15 = vector.broadcast %3 : i32 to vector<1x512xi32>
    %16 = arith.addi %5, %15 : vector<1x512xi32>
    %17 = arith.select %14, %16, %5 : vector<1x512xi1>, vector<1x512xi32>
    %c0_4 = arith.constant 0 : index
    %c0_5 = arith.constant 0 : index
    %18 = vector.load %arg3[%c0_4, %c0_5] : memref<32x16xbf16, #tpu.memory_space<vmem>>, vector<32x16xbf16>
    %c0_6 = arith.constant 0 : index
    %c0_7 = arith.constant 0 : index
    %19 = vector.load %arg1[%c0_6, %c0_7] : memref<16x512xbf16, #tpu.memory_space<vmem>>, vector<16x512xbf16>
    %cst = arith.constant dense<0.000000e+00> : vector<32x512xf32>
    %20 = tpu.matmul %18, %19, %cst {dimension_numbers = #tpu.dot_dimension_numbers<[1], [0], [0], [1], [0, 0, 1, 1], [], []>} : vector<32x16xbf16>, vector<16x512xbf16>, vector<32x512xf32> -> vector<32x512xf32>
    %c0_8 = arith.constant 0 : index
    %c0_9 = arith.constant 0 : index
    %21 = vector.load %arg4[%c0_8, %c0_9] : memref<32x1xf32, #tpu.memory_space<vmem>>, vector<32x1xf32>
    %22 = vector.broadcast %21 : vector<32x1xf32> to vector<32x512xf32>
    %23 = arith.addf %20, %22 : vector<32x512xf32>
    %c200_i32 = arith.constant 200 : i32
    %24 = vector.broadcast %c200_i32 : i32 to vector<1x512xi32>
    %25 = arith.cmpi slt, %17, %24 : vector<1x512xi32>
    %cst_10 = arith.constant 0.000000e+00 : f32
    %26 = vector.shape_cast %25 : vector<1x512xi1> to vector<1x512xi1>
    %27 = vector.broadcast %26 : vector<1x512xi1> to vector<32x512xi1>
    %28 = vector.broadcast %cst_10 : f32 to vector<32x512xf32>
    %29 = arith.select %27, %23, %28 : vector<32x512xi1>, vector<32x512xf32>
    %c1_i32_11 = arith.constant 1 : i32
    %30 = tpu.dynamic_rotate %29 by %c1_i32_11 dim 1 : vector<32x512xf32>, i32 -> vector<32x512xf32>
    %c1_i32_12 = arith.constant 1 : i32
    %31 = vector.broadcast %c1_i32_12 : i32 to vector<1x512xi32>
    %32 = arith.cmpi sge, %17, %31 : vector<1x512xi32>
    %cst_13 = arith.constant 0.000000e+00 : f32
    %33 = vector.shape_cast %32 : vector<1x512xi1> to vector<1x512xi1>
    %34 = vector.broadcast %33 : vector<1x512xi1> to vector<32x512xi1>
    %35 = vector.broadcast %cst_13 : f32 to vector<32x512xf32>
    %36 = arith.select %34, %30, %35 : vector<32x512xi1>, vector<32x512xf32>
    %37 = arith.truncf %36 : vector<32x512xf32> to vector<32x512xbf16>
    %c0_14 = arith.constant 0 : index
    %c0_15 = arith.constant 0 : index
    %38 = vector.load %arg13[%c0_14, %c0_15] : memref<96x512xbf16, #tpu.memory_space<vmem>>, vector<32x512xbf16>
    tpu.vector_store %arg13[%c0_14, %c0_15], %37 {strides = array<i32>} : memref<96x512xbf16, #tpu.memory_space<vmem>>, vector<32x512xbf16>,
    %39 = arith.truncf %29 : vector<32x512xf32> to vector<32x512xbf16>
    %c32 = arith.constant 32 : index
    %c0_16 = arith.constant 0 : index
    %40 = vector.load %arg13[%c32, %c0_16] : memref<96x512xbf16, #tpu.memory_space<vmem>>, vector<32x512xbf16>
    tpu.vector_store %arg13[%c32, %c0_16], %39 {strides = array<i32>} : memref<96x512xbf16, #tpu.memory_space<vmem>>, vector<32x512xbf16>,
    %c511_i32 = arith.constant 511 : i32
    %41 = tpu.dynamic_rotate %29 by %c511_i32 dim 1 : vector<32x512xf32>, i32 -> vector<32x512xf32>
    %c255_i32 = arith.constant 255 : i32
    %42 = vector.broadcast %c255_i32 : i32 to vector<1x512xi32>
    %43 = arith.cmpi slt, %17, %42 : vector<1x512xi32>
    %cst_17 = arith.constant 0.000000e+00 : f32
    %44 = vector.shape_cast %43 : vector<1x512xi1> to vector<1x512xi1>
    %45 = vector.broadcast %44 : vector<1x512xi1> to vector<32x512xi1>
    %46 = vector.broadcast %cst_17 : f32 to vector<32x512xf32>
    %47 = arith.select %45, %41, %46 : vector<32x512xi1>, vector<32x512xf32>
    %48 = arith.truncf %47 : vector<32x512xf32> to vector<32x512xbf16>
    %c64 = arith.constant 64 : index
    %c0_18 = arith.constant 0 : index
    %49 = vector.load %arg13[%c64, %c0_18] : memref<96x512xbf16, #tpu.memory_space<vmem>>, vector<32x512xbf16>
    tpu.vector_store %arg13[%c64, %c0_18], %48 {strides = array<i32>} : memref<96x512xbf16, #tpu.memory_space<vmem>>, vector<32x512xbf16>,
    %c0_19 = arith.constant 0 : index
    %c0_20 = arith.constant 0 : index
    %c0_21 = arith.constant 0 : index
    %50 = vector.load %arg5[%c0_19, %c0_20, %c0_21] : memref<4x32x96xbf16, #tpu.memory_space<vmem>>, vector<1x32x96xbf16>
    %51 = vector.shape_cast %50 : vector<1x32x96xbf16> to vector<32x96xbf16>
    %c0_22 = arith.constant 0 : index
    %c0_23 = arith.constant 0 : index
    %52 = vector.load %arg13[%c0_22, %c0_23] : memref<96x512xbf16, #tpu.memory_space<vmem>>, vector<96x512xbf16>
    %cst_24 = arith.constant dense<0.000000e+00> : vector<32x512xf32>
    %53 = tpu.matmul %51, %52, %cst_24 {dimension_numbers = #tpu.dot_dimension_numbers<[1], [0], [0], [1], [0, 0, 1, 1], [], []>} : vector<32x96xbf16>, vector<96x512xbf16>, vector<32x512xf32> -> vector<32x512xf32>
    %c0_25 = arith.constant 0 : index
    %c0_26 = arith.constant 0 : index
    %c0_27 = arith.constant 0 : index
    %54 = vector.load %arg6[%c0_25, %c0_26, %c0_27] : memref<4x32x1xf32, #tpu.memory_space<vmem>>, vector<1x32x1xf32>
    %55 = vector.shape_cast %54 : vector<1x32x1xf32> to vector<32x1xf32>
    %56 = vector.broadcast %55 : vector<32x1xf32> to vector<32x512xf32>
    %57 = arith.addf %53, %56 : vector<32x512xf32>
    %cst_28 = arith.constant 0.000000e+00 : f32
    %58 = vector.broadcast %cst_28 : f32 to vector<32x512xf32>
    %59 = arith.maximumf %57, %58 : vector<32x512xf32>
    %c0_29 = arith.constant 0 : index
    %c0_30 = arith.constant 0 : index
    %c0_31 = arith.constant 0 : index
    %60 = vector.load %arg7[%c0_29, %c0_30, %c0_31] : memref<4x32x32xbf16, #tpu.memory_space<vmem>>, vector<1x32x32xbf16>
    %61 = vector.shape_cast %60 : vector<1x32x32xbf16> to vector<32x32xbf16>
    %62 = arith.truncf %59 : vector<32x512xf32> to vector<32x512xbf16>
    %cst_32 = arith.constant dense<0.000000e+00> : vector<32x512xf32>
    %63 = tpu.matmul %61, %62, %cst_32 {dimension_numbers = #tpu.dot_dimension_numbers<[1], [0], [0], [1], [0, 0, 1, 1], [], []>} : vector<32x32xbf16>, vector<32x512xbf16>, vector<32x512xf32> -> vector<32x512xf32>
    %c0_33 = arith.constant 0 : index
    %c0_34 = arith.constant 0 : index
    %c0_35 = arith.constant 0 : index
    %64 = vector.load %arg8[%c0_33, %c0_34, %c0_35] : memref<4x32x1xf32, #tpu.memory_space<vmem>>, vector<1x32x1xf32>
    %65 = vector.shape_cast %64 : vector<1x32x1xf32> to vector<32x1xf32>
    %66 = vector.broadcast %65 : vector<32x1xf32> to vector<32x512xf32>
    %67 = arith.addf %63, %66 : vector<32x512xf32>
    %68 = arith.addf %29, %67 : vector<32x512xf32>
    %69 = vector.broadcast %0 : vector<1x512xf32> to vector<32x512xf32>
    %70 = arith.mulf %68, %69 : vector<32x512xf32>
    %c2_i32 = arith.constant 2 : i32
    %71 = tpu.dynamic_rotate %70 by %c2_i32 dim 1 : vector<32x512xf32>, i32 -> vector<32x512xf32>
    %c2_i32_36 = arith.constant 2 : i32
    %72 = vector.broadcast %c2_i32_36 : i32 to vector<1x512xi32>
    %73 = arith.cmpi sge, %17, %72 : vector<1x512xi32>
    %cst_37 = arith.constant 0.000000e+00 : f32
    %74 = vector.shape_cast %73 : vector<1x512xi1> to vector<1x512xi1>
    %75 = vector.broadcast %74 : vector<1x512xi1> to vector<32x512xi1>
    %76 = vector.broadcast %cst_37 : f32 to vector<32x512xf32>
    %77 = arith.select %75, %71, %76 : vector<32x512xi1>, vector<32x512xf32>
    %78 = arith.truncf %77 : vector<32x512xf32> to vector<32x512xbf16>
    %c0_38 = arith.constant 0 : index
    %c0_39 = arith.constant 0 : index
    %79 = vector.load %arg13[%c0_38, %c0_39] : memref<96x512xbf16, #tpu.memory_space<vmem>>, vector<32x512xbf16>
    tpu.vector_store %arg13[%c0_38, %c0_39], %78 {strides = array<i32>} : memref<96x512xbf16, #tpu.memory_space<vmem>>, vector<32x512xbf16>,
    %80 = arith.truncf %70 : vector<32x512xf32> to vector<32x512xbf16>
    %c32_40 = arith.constant 32 : index
    %c0_41 = arith.constant 0 : index
    %81 = vector.load %arg13[%c32_40, %c0_41] : memref<96x512xbf16, #tpu.memory_space<vmem>>, vector<32x512xbf16>
    tpu.vector_store %arg13[%c32_40, %c0_41], %80 {strides = array<i32>} : memref<96x512xbf16, #tpu.memory_space<vmem>>, vector<32x512xbf16>,
    %c510_i32 = arith.constant 510 : i32
    %82 = tpu.dynamic_rotate %70 by %c510_i32 dim 1 : vector<32x512xf32>, i32 -> vector<32x512xf32>
    %c254_i32 = arith.constant 254 : i32
    %83 = vector.broadcast %c254_i32 : i32 to vector<1x512xi32>
    %84 = arith.cmpi slt, %17, %83 : vector<1x512xi32>
    %cst_42 = arith.constant 0.000000e+00 : f32
    %85 = vector.shape_cast %84 : vector<1x512xi1> to vector<1x512xi1>
    %86 = vector.broadcast %85 : vector<1x512xi1> to vector<32x512xi1>
    %87 = vector.broadcast %cst_42 : f32 to vector<32x512xf32>
    %88 = arith.select %86, %82, %87 : vector<32x512xi1>, vector<32x512xf32>
    %89 = arith.truncf %88 : vector<32x512xf32> to vector<32x512xbf16>
    %c64_43 = arith.constant 64 : index
    %c0_44 = arith.constant 0 : index
    %90 = vector.load %arg13[%c64_43, %c0_44] : memref<96x512xbf16, #tpu.memory_space<vmem>>, vector<32x512xbf16>
    tpu.vector_store %arg13[%c64_43, %c0_44], %89 {strides = array<i32>} : memref<96x512xbf16, #tpu.memory_space<vmem>>, vector<32x512xbf16>,
    %c1 = arith.constant 1 : index
    %c0_45 = arith.constant 0 : index
    %c0_46 = arith.constant 0 : index
    %91 = vector.load %arg5[%c1, %c0_45, %c0_46] : memref<4x32x96xbf16, #tpu.memory_space<vmem>>, vector<1x32x96xbf16>
    %92 = vector.shape_cast %91 : vector<1x32x96xbf16> to vector<32x96xbf16>
    %c0_47 = arith.constant 0 : index
    %c0_48 = arith.constant 0 : index
    %93 = vector.load %arg13[%c0_47, %c0_48] : memref<96x512xbf16, #tpu.memory_space<vmem>>, vector<96x512xbf16>
    %cst_49 = arith.constant dense<0.000000e+00> : vector<32x512xf32>
    %94 = tpu.matmul %92, %93, %cst_49 {dimension_numbers = #tpu.dot_dimension_numbers<[1], [0], [0], [1], [0, 0, 1, 1], [], []>} : vector<32x96xbf16>, vector<96x512xbf16>, vector<32x512xf32> -> vector<32x512xf32>
    %c1_50 = arith.constant 1 : index
    %c0_51 = arith.constant 0 : index
    %c0_52 = arith.constant 0 : index
    %95 = vector.load %arg6[%c1_50, %c0_51, %c0_52] : memref<4x32x1xf32, #tpu.memory_space<vmem>>, vector<1x32x1xf32>
    %96 = vector.shape_cast %95 : vector<1x32x1xf32> to vector<32x1xf32>
    %97 = vector.broadcast %96 : vector<32x1xf32> to vector<32x512xf32>
    %98 = arith.addf %94, %97 : vector<32x512xf32>
    %cst_53 = arith.constant 0.000000e+00 : f32
    %99 = vector.broadcast %cst_53 : f32 to vector<32x512xf32>
    %100 = arith.maximumf %98, %99 : vector<32x512xf32>
    %c1_54 = arith.constant 1 : index
    %c0_55 = arith.constant 0 : index
    %c0_56 = arith.constant 0 : index
    %101 = vector.load %arg7[%c1_54, %c0_55, %c0_56] : memref<4x32x32xbf16, #tpu.memory_space<vmem>>, vector<1x32x32xbf16>
    %102 = vector.shape_cast %101 : vector<1x32x32xbf16> to vector<32x32xbf16>
    %103 = arith.truncf %100 : vector<32x512xf32> to vector<32x512xbf16>
    %cst_57 = arith.constant dense<0.000000e+00> : vector<32x512xf32>
    %104 = tpu.matmul %102, %103, %cst_57 {dimension_numbers = #tpu.dot_dimension_numbers<[1], [0], [0], [1], [0, 0, 1, 1], [], []>} : vector<32x32xbf16>, vector<32x512xbf16>, vector<32x512xf32> -> vector<32x512xf32>
    %c1_58 = arith.constant 1 : index
    %c0_59 = arith.constant 0 : index
    %c0_60 = arith.constant 0 : index
    %105 = vector.load %arg8[%c1_58, %c0_59, %c0_60] : memref<4x32x1xf32, #tpu.memory_space<vmem>>, vector<1x32x1xf32>
    %106 = vector.shape_cast %105 : vector<1x32x1xf32> to vector<32x1xf32>
    %107 = vector.broadcast %106 : vector<32x1xf32> to vector<32x512xf32>
    %108 = arith.addf %104, %107 : vector<32x512xf32>
    %109 = arith.addf %70, %108 : vector<32x512xf32>
    %110 = vector.broadcast %0 : vector<1x512xf32> to vector<32x512xf32>
    %111 = arith.mulf %109, %110 : vector<32x512xf32>
    %c4_i32 = arith.constant 4 : i32
    %112 = tpu.dynamic_rotate %111 by %c4_i32 dim 1 : vector<32x512xf32>, i32 -> vector<32x512xf32>
    %c4_i32_61 = arith.constant 4 : i32
    %113 = vector.broadcast %c4_i32_61 : i32 to vector<1x512xi32>
    %114 = arith.cmpi sge, %17, %113 : vector<1x512xi32>
    %cst_62 = arith.constant 0.000000e+00 : f32
    %115 = vector.shape_cast %114 : vector<1x512xi1> to vector<1x512xi1>
    %116 = vector.broadcast %115 : vector<1x512xi1> to vector<32x512xi1>
    %117 = vector.broadcast %cst_62 : f32 to vector<32x512xf32>
    %118 = arith.select %116, %112, %117 : vector<32x512xi1>, vector<32x512xf32>
    %119 = arith.truncf %118 : vector<32x512xf32> to vector<32x512xbf16>
    %c0_63 = arith.constant 0 : index
    %c0_64 = arith.constant 0 : index
    %120 = vector.load %arg13[%c0_63, %c0_64] : memref<96x512xbf16, #tpu.memory_space<vmem>>, vector<32x512xbf16>
    tpu.vector_store %arg13[%c0_63, %c0_64], %119 {strides = array<i32>} : memref<96x512xbf16, #tpu.memory_space<vmem>>, vector<32x512xbf16>,
    %121 = arith.truncf %111 : vector<32x512xf32> to vector<32x512xbf16>
    %c32_65 = arith.constant 32 : index
    %c0_66 = arith.constant 0 : index
    %122 = vector.load %arg13[%c32_65, %c0_66] : memref<96x512xbf16, #tpu.memory_space<vmem>>, vector<32x512xbf16>
    tpu.vector_store %arg13[%c32_65, %c0_66], %121 {strides = array<i32>} : memref<96x512xbf16, #tpu.memory_space<vmem>>, vector<32x512xbf16>,
    %c508_i32 = arith.constant 508 : i32
    %123 = tpu.dynamic_rotate %111 by %c508_i32 dim 1 : vector<32x512xf32>, i32 -> vector<32x512xf32>
    %c252_i32 = arith.constant 252 : i32
    %124 = vector.broadcast %c252_i32 : i32 to vector<1x512xi32>
    %125 = arith.cmpi slt, %17, %124 : vector<1x512xi32>
    %cst_67 = arith.constant 0.000000e+00 : f32
    %126 = vector.shape_cast %125 : vector<1x512xi1> to vector<1x512xi1>
    %127 = vector.broadcast %126 : vector<1x512xi1> to vector<32x512xi1>
    %128 = vector.broadcast %cst_67 : f32 to vector<32x512xf32>
    %129 = arith.select %127, %123, %128 : vector<32x512xi1>, vector<32x512xf32>
    %130 = arith.truncf %129 : vector<32x512xf32> to vector<32x512xbf16>
    %c64_68 = arith.constant 64 : index
    %c0_69 = arith.constant 0 : index
    %131 = vector.load %arg13[%c64_68, %c0_69] : memref<96x512xbf16, #tpu.memory_space<vmem>>, vector<32x512xbf16>
    tpu.vector_store %arg13[%c64_68, %c0_69], %130 {strides = array<i32>} : memref<96x512xbf16, #tpu.memory_space<vmem>>, vector<32x512xbf16>,
    %c2 = arith.constant 2 : index
    %c0_70 = arith.constant 0 : index
    %c0_71 = arith.constant 0 : index
    %132 = vector.load %arg5[%c2, %c0_70, %c0_71] : memref<4x32x96xbf16, #tpu.memory_space<vmem>>, vector<1x32x96xbf16>
    %133 = vector.shape_cast %132 : vector<1x32x96xbf16> to vector<32x96xbf16>
    %c0_72 = arith.constant 0 : index
    %c0_73 = arith.constant 0 : index
    %134 = vector.load %arg13[%c0_72, %c0_73] : memref<96x512xbf16, #tpu.memory_space<vmem>>, vector<96x512xbf16>
    %cst_74 = arith.constant dense<0.000000e+00> : vector<32x512xf32>
    %135 = tpu.matmul %133, %134, %cst_74 {dimension_numbers = #tpu.dot_dimension_numbers<[1], [0], [0], [1], [0, 0, 1, 1], [], []>} : vector<32x96xbf16>, vector<96x512xbf16>, vector<32x512xf32> -> vector<32x512xf32>
    %c2_75 = arith.constant 2 : index
    %c0_76 = arith.constant 0 : index
    %c0_77 = arith.constant 0 : index
    %136 = vector.load %arg6[%c2_75, %c0_76, %c0_77] : memref<4x32x1xf32, #tpu.memory_space<vmem>>, vector<1x32x1xf32>
    %137 = vector.shape_cast %136 : vector<1x32x1xf32> to vector<32x1xf32>
    %138 = vector.broadcast %137 : vector<32x1xf32> to vector<32x512xf32>
    %139 = arith.addf %135, %138 : vector<32x512xf32>
    %cst_78 = arith.constant 0.000000e+00 : f32
    %140 = vector.broadcast %cst_78 : f32 to vector<32x512xf32>
    %141 = arith.maximumf %139, %140 : vector<32x512xf32>
    %c2_79 = arith.constant 2 : index
    %c0_80 = arith.constant 0 : index
    %c0_81 = arith.constant 0 : index
    %142 = vector.load %arg7[%c2_79, %c0_80, %c0_81] : memref<4x32x32xbf16, #tpu.memory_space<vmem>>, vector<1x32x32xbf16>
    %143 = vector.shape_cast %142 : vector<1x32x32xbf16> to vector<32x32xbf16>
    %144 = arith.truncf %141 : vector<32x512xf32> to vector<32x512xbf16>
    %cst_82 = arith.constant dense<0.000000e+00> : vector<32x512xf32>
    %145 = tpu.matmul %143, %144, %cst_82 {dimension_numbers = #tpu.dot_dimension_numbers<[1], [0], [0], [1], [0, 0, 1, 1], [], []>} : vector<32x32xbf16>, vector<32x512xbf16>, vector<32x512xf32> -> vector<32x512xf32>
    %c2_83 = arith.constant 2 : index
    %c0_84 = arith.constant 0 : index
    %c0_85 = arith.constant 0 : index
    %146 = vector.load %arg8[%c2_83, %c0_84, %c0_85] : memref<4x32x1xf32, #tpu.memory_space<vmem>>, vector<1x32x1xf32>
    %147 = vector.shape_cast %146 : vector<1x32x1xf32> to vector<32x1xf32>
    %148 = vector.broadcast %147 : vector<32x1xf32> to vector<32x512xf32>
    %149 = arith.addf %145, %148 : vector<32x512xf32>
    %150 = arith.addf %111, %149 : vector<32x512xf32>
    %151 = vector.broadcast %0 : vector<1x512xf32> to vector<32x512xf32>
    %152 = arith.mulf %150, %151 : vector<32x512xf32>
    %c8_i32 = arith.constant 8 : i32
    %153 = tpu.dynamic_rotate %152 by %c8_i32 dim 1 : vector<32x512xf32>, i32 -> vector<32x512xf32>
    %c8_i32_86 = arith.constant 8 : i32
    %154 = vector.broadcast %c8_i32_86 : i32 to vector<1x512xi32>
    %155 = arith.cmpi sge, %17, %154 : vector<1x512xi32>
    %cst_87 = arith.constant 0.000000e+00 : f32
    %156 = vector.shape_cast %155 : vector<1x512xi1> to vector<1x512xi1>
    %157 = vector.broadcast %156 : vector<1x512xi1> to vector<32x512xi1>
    %158 = vector.broadcast %cst_87 : f32 to vector<32x512xf32>
    %159 = arith.select %157, %153, %158 : vector<32x512xi1>, vector<32x512xf32>
    %160 = arith.truncf %159 : vector<32x512xf32> to vector<32x512xbf16>
    %c0_88 = arith.constant 0 : index
    %c0_89 = arith.constant 0 : index
    %161 = vector.load %arg13[%c0_88, %c0_89] : memref<96x512xbf16, #tpu.memory_space<vmem>>, vector<32x512xbf16>
    tpu.vector_store %arg13[%c0_88, %c0_89], %160 {strides = array<i32>} : memref<96x512xbf16, #tpu.memory_space<vmem>>, vector<32x512xbf16>,
    %162 = arith.truncf %152 : vector<32x512xf32> to vector<32x512xbf16>
    %c32_90 = arith.constant 32 : index
    %c0_91 = arith.constant 0 : index
    %163 = vector.load %arg13[%c32_90, %c0_91] : memref<96x512xbf16, #tpu.memory_space<vmem>>, vector<32x512xbf16>
    tpu.vector_store %arg13[%c32_90, %c0_91], %162 {strides = array<i32>} : memref<96x512xbf16, #tpu.memory_space<vmem>>, vector<32x512xbf16>,
    %c504_i32 = arith.constant 504 : i32
    %164 = tpu.dynamic_rotate %152 by %c504_i32 dim 1 : vector<32x512xf32>, i32 -> vector<32x512xf32>
    %c248_i32 = arith.constant 248 : i32
    %165 = vector.broadcast %c248_i32 : i32 to vector<1x512xi32>
    %166 = arith.cmpi slt, %17, %165 : vector<1x512xi32>
    %cst_92 = arith.constant 0.000000e+00 : f32
    %167 = vector.shape_cast %166 : vector<1x512xi1> to vector<1x512xi1>
    %168 = vector.broadcast %167 : vector<1x512xi1> to vector<32x512xi1>
    %169 = vector.broadcast %cst_92 : f32 to vector<32x512xf32>
    %170 = arith.select %168, %164, %169 : vector<32x512xi1>, vector<32x512xf32>
    %171 = arith.truncf %170 : vector<32x512xf32> to vector<32x512xbf16>
    %c64_93 = arith.constant 64 : index
    %c0_94 = arith.constant 0 : index
    %172 = vector.load %arg13[%c64_93, %c0_94] : memref<96x512xbf16, #tpu.memory_space<vmem>>, vector<32x512xbf16>
    tpu.vector_store %arg13[%c64_93, %c0_94], %171 {strides = array<i32>} : memref<96x512xbf16, #tpu.memory_space<vmem>>, vector<32x512xbf16>,
    %c3 = arith.constant 3 : index
    %c0_95 = arith.constant 0 : index
    %c0_96 = arith.constant 0 : index
    %173 = vector.load %arg5[%c3, %c0_95, %c0_96] : memref<4x32x96xbf16, #tpu.memory_space<vmem>>, vector<1x32x96xbf16>
    %174 = vector.shape_cast %173 : vector<1x32x96xbf16> to vector<32x96xbf16>
    %c0_97 = arith.constant 0 : index
    %c0_98 = arith.constant 0 : index
    %175 = vector.load %arg13[%c0_97, %c0_98] : memref<96x512xbf16, #tpu.memory_space<vmem>>, vector<96x512xbf16>
    %cst_99 = arith.constant dense<0.000000e+00> : vector<32x512xf32>
    %176 = tpu.matmul %174, %175, %cst_99 {dimension_numbers = #tpu.dot_dimension_numbers<[1], [0], [0], [1], [0, 0, 1, 1], [], []>} : vector<32x96xbf16>, vector<96x512xbf16>, vector<32x512xf32> -> vector<32x512xf32>
    %c3_100 = arith.constant 3 : index
    %c0_101 = arith.constant 0 : index
    %c0_102 = arith.constant 0 : index
    %177 = vector.load %arg6[%c3_100, %c0_101, %c0_102] : memref<4x32x1xf32, #tpu.memory_space<vmem>>, vector<1x32x1xf32>
    %178 = vector.shape_cast %177 : vector<1x32x1xf32> to vector<32x1xf32>
    %179 = vector.broadcast %178 : vector<32x1xf32> to vector<32x512xf32>
    %180 = arith.addf %176, %179 : vector<32x512xf32>
    %cst_103 = arith.constant 0.000000e+00 : f32
    %181 = vector.broadcast %cst_103 : f32 to vector<32x512xf32>
    %182 = arith.maximumf %180, %181 : vector<32x512xf32>
    %c3_104 = arith.constant 3 : index
    %c0_105 = arith.constant 0 : index
    %c0_106 = arith.constant 0 : index
    %183 = vector.load %arg7[%c3_104, %c0_105, %c0_106] : memref<4x32x32xbf16, #tpu.memory_space<vmem>>, vector<1x32x32xbf16>
    %184 = vector.shape_cast %183 : vector<1x32x32xbf16> to vector<32x32xbf16>
    %185 = arith.truncf %182 : vector<32x512xf32> to vector<32x512xbf16>
    %cst_107 = arith.constant dense<0.000000e+00> : vector<32x512xf32>
    %186 = tpu.matmul %184, %185, %cst_107 {dimension_numbers = #tpu.dot_dimension_numbers<[1], [0], [0], [1], [0, 0, 1, 1], [], []>} : vector<32x32xbf16>, vector<32x512xbf16>, vector<32x512xf32> -> vector<32x512xf32>
    %c3_108 = arith.constant 3 : index
    %c0_109 = arith.constant 0 : index
    %c0_110 = arith.constant 0 : index
    %187 = vector.load %arg8[%c3_108, %c0_109, %c0_110] : memref<4x32x1xf32, #tpu.memory_space<vmem>>, vector<1x32x1xf32>
    %188 = vector.shape_cast %187 : vector<1x32x1xf32> to vector<32x1xf32>
    %189 = vector.broadcast %188 : vector<32x1xf32> to vector<32x512xf32>
    %190 = arith.addf %186, %189 : vector<32x512xf32>
    %191 = arith.addf %152, %190 : vector<32x512xf32>
    %192 = vector.broadcast %0 : vector<1x512xf32> to vector<32x512xf32>
    %193 = arith.mulf %191, %192 : vector<32x512xf32>
    %c0_111 = arith.constant 0 : index
    %c0_112 = arith.constant 0 : index
    %194 = vector.load %arg11[%c0_111, %c0_112] : memref<32x512xf32, #tpu.memory_space<vmem>>, vector<32x512xf32>
    tpu.vector_store %arg11[%c0_111, %c0_112], %193 {strides = array<i32>} : memref<32x512xf32, #tpu.memory_space<vmem>>, vector<32x512xf32>,
    %c0_113 = arith.constant 0 : index
    %c0_114 = arith.constant 0 : index
    %195 = vector.load %arg9[%c0_113, %c0_114] : memref<8x32xbf16, #tpu.memory_space<vmem>>, vector<8x32xbf16>
    %196 = arith.truncf %193 : vector<32x512xf32> to vector<32x512xbf16>
    %cst_115 = arith.constant dense<0.000000e+00> : vector<8x512xf32>
    %197 = tpu.matmul %195, %196, %cst_115 {dimension_numbers = #tpu.dot_dimension_numbers<[1], [0], [0], [1], [0, 0, 1, 1], [], []>} : vector<8x32xbf16>, vector<32x512xbf16>, vector<8x512xf32> -> vector<8x512xf32>
    %c0_116 = arith.constant 0 : index
    %c0_117 = arith.constant 0 : index
    %198 = vector.load %arg10[%c0_116, %c0_117] : memref<8x1xf32, #tpu.memory_space<vmem>>, vector<8x1xf32>
    %199 = vector.broadcast %198 : vector<8x1xf32> to vector<8x512xf32>
    %200 = arith.addf %197, %199 : vector<8x512xf32>
    %201 = vector.broadcast %0 : vector<1x512xf32> to vector<8x512xf32>
    %202 = arith.mulf %200, %201 : vector<8x512xf32>
    %c0_118 = arith.constant 0 : index
    %c0_119 = arith.constant 0 : index
    %203 = vector.load %arg12[%c0_118, %c0_119] : memref<8x512xf32, #tpu.memory_space<vmem>>, vector<8x512xf32>
    tpu.vector_store %arg12[%c0_118, %c0_119], %202 {strides = array<i32>} : memref<8x512xf32, #tpu.memory_space<vmem>>, vector<8x512xf32>,
    return
  }
  func.func @transform_0(%arg0: i32) -> (i32, i32) {
    %c0_i32 = arith.constant 0 : i32
    %c0_i32_0 = arith.constant 0 : i32
    return %c0_i32, %arg0 : i32, i32
  }
  func.func @transform_1(%arg0: i32) -> (i32, i32) {
    %c0_i32 = arith.constant 0 : i32
    %c0_i32_0 = arith.constant 0 : i32
    return %c0_i32, %arg0 : i32, i32
  }
  func.func @transform_2(%arg0: i32) -> (i32, i32) {
    %c0_i32 = arith.constant 0 : i32
    %c0_i32_0 = arith.constant 0 : i32
    %c0_i32_1 = arith.constant 0 : i32
    return %c0_i32, %c0_i32_0 : i32, i32
  }
  func.func @transform_3(%arg0: i32) -> (i32, i32) {
    %c0_i32 = arith.constant 0 : i32
    %c0_i32_0 = arith.constant 0 : i32
    %c0_i32_1 = arith.constant 0 : i32
    return %c0_i32, %c0_i32_0 : i32, i32
  }
  func.func @transform_4(%arg0: i32) -> (i32, i32, i32) {
    %c0_i32 = arith.constant 0 : i32
    %c0_i32_0 = arith.constant 0 : i32
    %c0_i32_1 = arith.constant 0 : i32
    %c0_i32_2 = arith.constant 0 : i32
    return %c0_i32, %c0_i32_0, %c0_i32_1 : i32, i32, i32
  }
  func.func @transform_5(%arg0: i32) -> (i32, i32, i32) {
    %c0_i32 = arith.constant 0 : i32
    %c0_i32_0 = arith.constant 0 : i32
    %c0_i32_1 = arith.constant 0 : i32
    %c0_i32_2 = arith.constant 0 : i32
    return %c0_i32, %c0_i32_0, %c0_i32_1 : i32, i32, i32
  }
  func.func @transform_6(%arg0: i32) -> (i32, i32, i32) {
    %c0_i32 = arith.constant 0 : i32
    %c0_i32_0 = arith.constant 0 : i32
    %c0_i32_1 = arith.constant 0 : i32
    %c0_i32_2 = arith.constant 0 : i32
    return %c0_i32, %c0_i32_0, %c0_i32_1 : i32, i32, i32
  }
  func.func @transform_7(%arg0: i32) -> (i32, i32, i32) {
    %c0_i32 = arith.constant 0 : i32
    %c0_i32_0 = arith.constant 0 : i32
    %c0_i32_1 = arith.constant 0 : i32
    %c0_i32_2 = arith.constant 0 : i32
    return %c0_i32, %c0_i32_0, %c0_i32_1 : i32, i32, i32
  }
  func.func @transform_8(%arg0: i32) -> (i32, i32) {
    %c0_i32 = arith.constant 0 : i32
    %c0_i32_0 = arith.constant 0 : i32
    %c0_i32_1 = arith.constant 0 : i32
    return %c0_i32, %c0_i32_0 : i32, i32
  }
  func.func @transform_9(%arg0: i32) -> (i32, i32) {
    %c0_i32 = arith.constant 0 : i32
    %c0_i32_0 = arith.constant 0 : i32
    %c0_i32_1 = arith.constant 0 : i32
    return %c0_i32, %c0_i32_0 : i32, i32
  }
  func.func @transform_10(%arg0: i32) -> (i32, i32) {
    %c0_i32 = arith.constant 0 : i32
    %c0_i32_0 = arith.constant 0 : i32
    return %c0_i32, %arg0 : i32, i32
  }
  func.func @transform_11(%arg0: i32) -> (i32, i32) {
    %c0_i32 = arith.constant 0 : i32
    %c0_i32_0 = arith.constant 0 : i32
    return %c0_i32, %arg0 : i32, i32
  }
}

</mosaic_0001>

<llo_original>
// kernel: tpu_custom_call.1
$region0: #{tpu_custom_call.1}
  #allocation0 [shape = 'u32[]', space=smem, size = 0x4, offset = 0x4, fixed_abs, tag = 'smem constant byte address 0x4 - core index']
  #allocation1 [shape = 'u32[144,128]{1,0:T(1,128)}', space=vmem, size = 0x12000, scoped, tag = 'internal scratch']
  #allocation2 [shape = 'bf16[96,512]{1,0:T(8,128)(2,1)}', space=vmem, size = 0x18000, scoped, tag = 'scratch operand']
  %s0 = inlined_call_operand.vmem [shape: bf16[16,512], index: 0, kind: input, shape index: {}]
  %s1 = inlined_call_operand.vmem [shape: f32[1,512], index: 1, kind: input, shape index: {}]
  %s2 = inlined_call_operand.vmem [shape: bf16[32,16], index: 2, kind: input, shape index: {}]
  %s3 = inlined_call_operand.vmem [shape: f32[32,1], index: 3, kind: input, shape index: {}]
  %s4 = inlined_call_operand.vmem [shape: bf16[4,32,96], index: 4, kind: input, shape index: {}]
  %s5 = inlined_call_operand.vmem [shape: f32[4,32,1], index: 5, kind: input, shape index: {}]
  %s6 = inlined_call_operand.vmem [shape: bf16[4,32,32], index: 6, kind: input, shape index: {}]
  %s7 = inlined_call_operand.vmem [shape: f32[4,32,1], index: 7, kind: input, shape index: {}]
  %s8 = inlined_call_operand.vmem [shape: bf16[8,32], index: 8, kind: input, shape index: {}]
  %s9 = inlined_call_operand.vmem [shape: f32[8,1], index: 9, kind: input, shape index: {}]
  %s10 = inlined_call_operand.hbm [shape: f32[32,512], index: 10, kind: output, shape index: {0}]
  %s11 = inlined_call_operand.hbm [shape: f32[8,512], index: 11, kind: output, shape index: {1}]
  %12 = xla_tuple %s10, %s11
  %s13 = sld [smem:[#allocation0]]
  $region58: #{tpu_custom_call.1} parent=0
    _
  %s15 = ssub.s32 1, %s13
  %s16 = scalar_select 0, %s15, %s13
  $region1: #{tpu_custom_call.1} parent=0
    #allocation3 [shape = 'u8[65536]{0}', space=vmem, size = 0x10000, scoped, tag = 'output window, operand 0, single buffered']
    #allocation4 [shape = 's32[1]{0}', space=sflag, size = 0x4, scoped, tag = 'scoped memory for tpu_custom_call.1']
    #allocation5 [shape = 'u8[16384]{0}', space=vmem, size = 0x4000, scoped, tag = 'output window, operand 1, single buffered']
    #allocation6 [shape = 's32[1]{0}', space=sflag, size = 0x4, scoped, tag = 'scoped memory for tpu_custom_call.1']
    %17 = vsyncpa [#allocation4], 0
    %18 = vsyncpa [#allocation6], 0
    // Predicated region
    $region2: #{tpu_custom_call.1} parent=1 // pred_check
      _
    $region3: #{tpu_custom_call.1} parent=1 // pred_check_branch
      %20 = sbr.rel (0) target = $region5
    $region4: #{tpu_custom_call.1} parent=1 // pred_region
      _
    $region5: #{tpu_custom_call.1} parent=1 // pred_fallthru
      _
    // Predicated region
    $region6: #{tpu_custom_call.1} parent=1 // pred_check
      _
    $region7: #{tpu_custom_call.1} parent=1 // pred_check_branch
      %22 = sbr.rel (0) target = $region9
    $region8: #{tpu_custom_call.1} parent=1 // pred_region
      _
    $region9: #{tpu_custom_call.1} parent=1 // pred_fallthru
      _
    // Predicated region
    $region10: #{tpu_custom_call.1} parent=1 // pred_check
      _
    $region11: #{tpu_custom_call.1} parent=1 // pred_check_branch
      %24 = sbr.rel (0) target = $region13
    $region12: #{tpu_custom_call.1} parent=1 // pred_region
      _
    $region13: #{tpu_custom_call.1} parent=1 // pred_fallthru
      _
    // Predicated region
    $region14: #{tpu_custom_call.1} parent=1 // pred_check
      _
    $region15: #{tpu_custom_call.1} parent=1 // pred_check_branch
      %26 = sbr.rel (0) target = $region17
    $region16: #{tpu_custom_call.1} parent=1 // pred_region
      _
    $region17: #{tpu_custom_call.1} parent=1 // pred_fallthru
      _
    // Predicated region
    $region18: #{tpu_custom_call.1} parent=1 // pred_check
      _
    $region19: #{tpu_custom_call.1} parent=1 // pred_check_branch
      %28 = sbr.rel (0) target = $region21
    $region20: #{tpu_custom_call.1} parent=1 // pred_region
      _
    $region21: #{tpu_custom_call.1} parent=1 // pred_fallthru
      _
    // Predicated region
    $region22: #{tpu_custom_call.1} parent=1 // pred_check
      _
    $region23: #{tpu_custom_call.1} parent=1 // pred_check_branch
      %30 = sbr.rel (0) target = $region25
    $region24: #{tpu_custom_call.1} parent=1 // pred_region
      _
    $region25: #{tpu_custom_call.1} parent=1 // pred_fallthru
      _
    // Predicated region
    $region26: #{tpu_custom_call.1} parent=1 // pred_check
      _
    $region27: #{tpu_custom_call.1} parent=1 // pred_check_branch
      %32 = sbr.rel (0) target = $region29
    $region28: #{tpu_custom_call.1} parent=1 // pred_region
      _
    $region29: #{tpu_custom_call.1} parent=1 // pred_fallthru
      _
    // Predicated region
    $region30: #{tpu_custom_call.1} parent=1 // pred_check
      _
    $region31: #{tpu_custom_call.1} parent=1 // pred_check_branch
      %34 = sbr.rel (0) target = $region33
    $region32: #{tpu_custom_call.1} parent=1 // pred_region
      _
    $region33: #{tpu_custom_call.1} parent=1 // pred_fallthru
      _
    // Predicated region
    $region34: #{tpu_custom_call.1} parent=1 // pred_check
      _
    $region35: #{tpu_custom_call.1} parent=1 // pred_check_branch
      %36 = sbr.rel (0) target = $region37
    $region36: #{tpu_custom_call.1} parent=1 // pred_region
      _
    $region37: #{tpu_custom_call.1} parent=1 // pred_fallthru
      _
    // Predicated region
    $region38: #{tpu_custom_call.1} parent=1 // pred_check
      _
    $region39: #{tpu_custom_call.1} parent=1 // pred_check_branch
      %38 = sbr.rel (0) target = $region41
    $region40: #{tpu_custom_call.1} parent=1 // pred_region
      _
    $region41: #{tpu_custom_call.1} parent=1 // pred_fallthru
      _
    %v40 = vld [vmem:[%s1] sm:$0xf]
    %v41 = vlaneseq
    %v42 = vand.u32 %v41, 127
    %v43 = vadd.s32 %v42, 128
    %v44 = vadd.s32 %v42, 256
    %v45 = vadd.s32 %v42, 384
    %vm46 = vcmp.lt.s32.totalorder %v42, 0
    %v47 = vsub.s32 0, %v42
    %v48 = vsel %vm46, %v47, %v42
    %v49 = vshrl.u32 %v48, 8
    %v50 = vand.u32 %v48, 255
    %v51 = vsub.s32 0, %v50
    %v52 = vsel %vm46, %v51, %v50
    %vm53 = vcmp.lt.s32.totalorder %v43, 0
    %v54 = vsub.s32 0, %v43
    %v55 = vsel %vm53, %v54, %v43
    %v56 = vshrl.u32 %v55, 8
    %v57 = vand.u32 %v55, 255
    %v58 = vsub.s32 0, %v57
    %v59 = vsel %vm53, %v58, %v57
    %vm60 = vcmp.lt.s32.totalorder %v44, 0
    %v61 = vsub.s32 0, %v44
    %v62 = vsel %vm60, %v61, %v44
    %v63 = vshrl.u32 %v62, 8
    %v64 = vand.u32 %v62, 255
    %v65 = vsub.s32 0, %v64
    %v66 = vsel %vm60, %v65, %v64
    %vm67 = vcmp.lt.s32.totalorder %v45, 0
    %v68 = vsub.s32 0, %v45
    %v69 = vsel %vm67, %v68, %v45
    %v70 = vshrl.u32 %v69, 8
    %v71 = vand.u32 %v69, 255
    %v72 = vsub.s32 0, %v71
    %v73 = vsel %vm67, %v72, %v71
    %vm74 = vcmp.ne.s32.totalorder %v52, 0
    %vm75 = vcmp.ne.s32.totalorder %v59, 0
    %vm76 = vcmp.ne.s32.totalorder %v66, 0
    %vm77 = vcmp.ne.s32.totalorder %v73, 0
    %vm78 = vcmp.lt.s32.totalorder %v52, 0
    %vm79 = vcmp.lt.s32.totalorder %v59, 0
    %vm80 = vcmp.lt.s32.totalorder %v66, 0
    %vm81 = vcmp.lt.s32.totalorder %v73, 0
    %vm82 = vmand %vm78, %vm74
    %vm83 = vmand %vm79, %vm75
    %vm84 = vmand %vm80, %vm76
    %vm85 = vmand %vm81, %vm77
    %v86 = vadd.s32 %v52, 256
    %v87 = vadd.s32 %v59, 256
    %v88 = vadd.s32 %v66, 256
    %v89 = vadd.s32 %v73, 256
    %v90 = vsel %vm82, %v86, %v52
    %v91 = vsel %vm83, %v87, %v59
    %v92 = vsel %vm84, %v88, %v66
    %v93 = vsel %vm85, %v89, %v73
    %v94 = vld [vmem:[%s2] sm:$0xf]
    %v95 = vld [vmem:[%s2 + $0x4] sm:$0xf]
    %v96 = vld [vmem:[%s2 + $0x8] sm:$0xf]
    %v97 = vld [vmem:[%s2 + $0xc] sm:$0xf]
    %v98 = vld [vmem:[%s0] sm:$0xff]
    %v99 = vld [vmem:[%s0 + $0x8] sm:$0xff]
    %v100 = vld [vmem:[%s0 + $0x10] sm:$0xff]
    %v101 = vld [vmem:[%s0 + $0x18] sm:$0xff]
    %v102 = vld [vmem:[%s3] sm:$0xff]
    %v103 = vld [vmem:[%s3 + $0x8] sm:$0xff]
    %v104 = vld [vmem:[%s3 + $0x10] sm:$0xff]
    %v105 = vld [vmem:[%s3 + $0x18] sm:$0xff]
    %107 = vset.pattern.permute.xlu0 0
    %108 = vperm.xlu0 %107, %v102
    %v109 = vpop.permute.xlu0 %108
    %112 = vset.pattern.permute.xlu0 0
    %113 = vperm.xlu0 %112, %v103
    %v114 = vpop.permute.xlu0 %113
    %117 = vset.pattern.permute.xlu0 0
    %118 = vperm.xlu0 %117, %v104
    %v119 = vpop.permute.xlu0 %118
    %122 = vset.pattern.permute.xlu0 0
    %123 = vperm.xlu0 %122, %v105
    %v124 = vpop.permute.xlu0 %123
    %v130 = vunpack.c.l.b16 %v94
    %v131 = vunpack.c.l.b16 %v95
    %v132 = vunpack.c.l.b16 %v96
    %v133 = vunpack.c.l.b16 %v97
    %v134 = vpack.c.b16 %v131, %v130
    %v135 = vpack.c.b16 %v133, %v132
    %v140 = vunpack.c.l.b16 %v98
    %v141 = vunpack.c.h.b16 %v98
    %v142 = vunpack.c.l.b16 %v99
    %v143 = vunpack.c.h.b16 %v99
    %v144 = vunpack.c.l.b16 %v100
    %v145 = vunpack.c.h.b16 %v100
    %v146 = vunpack.c.l.b16 %v101
    %v147 = vunpack.c.h.b16 %v101
    %v148 = vpack.c.b16 %v144, %v140
    %v149 = vpack.c.b16 %v145, %v141
    %v150 = vpack.c.b16 %v146, %v142
    %v151 = vpack.c.b16 %v147, %v143
    %vm156 = vcmask 130048
    %v158 = vsel %vm156, %v134, 0
    %v161 = vsel %vm156, %v135, 0
    %163 = vmatprep.subr.bf16.mxu0 0
    %164 = vmatpush1.bf16.msra.mxu0 0
    %165 = vmatprep.subr.bf16.mxu0 0
    %166 = vmatpush1.bf16.msra.mxu0 0
    %167 = vmatprep.subr.bf16.mxu0 0
    %168 = vmatpush1.bf16.msra.mxu0 0
    %169 = vmatprep.subr.bf16.mxu0 0
    %170 = vmatpush1.bf16.msra.mxu0 0
    %171 = vmatprep.subr.bf16.mxu0 0
    %172 = vmatpush1.bf16.msra.mxu0 0
    %173 = vmatprep.subr.bf16.mxu0 0
    %174 = vmatpush1.bf16.msra.mxu0 0
    %175 = vmatprep.subr.bf16.mxu0 0
    %176 = vmatpush1.bf16.msra.mxu0 0
    %177 = vmatprep.subr.bf16.mxu0 %v149
    %178 = vmatpush1.bf16.msra.mxu0 %v148
    %179 = vmatprep.subr.bf16.mxu0 0
    %180 = vmatpush2.bf16.msra.mxu0 0
    %181 = vmatprep.subr.bf16.mxu0 0
    %182 = vmatpush2.bf16.msra.mxu0 0
    %183 = vmatprep.subr.bf16.mxu0 0
    %184 = vmatpush2.bf16.msra.mxu0 0
    %185 = vmatprep.subr.bf16.mxu0 0
    %186 = vmatpush2.bf16.msra.mxu0 0
    %187 = vmatprep.subr.bf16.mxu0 0
    %188 = vmatpush2.bf16.msra.mxu0 0
    %189 = vmatprep.subr.bf16.mxu0 0
    %190 = vmatpush2.bf16.msra.mxu0 0
    %191 = vmatprep.subr.bf16.mxu0 0
    %192 = vmatpush2.bf16.msra.mxu0 0
    %193 = vmatprep.subr.bf16.mxu0 0
    %194 = vmatpush2.bf16.msra.mxu0 0
    %195 = vmatprep.mubr.bf16.mxu0 0
    %196 = vmatmul.mubr.bf16.gmra.mxu0 %v158
    %v197 = vpop.f32.mrf.mxu0
    %v198 = vadd.f32 %v109, %v197
    %v199 = vpop.f32.mrf.mxu0
    %v200 = vadd.f32 %v109, %v199
    %v201 = vpop.f32.mrf.mxu0
    %v202 = vadd.f32 %v114, %v201
    %v203 = vpop.f32.mrf.mxu0
    %v204 = vadd.f32 %v114, %v203
    %205 = vmatprep.mubr.bf16.mxu0 0
    %206 = vmatmul.mubr.bf16.gmra.mxu0 %v161
    %v207 = vpop.f32.mrf.mxu0
    %v208 = vadd.f32 %v119, %v207
    %v209 = vpop.f32.mrf.mxu0
    %v210 = vadd.f32 %v119, %v209
    %v211 = vpop.f32.mrf.mxu0
    %v212 = vadd.f32 %v124, %v211
    %v213 = vpop.f32.mrf.mxu0
    %v214 = vadd.f32 %v124, %v213
    %215 = vdwg.mxu0
    %216 = vmatprep.subr.bf16.mxu0 0
    %217 = vmatpush1.bf16.msra.mxu0 0
    %218 = vmatprep.subr.bf16.mxu0 0
    %219 = vmatpush1.bf16.msra.mxu0 0
    %220 = vmatprep.subr.bf16.mxu0 0
    %221 = vmatpush1.bf16.msra.mxu0 0
    %222 = vmatprep.subr.bf16.mxu0 0
    %223 = vmatpush1.bf16.msra.mxu0 0
    %224 = vmatprep.subr.bf16.mxu0 0
    %225 = vmatpush1.bf16.msra.mxu0 0
    %226 = vmatprep.subr.bf16.mxu0 0
    %227 = vmatpush1.bf16.msra.mxu0 0
    %228 = vmatprep.subr.bf16.mxu0 0
    %229 = vmatpush1.bf16.msra.mxu0 0
    %230 = vmatprep.subr.bf16.mxu0 %v151
    %231 = vmatpush1.bf16.msra.mxu0 %v150
    %232 = vmatprep.subr.bf16.mxu0 0
    %233 = vmatpush2.bf16.msra.mxu0 0
    %234 = vmatprep.subr.bf16.mxu0 0
    %235 = vmatpush2.bf16.msra.mxu0 0
    %236 = vmatprep.subr.bf16.mxu0 0
    %237 = vmatpush2.bf16.msra.mxu0 0
    %238 = vmatprep.subr.bf16.mxu0 0
    %239 = vmatpush2.bf16.msra.mxu0 0
    %240 = vmatprep.subr.bf16.mxu0 0
    %241 = vmatpush2.bf16.msra.mxu0 0
    %242 = vmatprep.subr.bf16.mxu0 0
    %243 = vmatpush2.bf16.msra.mxu0 0
    %244 = vmatprep.subr.bf16.mxu0 0
    %245 = vmatpush2.bf16.msra.mxu0 0
    %246 = vmatprep.subr.bf16.mxu0 0
    %247 = vmatpush2.bf16.msra.mxu0 0
    %248 = vmatprep.mubr.bf16.mxu0 0
    %249 = vmatmul.mubr.bf16.gmra.mxu0 %v158
    %v250 = vpop.f32.mrf.mxu0
    %v251 = vadd.f32 %v109, %v250
    %v252 = vpop.f32.mrf.mxu0
    %v253 = vadd.f32 %v109, %v252
    %v254 = vpop.f32.mrf.mxu0
    %v255 = vadd.f32 %v114, %v254
    %v256 = vpop.f32.mrf.mxu0
    %v257 = vadd.f32 %v114, %v256
    %258 = vmatprep.mubr.bf16.mxu0 0
    %259 = vmatmul.mubr.bf16.gmra.mxu0 %v161
    %v260 = vpop.f32.mrf.mxu0
    %v261 = vadd.f32 %v119, %v260
    %v262 = vpop.f32.mrf.mxu0
    %v263 = vadd.f32 %v119, %v262
    %v264 = vpop.f32.mrf.mxu0
    %v265 = vadd.f32 %v124, %v264
    %v266 = vpop.f32.mrf.mxu0
    %v267 = vadd.f32 %v124, %v266
    %268 = vdwg.mxu0
    %vm269 = vcmp.lt.s32.totalorder %v90, 200
    %vm270 = vcmp.lt.s32.totalorder %v91, 200
    %vm271 = vcmp.lt.s32.totalorder %v92, 200
    %vm272 = vcmp.lt.s32.totalorder %v93, 200
    %v273 = vsel %vm269, 1, 0
    %v274 = vsel %vm270, 1, 0
    %v275 = vsel %vm271, 1, 0
    %v276 = vsel %vm272, 1, 0
    %vm277 = vcmp.eq.s32.totalorder %v273, 1
    %vm278 = vcmp.eq.s32.totalorder %v274, 1
    %vm279 = vcmp.eq.s32.totalorder %v275, 1
    %vm280 = vcmp.eq.s32.totalorder %v276, 1
    %v281 = vsel %vm277, %v198, 0.0
    %v282 = vsel %vm278, %v200, 0.0
    %v283 = vsel %vm279, %v251, 0.0
    %v284 = vsel %vm280, %v253, 0.0
    %v285 = vsel %vm277, %v202, 0.0
    %v286 = vsel %vm278, %v204, 0.0
    %v287 = vsel %vm279, %v255, 0.0
    %v288 = vsel %vm280, %v257, 0.0
    %v289 = vsel %vm277, %v208, 0.0
    %v290 = vsel %vm278, %v210, 0.0
    %v291 = vsel %vm279, %v261, 0.0
    %v292 = vsel %vm280, %v263, 0.0
    %v293 = vsel %vm277, %v212, 0.0
    %v294 = vsel %vm278, %v214, 0.0
    %v295 = vsel %vm279, %v265, 0.0
    %v296 = vsel %vm280, %v267, 0.0
    %297 = vrot.lane.b32.xlu0 %v281, 1
    %v298 = vpop.permute.xlu0 %297
    %299 = vrot.lane.b32.xlu0 %v285, 1
    %v300 = vpop.permute.xlu0 %299
    %301 = vrot.lane.b32.xlu0 %v289, 1
    %v302 = vpop.permute.xlu0 %301
    %303 = vrot.lane.b32.xlu0 %v293, 1
    %v304 = vpop.permute.xlu0 %303
    %305 = vrot.lane.b32.xlu0 %v282, 1
    %v306 = vpop.permute.xlu0 %305
    %307 = vrot.lane.b32.xlu0 %v286, 1
    %v308 = vpop.permute.xlu0 %307
    %309 = vrot.lane.b32.xlu0 %v290, 1
    %v310 = vpop.permute.xlu0 %309
    %311 = vrot.lane.b32.xlu0 %v294, 1
    %v312 = vpop.permute.xlu0 %311
    %313 = vrot.lane.b32.xlu0 %v283, 1
    %v314 = vpop.permute.xlu0 %313
    %315 = vrot.lane.b32.xlu0 %v287, 1
    %v316 = vpop.permute.xlu0 %315
    %317 = vrot.lane.b32.xlu0 %v291, 1
    %v318 = vpop.permute.xlu0 %317
    %319 = vrot.lane.b32.xlu0 %v295, 1
    %v320 = vpop.permute.xlu0 %319
    %321 = vrot.lane.b32.xlu0 %v284, 1
    %v322 = vpop.permute.xlu0 %321
    %323 = vrot.lane.b32.xlu0 %v288, 1
    %v324 = vpop.permute.xlu0 %323
    %325 = vrot.lane.b32.xlu0 %v292, 1
    %v326 = vpop.permute.xlu0 %325
    %327 = vrot.lane.b32.xlu0 %v296, 1
    %v328 = vpop.permute.xlu0 %327
    %vm329 = vcmp.lt.s32.totalorder %v42, 1
    %v330 = vsel %vm329, %v314, %v322
    %v331 = vsel %vm329, %v316, %v324
    %v332 = vsel %vm329, %v318, %v326
    %v333 = vsel %vm329, %v320, %v328
    %v334 = vsel %vm329, %v306, %v314
    %v335 = vsel %vm329, %v308, %v316
    %v336 = vsel %vm329, %v310, %v318
    %v337 = vsel %vm329, %v312, %v320
    %v338 = vsel %vm329, %v298, %v306
    %v339 = vsel %vm329, %v300, %v308
    %v340 = vsel %vm329, %v302, %v310
    %v341 = vsel %vm329, %v304, %v312
    %v342 = vsel %vm329, %v322, %v298
    %v343 = vsel %vm329, %v324, %v300
    %v344 = vsel %vm329, %v326, %v302
    %v345 = vsel %vm329, %v328, %v304
    %vm346 = vcmp.ge.s32.totalorder %v90, 1
    %vm347 = vcmp.ge.s32.totalorder %v91, 1
    %vm348 = vcmp.ge.s32.totalorder %v92, 1
    %vm349 = vcmp.ge.s32.totalorder %v93, 1
    %v350 = vsel %vm346, 1, 0
    %v351 = vsel %vm347, 1, 0
    %v352 = vsel %vm348, 1, 0
    %v353 = vsel %vm349, 1, 0
    %vm354 = vcmp.eq.s32.totalorder %v350, 1
    %vm355 = vcmp.eq.s32.totalorder %v351, 1
    %vm356 = vcmp.eq.s32.totalorder %v352, 1
    %vm357 = vcmp.eq.s32.totalorder %v353, 1
    %v358 = vsel %vm354, %v342, 0.0
    %v359 = vsel %vm355, %v338, 0.0
    %v360 = vsel %vm356, %v334, 0.0
    %v361 = vsel %vm357, %v330, 0.0
    %v362 = vsel %vm354, %v343, 0.0
    %v363 = vsel %vm355, %v339, 0.0
    %v364 = vsel %vm356, %v335, 0.0
    %v365 = vsel %vm357, %v331, 0.0
    %v366 = vsel %vm354, %v344, 0.0
    %v367 = vsel %vm355, %v340, 0.0
    %v368 = vsel %vm356, %v336, 0.0
    %v369 = vsel %vm357, %v332, 0.0
    %v370 = vsel %vm354, %v345, 0.0
    %v371 = vsel %vm355, %v341, 0.0
    %v372 = vsel %vm356, %v337, 0.0
    %v373 = vsel %vm357, %v333, 0.0
    %v374 = vpack.c.bf16 %v362, %v358
    %v375 = vpack.c.bf16 %v363, %v359
    %v376 = vpack.c.bf16 %v364, %v360
    %v377 = vpack.c.bf16 %v365, %v361
    %v378 = vpack.c.bf16 %v370, %v366
    %v379 = vpack.c.bf16 %v371, %v367
    %v380 = vpack.c.bf16 %v372, %v368
    %v381 = vpack.c.bf16 %v373, %v369
    %v390 = vunpack.c.l.b16 %v374
    %v391 = vunpack.c.l.b16 %v375
    %v392 = vunpack.c.l.b16 %v376
    %v393 = vunpack.c.l.b16 %v377
    %v394 = vunpack.c.h.b16 %v374
    %v395 = vunpack.c.h.b16 %v375
    %v396 = vunpack.c.h.b16 %v376
    %v397 = vunpack.c.h.b16 %v377
    %v398 = vunpack.c.l.b16 %v378
    %v399 = vunpack.c.l.b16 %v379
    %v400 = vunpack.c.l.b16 %v380
    %v401 = vunpack.c.l.b16 %v381
    %v402 = vunpack.c.h.b16 %v378
    %v403 = vunpack.c.h.b16 %v379
    %v404 = vunpack.c.h.b16 %v380
    %v405 = vunpack.c.h.b16 %v381
    %v406 = vpack.c.b16 %v391, %v390
    %v407 = vpack.c.b16 %v393, %v392
    %v408 = vpack.c.b16 %v395, %v394
    %v409 = vpack.c.b16 %v397, %v396
    %v410 = vpack.c.b16 %v399, %v398
    %v411 = vpack.c.b16 %v401, %v400
    %v412 = vpack.c.b16 %v403, %v402
    %v413 = vpack.c.b16 %v405, %v404
    %422 = vst [vmem:[#allocation2] sm:$0xff] %v406
    %423 = vst [vmem:[#allocation2 + $0x8] sm:$0xff] %v407
    %424 = vst [vmem:[#allocation2 + $0x10] sm:$0xff] %v408
    %425 = vst [vmem:[#allocation2 + $0x18] sm:$0xff] %v409
    %426 = vst [vmem:[#allocation2 + $0x20] sm:$0xff] %v410
    %427 = vst [vmem:[#allocation2 + $0x28] sm:$0xff] %v411
    %428 = vst [vmem:[#allocation2 + $0x30] sm:$0xff] %v412
    %429 = vst [vmem:[#allocation2 + $0x38] sm:$0xff] %v413
    %v430 = vpack.c.bf16 %v285, %v281
    %v431 = vpack.c.bf16 %v286, %v282
    %v432 = vpack.c.bf16 %v287, %v283
    %v433 = vpack.c.bf16 %v288, %v284
    %v434 = vpack.c.bf16 %v293, %v289
    %v435 = vpack.c.bf16 %v294, %v290
    %v436 = vpack.c.bf16 %v295, %v291
    %v437 = vpack.c.bf16 %v296, %v292
    %v446 = vunpack.c.l.b16 %v430
    %v447 = vunpack.c.l.b16 %v431
    %v448 = vunpack.c.l.b16 %v432
    %v449 = vunpack.c.l.b16 %v433
    %v450 = vunpack.c.h.b16 %v430
    %v451 = vunpack.c.h.b16 %v431
    %v452 = vunpack.c.h.b16 %v432
    %v453 = vunpack.c.h.b16 %v433
    %v454 = vunpack.c.l.b16 %v434
    %v455 = vunpack.c.l.b16 %v435
    %v456 = vunpack.c.l.b16 %v436
    %v457 = vunpack.c.l.b16 %v437
    %v458 = vunpack.c.h.b16 %v434
    %v459 = vunpack.c.h.b16 %v435
    %v460 = vunpack.c.h.b16 %v436
    %v461 = vunpack.c.h.b16 %v437
    %v462 = vpack.c.b16 %v447, %v446
    %v463 = vpack.c.b16 %v449, %v448
    %v464 = vpack.c.b16 %v451, %v450
    %v465 = vpack.c.b16 %v453, %v452
    %v466 = vpack.c.b16 %v455, %v454
    %v467 = vpack.c.b16 %v457, %v456
    %v468 = vpack.c.b16 %v459, %v458
    %v469 = vpack.c.b16 %v461, %v460
    %478 = vst [vmem:[#allocation2 + $0x40] sm:$0xff] %v462
    %479 = vst [vmem:[#allocation2 + $0x48] sm:$0xff] %v463
    %480 = vst [vmem:[#allocation2 + $0x50] sm:$0xff] %v464
    %481 = vst [vmem:[#allocation2 + $0x58] sm:$0xff] %v465
    %482 = vst [vmem:[#allocation2 + $0x60] sm:$0xff] %v466
    %483 = vst [vmem:[#allocation2 + $0x68] sm:$0xff] %v467
    %484 = vst [vmem:[#allocation2 + $0x70] sm:$0xff] %v468
    %485 = vst [vmem:[#allocation2 + $0x78] sm:$0xff] %v469
    %486 = vrot.lane.b32.xlu0 %v281, 127
    %v487 = vpop.permute.xlu0 %486
    %488 = vrot.lane.b32.xlu0 %v285, 127
    %v489 = vpop.permute.xlu0 %488
    %490 = vrot.lane.b32.xlu0 %v289, 127
    %v491 = vpop.permute.xlu0 %490
    %492 = vrot.lane.b32.xlu0 %v293, 127
    %v493 = vpop.permute.xlu0 %492
    %494 = vrot.lane.b32.xlu0 %v282, 127
    %v495 = vpop.permute.xlu0 %494
    %496 = vrot.lane.b32.xlu0 %v286, 127
    %v497 = vpop.permute.xlu0 %496
    %498 = vrot.lane.b32.xlu0 %v290, 127
    %v499 = vpop.permute.xlu0 %498
    %500 = vrot.lane.b32.xlu0 %v294, 127
    %v501 = vpop.permute.xlu0 %500
    %502 = vrot.lane.b32.xlu0 %v283, 127
    %v503 = vpop.permute.xlu0 %502
    %504 = vrot.lane.b32.xlu0 %v287, 127
    %v505 = vpop.permute.xlu0 %504
    %506 = vrot.lane.b32.xlu0 %v291, 127
    %v507 = vpop.permute.xlu0 %506
    %508 = vrot.lane.b32.xlu0 %v295, 127
    %v509 = vpop.permute.xlu0 %508
    %510 = vrot.lane.b32.xlu0 %v284, 127
    %v511 = vpop.permute.xlu0 %510
    %512 = vrot.lane.b32.xlu0 %v288, 127
    %v513 = vpop.permute.xlu0 %512
    %514 = vrot.lane.b32.xlu0 %v292, 127
    %v515 = vpop.permute.xlu0 %514
    %516 = vrot.lane.b32.xlu0 %v296, 127
    %v517 = vpop.permute.xlu0 %516
    %vm518 = vcmp.lt.s32.totalorder %v42, 127
    %v519 = vsel %vm518, %v503, %v511
    %v520 = vsel %vm518, %v505, %v513
    %v521 = vsel %vm518, %v507, %v515
    %v522 = vsel %vm518, %v509, %v517
    %v523 = vsel %vm518, %v495, %v503
    %v524 = vsel %vm518, %v497, %v505
    %v525 = vsel %vm518, %v499, %v507
    %v526 = vsel %vm518, %v501, %v509
    %v527 = vsel %vm518, %v487, %v495
    %v528 = vsel %vm518, %v489, %v497
    %v529 = vsel %vm518, %v491, %v499
    %v530 = vsel %vm518, %v493, %v501
    %v531 = vsel %vm518, %v511, %v487
    %v532 = vsel %vm518, %v513, %v489
    %v533 = vsel %vm518, %v515, %v491
    %v534 = vsel %vm518, %v517, %v493
    %vm535 = vcmp.lt.s32.totalorder %v90, 255
    %vm536 = vcmp.lt.s32.totalorder %v91, 255
    %vm537 = vcmp.lt.s32.totalorder %v92, 255
    %vm538 = vcmp.lt.s32.totalorder %v93, 255
    %v539 = vsel %vm535, 1, 0
    %v540 = vsel %vm536, 1, 0
    %v541 = vsel %vm537, 1, 0
    %v542 = vsel %vm538, 1, 0
    %vm543 = vcmp.eq.s32.totalorder %v539, 1
    %vm544 = vcmp.eq.s32.totalorder %v540, 1
    %vm545 = vcmp.eq.s32.totalorder %v541, 1
    %vm546 = vcmp.eq.s32.totalorder %v542, 1
    %v547 = vsel %vm543, %v527, 0.0
    %v548 = vsel %vm544, %v523, 0.0
    %v549 = vsel %vm545, %v519, 0.0
    %v550 = vsel %vm546, %v531, 0.0
    %v551 = vsel %vm543, %v528, 0.0
    %v552 = vsel %vm544, %v524, 0.0
    %v553 = vsel %vm545, %v520, 0.0
    %v554 = vsel %vm546, %v532, 0.0
    %v555 = vsel %vm543, %v529, 0.0
    %v556 = vsel %vm544, %v525, 0.0
    %v557 = vsel %vm545, %v521, 0.0
    %v558 = vsel %vm546, %v533, 0.0
    %v559 = vsel %vm543, %v530, 0.0
    %v560 = vsel %vm544, %v526, 0.0
    %v561 = vsel %vm545, %v522, 0.0
    %v562 = vsel %vm546, %v534, 0.0
    %v563 = vpack.c.bf16 %v551, %v547
    %v564 = vpack.c.bf16 %v552, %v548
    %v565 = vpack.c.bf16 %v553, %v549
    %v566 = vpack.c.bf16 %v554, %v550
    %v567 = vpack.c.bf16 %v559, %v555
    %v568 = vpack.c.bf16 %v560, %v556
    %v569 = vpack.c.bf16 %v561, %v557
    %v570 = vpack.c.bf16 %v562, %v558
    %v579 = vunpack.c.l.b16 %v563
    %v580 = vunpack.c.l.b16 %v564
    %v581 = vunpack.c.l.b16 %v565
    %v582 = vunpack.c.l.b16 %v566
    %v583 = vunpack.c.h.b16 %v563
    %v584 = vunpack.c.h.b16 %v564
    %v585 = vunpack.c.h.b16 %v565
    %v586 = vunpack.c.h.b16 %v566
    %v587 = vunpack.c.l.b16 %v567
    %v588 = vunpack.c.l.b16 %v568
    %v589 = vunpack.c.l.b16 %v569
    %v590 = vunpack.c.l.b16 %v570
    %v591 = vunpack.c.h.b16 %v567
    %v592 = vunpack.c.h.b16 %v568
    %v593 = vunpack.c.h.b16 %v569
    %v594 = vunpack.c.h.b16 %v570
    %v595 = vpack.c.b16 %v580, %v579
    %v596 = vpack.c.b16 %v582, %v581
    %v597 = vpack.c.b16 %v584, %v583
    %v598 = vpack.c.b16 %v586, %v585
    %v599 = vpack.c.b16 %v588, %v587
    %v600 = vpack.c.b16 %v590, %v589
    %v601 = vpack.c.b16 %v592, %v591
    %v602 = vpack.c.b16 %v594, %v593
    %611 = vst [vmem:[#allocation2 + $0x80] sm:$0xff] %v595
    %612 = vst [vmem:[#allocation2 + $0x88] sm:$0xff] %v596
    %613 = vst [vmem:[#allocation2 + $0x90] sm:$0xff] %v597
    %614 = vst [vmem:[#allocation2 + $0x98] sm:$0xff] %v598
    %615 = vst [vmem:[#allocation2 + $0xa0] sm:$0xff] %v599
    %616 = vst [vmem:[#allocation2 + $0xa8] sm:$0xff] %v600
    %617 = vst [vmem:[#allocation2 + $0xb0] sm:$0xff] %v601
    %618 = vst [vmem:[#allocation2 + $0xb8] sm:$0xff] %v602
    %v619 = vld [vmem:[%s4] sm:$0xf]
    %v620 = vld [vmem:[%s4 + $0x4] sm:$0xf]
    %v621 = vld [vmem:[%s4 + $0x8] sm:$0xf]
    %v622 = vld [vmem:[%s4 + $0xc] sm:$0xf]
    %v623 = vld [vmem:[#allocation2] sm:$0xff]
    %v624 = vld [vmem:[#allocation2 + $0x8] sm:$0xff]
    %v625 = vld [vmem:[#allocation2 + $0x10] sm:$0xff]
    %v626 = vld [vmem:[#allocation2 + $0x18] sm:$0xff]
    %v627 = vld [vmem:[#allocation2 + $0x20] sm:$0xff]
    %v628 = vld [vmem:[#allocation2 + $0x28] sm:$0xff]
    %v629 = vld [vmem:[#allocation2 + $0x30] sm:$0xff]
    %v630 = vld [vmem:[#allocation2 + $0x38] sm:$0xff]
    %v631 = vld [vmem:[#allocation2 + $0x40] sm:$0xff]
    %v632 = vld [vmem:[#allocation2 + $0x48] sm:$0xff]
    %v633 = vld [vmem:[#allocation2 + $0x50] sm:$0xff]
    %v634 = vld [vmem:[#allocation2 + $0x58] sm:$0xff]
    %v635 = vld [vmem:[#allocation2 + $0x60] sm:$0xff]
    %v636 = vld [vmem:[#allocation2 + $0x68] sm:$0xff]
    %v637 = vld [vmem:[#allocation2 + $0x70] sm:$0xff]
    %v638 = vld [vmem:[#allocation2 + $0x78] sm:$0xff]
    %v639 = vld [vmem:[#allocation2 + $0x80] sm:$0xff]
    %v640 = vld [vmem:[#allocation2 + $0x88] sm:$0xff]
    %v641 = vld [vmem:[#allocation2 + $0x90] sm:$0xff]
    %v642 = vld [vmem:[#allocation2 + $0x98] sm:$0xff]
    %v643 = vld [vmem:[#allocation2 + $0xa0] sm:$0xff]
    %v644 = vld [vmem:[#allocation2 + $0xa8] sm:$0xff]
    %v645 = vld [vmem:[#allocation2 + $0xb0] sm:$0xff]
    %v646 = vld [vmem:[#allocation2 + $0xb8] sm:$0xff]
    %v647 = vld [vmem:[%s5] sm:$0xff]
    %v648 = vld [vmem:[%s5 + $0x8] sm:$0xff]
    %v649 = vld [vmem:[%s5 + $0x10] sm:$0xff]
    %v650 = vld [vmem:[%s5 + $0x18] sm:$0xff]
    %652 = vset.pattern.permute.xlu0 0
    %653 = vperm.xlu0 %652, %v647
    %v654 = vpop.permute.xlu0 %653
    %657 = vset.pattern.permute.xlu0 0
    %658 = vperm.xlu0 %657, %v648
    %v659 = vpop.permute.xlu0 %658
    %662 = vset.pattern.permute.xlu0 0
    %663 = vperm.xlu0 %662, %v649
    %v664 = vpop.permute.xlu0 %663
    %667 = vset.pattern.permute.xlu0 0
    %668 = vperm.xlu0 %667, %v650
    %v669 = vpop.permute.xlu0 %668
    %v675 = vunpack.c.l.b16 %v619
    %v676 = vunpack.c.l.b16 %v620
    %v677 = vunpack.c.l.b16 %v621
    %v678 = vunpack.c.l.b16 %v622
    %v679 = vpack.c.b16 %v676, %v675
    %v680 = vpack.c.b16 %v678, %v677
    %v705 = vunpack.c.l.b16 %v623
    %v706 = vunpack.c.h.b16 %v623
    %v707 = vunpack.c.l.b16 %v624
    %v708 = vunpack.c.h.b16 %v624
    %v709 = vunpack.c.l.b16 %v625
    %v710 = vunpack.c.h.b16 %v625
    %v711 = vunpack.c.l.b16 %v626
    %v712 = vunpack.c.h.b16 %v626
    %v713 = vunpack.c.l.b16 %v627
    %v714 = vunpack.c.h.b16 %v627
    %v715 = vunpack.c.l.b16 %v628
    %v716 = vunpack.c.h.b16 %v628
    %v717 = vunpack.c.l.b16 %v629
    %v718 = vunpack.c.h.b16 %v629
    %v719 = vunpack.c.l.b16 %v630
    %v720 = vunpack.c.h.b16 %v630
    %v721 = vunpack.c.l.b16 %v631
    %v722 = vunpack.c.h.b16 %v631
    %v723 = vunpack.c.l.b16 %v632
    %v724 = vunpack.c.h.b16 %v632
    %v725 = vunpack.c.l.b16 %v633
    %v726 = vunpack.c.h.b16 %v633
    %v727 = vunpack.c.l.b16 %v634
    %v728 = vunpack.c.h.b16 %v634
    %v729 = vunpack.c.l.b16 %v635
    %v730 = vunpack.c.h.b16 %v635
    %v731 = vunpack.c.l.b16 %v636
    %v732 = vunpack.c.h.b16 %v636
    %v733 = vunpack.c.l.b16 %v637
    %v734 = vunpack.c.h.b16 %v637
    %v735 = vunpack.c.l.b16 %v638
    %v736 = vunpack.c.h.b16 %v638
    %v737 = vunpack.c.l.b16 %v639
    %v738 = vunpack.c.h.b16 %v639
    %v739 = vunpack.c.l.b16 %v640
    %v740 = vunpack.c.h.b16 %v640
    %v741 = vunpack.c.l.b16 %v641
    %v742 = vunpack.c.h.b16 %v641
    %v743 = vunpack.c.l.b16 %v642
    %v744 = vunpack.c.h.b16 %v642
    %v745 = vunpack.c.l.b16 %v643
    %v746 = vunpack.c.h.b16 %v643
    %v747 = vunpack.c.l.b16 %v644
    %v748 = vunpack.c.h.b16 %v644
    %v749 = vunpack.c.l.b16 %v645
    %v750 = vunpack.c.h.b16 %v645
    %v751 = vunpack.c.l.b16 %v646
    %v752 = vunpack.c.h.b16 %v646
    %v753 = vpack.c.b16 %v709, %v705
    %v754 = vpack.c.b16 %v710, %v706
    %v755 = vpack.c.b16 %v711, %v707
    %v756 = vpack.c.b16 %v712, %v708
    %v757 = vpack.c.b16 %v717, %v713
    %v758 = vpack.c.b16 %v718, %v714
    %v759 = vpack.c.b16 %v719, %v715
    %v760 = vpack.c.b16 %v720, %v716
    %v761 = vpack.c.b16 %v725, %v721
    %v762 = vpack.c.b16 %v726, %v722
    %v763 = vpack.c.b16 %v727, %v723
    %v764 = vpack.c.b16 %v728, %v724
    %v765 = vpack.c.b16 %v733, %v729
    %v766 = vpack.c.b16 %v734, %v730
    %v767 = vpack.c.b16 %v735, %v731
    %v768 = vpack.c.b16 %v736, %v732
    %v769 = vpack.c.b16 %v741, %v737
    %v770 = vpack.c.b16 %v742, %v738
    %v771 = vpack.c.b16 %v743, %v739
    %v772 = vpack.c.b16 %v744, %v740
    %v773 = vpack.c.b16 %v749, %v745
    %v774 = vpack.c.b16 %v750, %v746
    %v775 = vpack.c.b16 %v751, %v747
    %v776 = vpack.c.b16 %v752, %v748
    %vm801 = vcmask 785408
    %v803 = vsel %vm801, %v679, 0
    %v806 = vsel %vm801, %v680, 0
    %808 = vmatprep.subr.bf16.mxu0 0
    %809 = vmatpush1.bf16.msra.mxu0 0
    %810 = vmatprep.subr.bf16.mxu0 0
    %811 = vmatpush1.bf16.msra.mxu0 0
    %812 = vmatprep.subr.bf16.mxu0 %v774
    %813 = vmatpush1.bf16.msra.mxu0 %v773
    %814 = vmatprep.subr.bf16.mxu0 %v770
    %815 = vmatpush1.bf16.msra.mxu0 %v769
    %816 = vmatprep.subr.bf16.mxu0 %v766
    %817 = vmatpush1.bf16.msra.mxu0 %v765
    %818 = vmatprep.subr.bf16.mxu0 %v762
    %819 = vmatpush1.bf16.msra.mxu0 %v761
    %820 = vmatprep.subr.bf16.mxu0 %v758
    %821 = vmatpush1.bf16.msra.mxu0 %v757
    %822 = vmatprep.subr.bf16.mxu0 %v754
    %823 = vmatpush1.bf16.msra.mxu0 %v753
    %824 = vmatprep.subr.bf16.mxu0 0
    %825 = vmatpush2.bf16.msra.mxu0 0
    %826 = vmatprep.subr.bf16.mxu0 0
    %827 = vmatpush2.bf16.msra.mxu0 0
    %828 = vmatprep.subr.bf16.mxu0 0
    %829 = vmatpush2.bf16.msra.mxu0 0
    %830 = vmatprep.subr.bf16.mxu0 0
    %831 = vmatpush2.bf16.msra.mxu0 0
    %832 = vmatprep.subr.bf16.mxu0 0
    %833 = vmatpush2.bf16.msra.mxu0 0
    %834 = vmatprep.subr.bf16.mxu0 0
    %835 = vmatpush2.bf16.msra.mxu0 0
    %836 = vmatprep.subr.bf16.mxu0 0
    %837 = vmatpush2.bf16.msra.mxu0 0
    %838 = vmatprep.subr.bf16.mxu0 0
    %839 = vmatpush2.bf16.msra.mxu0 0
    %840 = vmatprep.mubr.bf16.mxu0 0
    %841 = vmatmul.mubr.bf16.gmra.mxu0 %v803
    %v842 = vpop.f32.mrf.mxu0
    %v843 = vadd.f32 %v654, %v842
    %v844 = vpop.f32.mrf.mxu0
    %v845 = vadd.f32 %v654, %v844
    %v846 = vpop.f32.mrf.mxu0
    %v847 = vadd.f32 %v659, %v846
    %v848 = vpop.f32.mrf.mxu0
    %v849 = vadd.f32 %v659, %v848
    %850 = vmatprep.mubr.bf16.mxu0 0
    %851 = vmatmul.mubr.bf16.gmra.mxu0 %v806
    %v852 = vpop.f32.mrf.mxu0
    %v853 = vadd.f32 %v664, %v852
    %v854 = vpop.f32.mrf.mxu0
    %v855 = vadd.f32 %v664, %v854
    %v856 = vpop.f32.mrf.mxu0
    %v857 = vadd.f32 %v669, %v856
    %v858 = vpop.f32.mrf.mxu0
    %v859 = vadd.f32 %v669, %v858
    %860 = vdwg.mxu0
    %861 = vmatprep.subr.bf16.mxu0 0
    %862 = vmatpush1.bf16.msra.mxu0 0
    %863 = vmatprep.subr.bf16.mxu0 0
    %864 = vmatpush1.bf16.msra.mxu0 0
    %865 = vmatprep.subr.bf16.mxu0 %v776
    %866 = vmatpush1.bf16.msra.mxu0 %v775
    %867 = vmatprep.subr.bf16.mxu0 %v772
    %868 = vmatpush1.bf16.msra.mxu0 %v771
    %869 = vmatprep.subr.bf16.mxu0 %v768
    %870 = vmatpush1.bf16.msra.mxu0 %v767
    %871 = vmatprep.subr.bf16.mxu0 %v764
    %872 = vmatpush1.bf16.msra.mxu0 %v763
    %873 = vmatprep.subr.bf16.mxu0 %v760
    %874 = vmatpush1.bf16.msra.mxu0 %v759
    %875 = vmatprep.subr.bf16.mxu0 %v756
    %876 = vmatpush1.bf16.msra.mxu0 %v755
    %877 = vmatprep.subr.bf16.mxu0 0
    %878 = vmatpush2.bf16.msra.mxu0 0
    %879 = vmatprep.subr.bf16.mxu0 0
    %880 = vmatpush2.bf16.msra.mxu0 0
    %881 = vmatprep.subr.bf16.mxu0 0
    %882 = vmatpush2.bf16.msra.mxu0 0
    %883 = vmatprep.subr.bf16.mxu0 0
    %884 = vmatpush2.bf16.msra.mxu0 0
    %885 = vmatprep.subr.bf16.mxu0 0
    %886 = vmatpush2.bf16.msra.mxu0 0
    %887 = vmatprep.subr.bf16.mxu0 0
    %888 = vmatpush2.bf16.msra.mxu0 0
    %889 = vmatprep.subr.bf16.mxu0 0
    %890 = vmatpush2.bf16.msra.mxu0 0
    %891 = vmatprep.subr.bf16.mxu0 0
    %892 = vmatpush2.bf16.msra.mxu0 0
    %893 = vmatprep.mubr.bf16.mxu0 0
    %894 = vmatmul.mubr.bf16.gmra.mxu0 %v803
    %v895 = vpop.f32.mrf.mxu0
    %v896 = vadd.f32 %v654, %v895
    %v897 = vpop.f32.mrf.mxu0
    %v898 = vadd.f32 %v654, %v897
    %v899 = vpop.f32.mrf.mxu0
    %v900 = vadd.f32 %v659, %v899
    %v901 = vpop.f32.mrf.mxu0
    %v902 = vadd.f32 %v659, %v901
    %903 = vmatprep.mubr.bf16.mxu0 0
    %904 = vmatmul.mubr.bf16.gmra.mxu0 %v806
    %v905 = vpop.f32.mrf.mxu0
    %v906 = vadd.f32 %v664, %v905
    %v907 = vpop.f32.mrf.mxu0
    %v908 = vadd.f32 %v664, %v907
    %v909 = vpop.f32.mrf.mxu0
    %v910 = vadd.f32 %v669, %v909
    %v911 = vpop.f32.mrf.mxu0
    %v912 = vadd.f32 %v669, %v911
    %913 = vdwg.mxu0
    %v914 = vmax.f32 %v843, 0.0
    %v915 = vmax.f32 %v845, 0.0
    %v916 = vmax.f32 %v896, 0.0
    %v917 = vmax.f32 %v898, 0.0
    %v918 = vmax.f32 %v847, 0.0
    %v919 = vmax.f32 %v849, 0.0
    %v920 = vmax.f32 %v900, 0.0
    %v921 = vmax.f32 %v902, 0.0
    %v922 = vmax.f32 %v853, 0.0
    %v923 = vmax.f32 %v855, 0.0
    %v924 = vmax.f32 %v906, 0.0
    %v925 = vmax.f32 %v908, 0.0
    %v926 = vmax.f32 %v857, 0.0
    %v927 = vmax.f32 %v859, 0.0
    %v928 = vmax.f32 %v910, 0.0
    %v929 = vmax.f32 %v912, 0.0
    %v930 = vld [vmem:[%s6] sm:$0xf]
    %v931 = vld [vmem:[%s6 + $0x4] sm:$0xf]
    %v932 = vld [vmem:[%s6 + $0x8] sm:$0xf]
    %v933 = vld [vmem:[%s6 + $0xc] sm:$0xf]
    %v934 = vpack.c.bf16 %v918, %v914
    %v935 = vpack.c.bf16 %v919, %v915
    %v936 = vpack.c.bf16 %v920, %v916
    %v937 = vpack.c.bf16 %v921, %v917
    %v938 = vpack.c.bf16 %v926, %v922
    %v939 = vpack.c.bf16 %v927, %v923
    %v940 = vpack.c.bf16 %v928, %v924
    %v941 = vpack.c.bf16 %v929, %v925
    %v942 = vld [vmem:[%s7] sm:$0xff]
    %v943 = vld [vmem:[%s7 + $0x8] sm:$0xff]
    %v944 = vld [vmem:[%s7 + $0x10] sm:$0xff]
    %v945 = vld [vmem:[%s7 + $0x18] sm:$0xff]
    %947 = vset.pattern.permute.xlu0 0
    %948 = vperm.xlu0 %947, %v942
    %v949 = vpop.permute.xlu0 %948
    %952 = vset.pattern.permute.xlu0 0
    %953 = vperm.xlu0 %952, %v943
    %v954 = vpop.permute.xlu0 %953
    %957 = vset.pattern.permute.xlu0 0
    %958 = vperm.xlu0 %957, %v944
    %v959 = vpop.permute.xlu0 %958
    %962 = vset.pattern.permute.xlu0 0
    %963 = vperm.xlu0 %962, %v945
    %v964 = vpop.permute.xlu0 %963
    %v970 = vunpack.c.l.b16 %v930
    %v971 = vunpack.c.l.b16 %v931
    %v972 = vunpack.c.l.b16 %v932
    %v973 = vunpack.c.l.b16 %v933
    %v974 = vpack.c.b16 %v971, %v970
    %v975 = vpack.c.b16 %v973, %v972
    %vm976 = vcmask 261120
    %v978 = vsel %vm976, %v974, 0
    %v981 = vsel %vm976, %v975, 0
    %983 = vmatprep.subr.bf16.mxu0 0
    %984 = vmatpush1.bf16.msra.mxu0 0
    %985 = vmatprep.subr.bf16.mxu0 0
    %986 = vmatpush1.bf16.msra.mxu0 0
    %987 = vmatprep.subr.bf16.mxu0 0
    %988 = vmatpush1.bf16.msra.mxu0 0
    %989 = vmatprep.subr.bf16.mxu0 0
    %990 = vmatpush1.bf16.msra.mxu0 0
    %991 = vmatprep.subr.bf16.mxu0 0
    %992 = vmatpush1.bf16.msra.mxu0 0
    %993 = vmatprep.subr.bf16.mxu0 0
    %994 = vmatpush1.bf16.msra.mxu0 0
    %995 = vmatprep.subr.bf16.mxu0 %v939
    %996 = vmatpush1.bf16.msra.mxu0 %v938
    %997 = vmatprep.subr.bf16.mxu0 %v935
    %998 = vmatpush1.bf16.msra.mxu0 %v934
    %999 = vmatprep.subr.bf16.mxu0 0
    %1000 = vmatpush2.bf16.msra.mxu0 0
    %1001 = vmatprep.subr.bf16.mxu0 0
    %1002 = vmatpush2.bf16.msra.mxu0 0
    %1003 = vmatprep.subr.bf16.mxu0 0
    %1004 = vmatpush2.bf16.msra.mxu0 0
    %1005 = vmatprep.subr.bf16.mxu0 0
    %1006 = vmatpush2.bf16.msra.mxu0 0
    %1007 = vmatprep.subr.bf16.mxu0 0
    %1008 = vmatpush2.bf16.msra.mxu0 0
    %1009 = vmatprep.subr.bf16.mxu0 0
    %1010 = vmatpush2.bf16.msra.mxu0 0
    %1011 = vmatprep.subr.bf16.mxu0 0
    %1012 = vmatpush2.bf16.msra.mxu0 0
    %1013 = vmatprep.subr.bf16.mxu0 0
    %1014 = vmatpush2.bf16.msra.mxu0 0
    %1015 = vmatprep.mubr.bf16.mxu0 0
    %1016 = vmatmul.mubr.bf16.gmra.mxu0 %v978
    %v1017 = vpop.f32.mrf.mxu0
    %v1018 = vadd.f32 %v949, %v1017
    %v1019 = vpop.f32.mrf.mxu0
    %v1020 = vadd.f32 %v949, %v1019
    %v1021 = vpop.f32.mrf.mxu0
    %v1022 = vadd.f32 %v954, %v1021
    %v1023 = vpop.f32.mrf.mxu0
    %v1024 = vadd.f32 %v954, %v1023
    %1025 = vmatprep.mubr.bf16.mxu0 0
    %1026 = vmatmul.mubr.bf16.gmra.mxu0 %v981
    %v1027 = vpop.f32.mrf.mxu0
    %v1028 = vadd.f32 %v959, %v1027
    %v1029 = vpop.f32.mrf.mxu0
    %v1030 = vadd.f32 %v959, %v1029
    %v1031 = vpop.f32.mrf.mxu0
    %v1032 = vadd.f32 %v964, %v1031
    %v1033 = vpop.f32.mrf.mxu0
    %v1034 = vadd.f32 %v964, %v1033
    %1035 = vdwg.mxu0
    %1036 = vmatprep.subr.bf16.mxu0 0
    %1037 = vmatpush1.bf16.msra.mxu0 0
    %1038 = vmatprep.subr.bf16.mxu0 0
    %1039 = vmatpush1.bf16.msra.mxu0 0
    %1040 = vmatprep.subr.bf16.mxu0 0
    %1041 = vmatpush1.bf16.msra.mxu0 0
    %1042 = vmatprep.subr.bf16.mxu0 0
    %1043 = vmatpush1.bf16.msra.mxu0 0
    %1044 = vmatprep.subr.bf16.mxu0 0
    %1045 = vmatpush1.bf16.msra.mxu0 0
    %1046 = vmatprep.subr.bf16.mxu0 0
    %1047 = vmatpush1.bf16.msra.mxu0 0
    %1048 = vmatprep.subr.bf16.mxu0 %v941
    %1049 = vmatpush1.bf16.msra.mxu0 %v940
    %1050 = vmatprep.subr.bf16.mxu0 %v937
    %1051 = vmatpush1.bf16.msra.mxu0 %v936
    %1052 = vmatprep.subr.bf16.mxu0 0
    %1053 = vmatpush2.bf16.msra.mxu0 0
    %1054 = vmatprep.subr.bf16.mxu0 0
    %1055 = vmatpush2.bf16.msra.mxu0 0
    %1056 = vmatprep.subr.bf16.mxu0 0
    %1057 = vmatpush2.bf16.msra.mxu0 0
    %1058 = vmatprep.subr.bf16.mxu0 0
    %1059 = vmatpush2.bf16.msra.mxu0 0
    %1060 = vmatprep.subr.bf16.mxu0 0
    %1061 = vmatpush2.bf16.msra.mxu0 0
    %1062 = vmatprep.subr.bf16.mxu0 0
    %1063 = vmatpush2.bf16.msra.mxu0 0
    %1064 = vmatprep.subr.bf16.mxu0 0
    %1065 = vmatpush2.bf16.msra.mxu0 0
    %1066 = vmatprep.subr.bf16.mxu0 0
    %1067 = vmatpush2.bf16.msra.mxu0 0
    %1068 = vmatprep.mubr.bf16.mxu0 0
    %1069 = vmatmul.mubr.bf16.gmra.mxu0 %v978
    %v1070 = vpop.f32.mrf.mxu0
    %v1071 = vadd.f32 %v949, %v1070
    %v1072 = vpop.f32.mrf.mxu0
    %v1073 = vadd.f32 %v949, %v1072
    %v1074 = vpop.f32.mrf.mxu0
    %v1075 = vadd.f32 %v954, %v1074
    %v1076 = vpop.f32.mrf.mxu0
    %v1077 = vadd.f32 %v954, %v1076
    %1078 = vmatprep.mubr.bf16.mxu0 0
    %1079 = vmatmul.mubr.bf16.gmra.mxu0 %v981
    %v1080 = vpop.f32.mrf.mxu0
    %v1081 = vadd.f32 %v959, %v1080
    %v1082 = vpop.f32.mrf.mxu0
    %v1083 = vadd.f32 %v959, %v1082
    %v1084 = vpop.f32.mrf.mxu0
    %v1085 = vadd.f32 %v964, %v1084
    %v1086 = vpop.f32.mrf.mxu0
    %v1087 = vadd.f32 %v964, %v1086
    %1088 = vdwg.mxu0
    %v1089 = vadd.f32 %v281, %v1018
    %v1090 = vadd.f32 %v282, %v1020
    %v1091 = vadd.f32 %v283, %v1071
    %v1092 = vadd.f32 %v284, %v1073
    %v1093 = vadd.f32 %v285, %v1022
    %v1094 = vadd.f32 %v286, %v1024
    %v1095 = vadd.f32 %v287, %v1075
    %v1096 = vadd.f32 %v288, %v1077
    %v1097 = vadd.f32 %v289, %v1028
    %v1098 = vadd.f32 %v290, %v1030
    %v1099 = vadd.f32 %v291, %v1081
    %v1100 = vadd.f32 %v292, %v1083
    %v1101 = vadd.f32 %v293, %v1032
    %v1102 = vadd.f32 %v294, %v1034
    %v1103 = vadd.f32 %v295, %v1085
    %v1104 = vadd.f32 %v296, %v1087
    %v1106 = vlaneseq
    %v1107 = vshrl.u32 %v1106, 7
    %v1108 = vsub.s32 0, %v1107
    %v1109 = vrot.slane %v40, %v1108
    %v1110 = vlaneseq
    %v1111 = vshrl.u32 %v1110, 7
    %v1112 = vsub.s32 1, %v1111
    %v1113 = vrot.slane %v40, %v1112
    %v1114 = vlaneseq
    %v1115 = vshrl.u32 %v1114, 7
    %v1116 = vsub.s32 2, %v1115
    %v1117 = vrot.slane %v40, %v1116
    %v1118 = vlaneseq
    %v1119 = vshrl.u32 %v1118, 7
    %v1120 = vsub.s32 3, %v1119
    %v1121 = vrot.slane %v40, %v1120
    %v1126 = vmul.f32 %v1089, %v1109
    %v1127 = vmul.f32 %v1090, %v1113
    %v1128 = vmul.f32 %v1091, %v1117
    %v1129 = vmul.f32 %v1092, %v1121
    %v1130 = vmul.f32 %v1093, %v1109
    %v1131 = vmul.f32 %v1094, %v1113
    %v1132 = vmul.f32 %v1095, %v1117
    %v1133 = vmul.f32 %v1096, %v1121
    %v1134 = vmul.f32 %v1097, %v1109
    %v1135 = vmul.f32 %v1098, %v1113
    %v1136 = vmul.f32 %v1099, %v1117
    %v1137 = vmul.f32 %v1100, %v1121
    %v1138 = vmul.f32 %v1101, %v1109
    %v1139 = vmul.f32 %v1102, %v1113
    %v1140 = vmul.f32 %v1103, %v1117
    %v1141 = vmul.f32 %v1104, %v1121
    %1142 = vrot.lane.b32.xlu0 %v1126, 2
    %v1143 = vpop.permute.xlu0 %1142
    %1144 = vrot.lane.b32.xlu0 %v1130, 2
    %v1145 = vpop.permute.xlu0 %1144
    %1146 = vrot.lane.b32.xlu0 %v1134, 2
    %v1147 = vpop.permute.xlu0 %1146
    %1148 = vrot.lane.b32.xlu0 %v1138, 2
    %v1149 = vpop.permute.xlu0 %1148
    %1150 = vrot.lane.b32.xlu0 %v1127, 2
    %v1151 = vpop.permute.xlu0 %1150
    %1152 = vrot.lane.b32.xlu0 %v1131, 2
    %v1153 = vpop.permute.xlu0 %1152
    %1154 = vrot.lane.b32.xlu0 %v1135, 2
    %v1155 = vpop.permute.xlu0 %1154
    %1156 = vrot.lane.b32.xlu0 %v1139, 2
    %v1157 = vpop.permute.xlu0 %1156
    %1158 = vrot.lane.b32.xlu0 %v1128, 2
    %v1159 = vpop.permute.xlu0 %1158
    %1160 = vrot.lane.b32.xlu0 %v1132, 2
    %v1161 = vpop.permute.xlu0 %1160
    %1162 = vrot.lane.b32.xlu0 %v1136, 2
    %v1163 = vpop.permute.xlu0 %1162
    %1164 = vrot.lane.b32.xlu0 %v1140, 2
    %v1165 = vpop.permute.xlu0 %1164
    %1166 = vrot.lane.b32.xlu0 %v1129, 2
    %v1167 = vpop.permute.xlu0 %1166
    %1168 = vrot.lane.b32.xlu0 %v1133, 2
    %v1169 = vpop.permute.xlu0 %1168
    %1170 = vrot.lane.b32.xlu0 %v1137, 2
    %v1171 = vpop.permute.xlu0 %1170
    %1172 = vrot.lane.b32.xlu0 %v1141, 2
    %v1173 = vpop.permute.xlu0 %1172
    %vm1174 = vcmp.lt.s32.totalorder %v42, 2
    %v1175 = vsel %vm1174, %v1159, %v1167
    %v1176 = vsel %vm1174, %v1161, %v1169
    %v1177 = vsel %vm1174, %v1163, %v1171
    %v1178 = vsel %vm1174, %v1165, %v1173
    %v1179 = vsel %vm1174, %v1151, %v1159
    %v1180 = vsel %vm1174, %v1153, %v1161
    %v1181 = vsel %vm1174, %v1155, %v1163
    %v1182 = vsel %vm1174, %v1157, %v1165
    %v1183 = vsel %vm1174, %v1143, %v1151
    %v1184 = vsel %vm1174, %v1145, %v1153
    %v1185 = vsel %vm1174, %v1147, %v1155
    %v1186 = vsel %vm1174, %v1149, %v1157
    %v1187 = vsel %vm1174, %v1167, %v1143
    %v1188 = vsel %vm1174, %v1169, %v1145
    %v1189 = vsel %vm1174, %v1171, %v1147
    %v1190 = vsel %vm1174, %v1173, %v1149
    %vm1191 = vcmp.ge.s32.totalorder %v90, 2
    %vm1192 = vcmp.ge.s32.totalorder %v91, 2
    %vm1193 = vcmp.ge.s32.totalorder %v92, 2
    %vm1194 = vcmp.ge.s32.totalorder %v93, 2
    %v1195 = vsel %vm1191, 1, 0
    %v1196 = vsel %vm1192, 1, 0
    %v1197 = vsel %vm1193, 1, 0
    %v1198 = vsel %vm1194, 1, 0
    %vm1199 = vcmp.eq.s32.totalorder %v1195, 1
    %vm1200 = vcmp.eq.s32.totalorder %v1196, 1
    %vm1201 = vcmp.eq.s32.totalorder %v1197, 1
    %vm1202 = vcmp.eq.s32.totalorder %v1198, 1
    %v1203 = vsel %vm1199, %v1187, 0.0
    %v1204 = vsel %vm1200, %v1183, 0.0
    %v1205 = vsel %vm1201, %v1179, 0.0
    %v1206 = vsel %vm1202, %v1175, 0.0
    %v1207 = vsel %vm1199, %v1188, 0.0
    %v1208 = vsel %vm1200, %v1184, 0.0
    %v1209 = vsel %vm1201, %v1180, 0.0
    %v1210 = vsel %vm1202, %v1176, 0.0
    %v1211 = vsel %vm1199, %v1189, 0.0
    %v1212 = vsel %vm1200, %v1185, 0.0
    %v1213 = vsel %vm1201, %v1181, 0.0
    %v1214 = vsel %vm1202, %v1177, 0.0
    %v1215 = vsel %vm1199, %v1190, 0.0
    %v1216 = vsel %vm1200, %v1186, 0.0
    %v1217 = vsel %vm1201, %v1182, 0.0
    %v1218 = vsel %vm1202, %v1178, 0.0
    %v1219 = vpack.c.bf16 %v1207, %v1203
    %v1220 = vpack.c.bf16 %v1208, %v1204
    %v1221 = vpack.c.bf16 %v1209, %v1205
    %v1222 = vpack.c.bf16 %v1210, %v1206
    %v1223 = vpack.c.bf16 %v1215, %v1211
    %v1224 = vpack.c.bf16 %v1216, %v1212
    %v1225 = vpack.c.bf16 %v1217, %v1213
    %v1226 = vpack.c.bf16 %v1218, %v1214
    %v1235 = vunpack.c.l.b16 %v1219
    %v1236 = vunpack.c.l.b16 %v1220
    %v1237 = vunpack.c.l.b16 %v1221
    %v1238 = vunpack.c.l.b16 %v1222
    %v1239 = vunpack.c.h.b16 %v1219
    %v1240 = vunpack.c.h.b16 %v1220
    %v1241 = vunpack.c.h.b16 %v1221
    %v1242 = vunpack.c.h.b16 %v1222
    %v1243 = vunpack.c.l.b16 %v1223
    %v1244 = vunpack.c.l.b16 %v1224
    %v1245 = vunpack.c.l.b16 %v1225
    %v1246 = vunpack.c.l.b16 %v1226
    %v1247 = vunpack.c.h.b16 %v1223
    %v1248 = vunpack.c.h.b16 %v1224
    %v1249 = vunpack.c.h.b16 %v1225
    %v1250 = vunpack.c.h.b16 %v1226
    %v1251 = vpack.c.b16 %v1236, %v1235
    %v1252 = vpack.c.b16 %v1238, %v1237
    %v1253 = vpack.c.b16 %v1240, %v1239
    %v1254 = vpack.c.b16 %v1242, %v1241
    %v1255 = vpack.c.b16 %v1244, %v1243
    %v1256 = vpack.c.b16 %v1246, %v1245
    %v1257 = vpack.c.b16 %v1248, %v1247
    %v1258 = vpack.c.b16 %v1250, %v1249
    %1267 = vst [vmem:[#allocation2] sm:$0xff] %v1251
    %1268 = vst [vmem:[#allocation2 + $0x8] sm:$0xff] %v1252
    %1269 = vst [vmem:[#allocation2 + $0x10] sm:$0xff] %v1253
    %1270 = vst [vmem:[#allocation2 + $0x18] sm:$0xff] %v1254
    %1271 = vst [vmem:[#allocation2 + $0x20] sm:$0xff] %v1255
    %1272 = vst [vmem:[#allocation2 + $0x28] sm:$0xff] %v1256
    %1273 = vst [vmem:[#allocation2 + $0x30] sm:$0xff] %v1257
    %1274 = vst [vmem:[#allocation2 + $0x38] sm:$0xff] %v1258
    %v1275 = vpack.c.bf16 %v1130, %v1126
    %v1276 = vpack.c.bf16 %v1131, %v1127
    %v1277 = vpack.c.bf16 %v1132, %v1128
    %v1278 = vpack.c.bf16 %v1133, %v1129
    %v1279 = vpack.c.bf16 %v1138, %v1134
    %v1280 = vpack.c.bf16 %v1139, %v1135
    %v1281 = vpack.c.bf16 %v1140, %v1136
    %v1282 = vpack.c.bf16 %v1141, %v1137
    %v1291 = vunpack.c.l.b16 %v1275
    %v1292 = vunpack.c.l.b16 %v1276
    %v1293 = vunpack.c.l.b16 %v1277
    %v1294 = vunpack.c.l.b16 %v1278
    %v1295 = vunpack.c.h.b16 %v1275
    %v1296 = vunpack.c.h.b16 %v1276
    %v1297 = vunpack.c.h.b16 %v1277
    %v1298 = vunpack.c.h.b16 %v1278
    %v1299 = vunpack.c.l.b16 %v1279
    %v1300 = vunpack.c.l.b16 %v1280
    %v1301 = vunpack.c.l.b16 %v1281
    %v1302 = vunpack.c.l.b16 %v1282
    %v1303 = vunpack.c.h.b16 %v1279
    %v1304 = vunpack.c.h.b16 %v1280
    %v1305 = vunpack.c.h.b16 %v1281
    %v1306 = vunpack.c.h.b16 %v1282
    %v1307 = vpack.c.b16 %v1292, %v1291
    %v1308 = vpack.c.b16 %v1294, %v1293
    %v1309 = vpack.c.b16 %v1296, %v1295
    %v1310 = vpack.c.b16 %v1298, %v1297
    %v1311 = vpack.c.b16 %v1300, %v1299
    %v1312 = vpack.c.b16 %v1302, %v1301
    %v1313 = vpack.c.b16 %v1304, %v1303
    %v1314 = vpack.c.b16 %v1306, %v1305
    %1323 = vst [vmem:[#allocation2 + $0x40] sm:$0xff] %v1307
    %1324 = vst [vmem:[#allocation2 + $0x48] sm:$0xff] %v1308
    %1325 = vst [vmem:[#allocation2 + $0x50] sm:$0xff] %v1309
    %1326 = vst [vmem:[#allocation2 + $0x58] sm:$0xff] %v1310
    %1327 = vst [vmem:[#allocation2 + $0x60] sm:$0xff] %v1311
    %1328 = vst [vmem:[#allocation2 + $0x68] sm:$0xff] %v1312
    %1329 = vst [vmem:[#allocation2 + $0x70] sm:$0xff] %v1313
    %1330 = vst [vmem:[#allocation2 + $0x78] sm:$0xff] %v1314
    %1331 = vrot.lane.b32.xlu0 %v1126, 126
    %v1332 = vpop.permute.xlu0 %1331
    %1333 = vrot.lane.b32.xlu0 %v1130, 126
    %v1334 = vpop.permute.xlu0 %1333
    %1335 = vrot.lane.b32.xlu0 %v1134, 126
    %v1336 = vpop.permute.xlu0 %1335
    %1337 = vrot.lane.b32.xlu0 %v1138, 126
    %v1338 = vpop.permute.xlu0 %1337
    %1339 = vrot.lane.b32.xlu0 %v1127, 126
    %v1340 = vpop.permute.xlu0 %1339
    %1341 = vrot.lane.b32.xlu0 %v1131, 126
    %v1342 = vpop.permute.xlu0 %1341
    %1343 = vrot.lane.b32.xlu0 %v1135, 126
    %v1344 = vpop.permute.xlu0 %1343
    %1345 = vrot.lane.b32.xlu0 %v1139, 126
    %v1346 = vpop.permute.xlu0 %1345
    %1347 = vrot.lane.b32.xlu0 %v1128, 126
    %v1348 = vpop.permute.xlu0 %1347
    %1349 = vrot.lane.b32.xlu0 %v1132, 126
    %v1350 = vpop.permute.xlu0 %1349
    %1351 = vrot.lane.b32.xlu0 %v1136, 126
    %v1352 = vpop.permute.xlu0 %1351
    %1353 = vrot.lane.b32.xlu0 %v1140, 126
    %v1354 = vpop.permute.xlu0 %1353
    %1355 = vrot.lane.b32.xlu0 %v1129, 126
    %v1356 = vpop.permute.xlu0 %1355
    %1357 = vrot.lane.b32.xlu0 %v1133, 126
    %v1358 = vpop.permute.xlu0 %1357
    %1359 = vrot.lane.b32.xlu0 %v1137, 126
    %v1360 = vpop.permute.xlu0 %1359
    %1361 = vrot.lane.b32.xlu0 %v1141, 126
    %v1362 = vpop.permute.xlu0 %1361
    %vm1363 = vcmp.lt.s32.totalorder %v42, 126
    %v1364 = vsel %vm1363, %v1348, %v1356
    %v1365 = vsel %vm1363, %v1350, %v1358
    %v1366 = vsel %vm1363, %v1352, %v1360
    %v1367 = vsel %vm1363, %v1354, %v1362
    %v1368 = vsel %vm1363, %v1340, %v1348
    %v1369 = vsel %vm1363, %v1342, %v1350
    %v1370 = vsel %vm1363, %v1344, %v1352
    %v1371 = vsel %vm1363, %v1346, %v1354
    %v1372 = vsel %vm1363, %v1332, %v1340
    %v1373 = vsel %vm1363, %v1334, %v1342
    %v1374 = vsel %vm1363, %v1336, %v1344
    %v1375 = vsel %vm1363, %v1338, %v1346
    %v1376 = vsel %vm1363, %v1356, %v1332
    %v1377 = vsel %vm1363, %v1358, %v1334
    %v1378 = vsel %vm1363, %v1360, %v1336
    %v1379 = vsel %vm1363, %v1362, %v1338
    %vm1380 = vcmp.lt.s32.totalorder %v90, 254
    %vm1381 = vcmp.lt.s32.totalorder %v91, 254
    %vm1382 = vcmp.lt.s32.totalorder %v92, 254
    %vm1383 = vcmp.lt.s32.totalorder %v93, 254
    %v1384 = vsel %vm1380, 1, 0
    %v1385 = vsel %vm1381, 1, 0
    %v1386 = vsel %vm1382, 1, 0
    %v1387 = vsel %vm1383, 1, 0
    %vm1388 = vcmp.eq.s32.totalorder %v1384, 1
    %vm1389 = vcmp.eq.s32.totalorder %v1385, 1
    %vm1390 = vcmp.eq.s32.totalorder %v1386, 1
    %vm1391 = vcmp.eq.s32.totalorder %v1387, 1
    %v1392 = vsel %vm1388, %v1372, 0.0
    %v1393 = vsel %vm1389, %v1368, 0.0
    %v1394 = vsel %vm1390, %v1364, 0.0
    %v1395 = vsel %vm1391, %v1376, 0.0
    %v1396 = vsel %vm1388, %v1373, 0.0
    %v1397 = vsel %vm1389, %v1369, 0.0
    %v1398 = vsel %vm1390, %v1365, 0.0
    %v1399 = vsel %vm1391, %v1377, 0.0
    %v1400 = vsel %vm1388, %v1374, 0.0
    %v1401 = vsel %vm1389, %v1370, 0.0
    %v1402 = vsel %vm1390, %v1366, 0.0
    %v1403 = vsel %vm1391, %v1378, 0.0
    %v1404 = vsel %vm1388, %v1375, 0.0
    %v1405 = vsel %vm1389, %v1371, 0.0
    %v1406 = vsel %vm1390, %v1367, 0.0
    %v1407 = vsel %vm1391, %v1379, 0.0
    %v1408 = vpack.c.bf16 %v1396, %v1392
    %v1409 = vpack.c.bf16 %v1397, %v1393
    %v1410 = vpack.c.bf16 %v1398, %v1394
    %v1411 = vpack.c.bf16 %v1399, %v1395
    %v1412 = vpack.c.bf16 %v1404, %v1400
    %v1413 = vpack.c.bf16 %v1405, %v1401
    %v1414 = vpack.c.bf16 %v1406, %v1402
    %v1415 = vpack.c.bf16 %v1407, %v1403
    %v1424 = vunpack.c.l.b16 %v1408
    %v1425 = vunpack.c.l.b16 %v1409
    %v1426 = vunpack.c.l.b16 %v1410
    %v1427 = vunpack.c.l.b16 %v1411
    %v1428 = vunpack.c.h.b16 %v1408
    %v1429 = vunpack.c.h.b16 %v1409
    %v1430 = vunpack.c.h.b16 %v1410
    %v1431 = vunpack.c.h.b16 %v1411
    %v1432 = vunpack.c.l.b16 %v1412
    %v1433 = vunpack.c.l.b16 %v1413
    %v1434 = vunpack.c.l.b16 %v1414
    %v1435 = vunpack.c.l.b16 %v1415
    %v1436 = vunpack.c.h.b16 %v1412
    %v1437 = vunpack.c.h.b16 %v1413
    %v1438 = vunpack.c.h.b16 %v1414
    %v1439 = vunpack.c.h.b16 %v1415
    %v1440 = vpack.c.b16 %v1425, %v1424
    %v1441 = vpack.c.b16 %v1427, %v1426
    %v1442 = vpack.c.b16 %v1429, %v1428
    %v1443 = vpack.c.b16 %v1431, %v1430
    %v1444 = vpack.c.b16 %v1433, %v1432
    %v1445 = vpack.c.b16 %v1435, %v1434
    %v1446 = vpack.c.b16 %v1437, %v1436
    %v1447 = vpack.c.b16 %v1439, %v1438
    %1456 = vst [vmem:[#allocation2 + $0x80] sm:$0xff] %v1440
    %1457 = vst [vmem:[#allocation2 + $0x88] sm:$0xff] %v1441
    %1458 = vst [vmem:[#allocation2 + $0x90] sm:$0xff] %v1442
    %1459 = vst [vmem:[#allocation2 + $0x98] sm:$0xff] %v1443
    %1460 = vst [vmem:[#allocation2 + $0xa0] sm:$0xff] %v1444
    %1461 = vst [vmem:[#allocation2 + $0xa8] sm:$0xff] %v1445
    %1462 = vst [vmem:[#allocation2 + $0xb0] sm:$0xff] %v1446
    %1463 = vst [vmem:[#allocation2 + $0xb8] sm:$0xff] %v1447
    %s1464 = scalar_lea.vmem %s4, 16
    %v1465 = vld [vmem:[%s1464] sm:$0xf]
    %v1466 = vld [vmem:[%s1464 + $0x4] sm:$0xf]
    %v1467 = vld [vmem:[%s1464 + $0x8] sm:$0xf]
    %v1468 = vld [vmem:[%s1464 + $0xc] sm:$0xf]
    %v1469 = vld [vmem:[#allocation2] sm:$0xff]
    %v1470 = vld [vmem:[#allocation2 + $0x8] sm:$0xff]
    %v1471 = vld [vmem:[#allocation2 + $0x10] sm:$0xff]
    %v1472 = vld [vmem:[#allocation2 + $0x18] sm:$0xff]
    %v1473 = vld [vmem:[#allocation2 + $0x20] sm:$0xff]
    %v1474 = vld [vmem:[#allocation2 + $0x28] sm:$0xff]
    %v1475 = vld [vmem:[#allocation2 + $0x30] sm:$0xff]
    %v1476 = vld [vmem:[#allocation2 + $0x38] sm:$0xff]
    %v1477 = vld [vmem:[#allocation2 + $0x40] sm:$0xff]
    %v1478 = vld [vmem:[#allocation2 + $0x48] sm:$0xff]
    %v1479 = vld [vmem:[#allocation2 + $0x50] sm:$0xff]
    %v1480 = vld [vmem:[#allocation2 + $0x58] sm:$0xff]
    %v1481 = vld [vmem:[#allocation2 + $0x60] sm:$0xff]
    %v1482 = vld [vmem:[#allocation2 + $0x68] sm:$0xff]
    %v1483 = vld [vmem:[#allocation2 + $0x70] sm:$0xff]
    %v1484 = vld [vmem:[#allocation2 + $0x78] sm:$0xff]
    %v1485 = vld [vmem:[#allocation2 + $0x80] sm:$0xff]
    %v1486 = vld [vmem:[#allocation2 + $0x88] sm:$0xff]
    %v1487 = vld [vmem:[#allocation2 + $0x90] sm:$0xff]
    %v1488 = vld [vmem:[#allocation2 + $0x98] sm:$0xff]
    %v1489 = vld [vmem:[#allocation2 + $0xa0] sm:$0xff]
    %v1490 = vld [vmem:[#allocation2 + $0xa8] sm:$0xff]
    %v1491 = vld [vmem:[#allocation2 + $0xb0] sm:$0xff]
    %v1492 = vld [vmem:[#allocation2 + $0xb8] sm:$0xff]
    %s1493 = scalar_lea.vmem %s5, 32
    %v1494 = vld [vmem:[%s1493] sm:$0xff]
    %v1495 = vld [vmem:[%s1493 + $0x8] sm:$0xff]
    %v1496 = vld [vmem:[%s1493 + $0x10] sm:$0xff]
    %v1497 = vld [vmem:[%s1493 + $0x18] sm:$0xff]
    %1499 = vset.pattern.permute.xlu0 0
    %1500 = vperm.xlu0 %1499, %v1494
    %v1501 = vpop.permute.xlu0 %1500
    %1504 = vset.pattern.permute.xlu0 0
    %1505 = vperm.xlu0 %1504, %v1495
    %v1506 = vpop.permute.xlu0 %1505
    %1509 = vset.pattern.permute.xlu0 0
    %1510 = vperm.xlu0 %1509, %v1496
    %v1511 = vpop.permute.xlu0 %1510
    %1514 = vset.pattern.permute.xlu0 0
    %1515 = vperm.xlu0 %1514, %v1497
    %v1516 = vpop.permute.xlu0 %1515
    %v1522 = vunpack.c.l.b16 %v1465
    %v1523 = vunpack.c.l.b16 %v1466
    %v1524 = vunpack.c.l.b16 %v1467
    %v1525 = vunpack.c.l.b16 %v1468
    %v1526 = vpack.c.b16 %v1523, %v1522
    %v1527 = vpack.c.b16 %v1525, %v1524
    %v1552 = vunpack.c.l.b16 %v1469
    %v1553 = vunpack.c.h.b16 %v1469
    %v1554 = vunpack.c.l.b16 %v1470
    %v1555 = vunpack.c.h.b16 %v1470
    %v1556 = vunpack.c.l.b16 %v1471
    %v1557 = vunpack.c.h.b16 %v1471
    %v1558 = vunpack.c.l.b16 %v1472
    %v1559 = vunpack.c.h.b16 %v1472
    %v1560 = vunpack.c.l.b16 %v1473
    %v1561 = vunpack.c.h.b16 %v1473
    %v1562 = vunpack.c.l.b16 %v1474
    %v1563 = vunpack.c.h.b16 %v1474
    %v1564 = vunpack.c.l.b16 %v1475
    %v1565 = vunpack.c.h.b16 %v1475
    %v1566 = vunpack.c.l.b16 %v1476
    %v1567 = vunpack.c.h.b16 %v1476
    %v1568 = vunpack.c.l.b16 %v1477
    %v1569 = vunpack.c.h.b16 %v1477
    %v1570 = vunpack.c.l.b16 %v1478
    %v1571 = vunpack.c.h.b16 %v1478
    %v1572 = vunpack.c.l.b16 %v1479
    %v1573 = vunpack.c.h.b16 %v1479
    %v1574 = vunpack.c.l.b16 %v1480
    %v1575 = vunpack.c.h.b16 %v1480
    %v1576 = vunpack.c.l.b16 %v1481
    %v1577 = vunpack.c.h.b16 %v1481
    %v1578 = vunpack.c.l.b16 %v1482
    %v1579 = vunpack.c.h.b16 %v1482
    %v1580 = vunpack.c.l.b16 %v1483
    %v1581 = vunpack.c.h.b16 %v1483
    %v1582 = vunpack.c.l.b16 %v1484
    %v1583 = vunpack.c.h.b16 %v1484
    %v1584 = vunpack.c.l.b16 %v1485
    %v1585 = vunpack.c.h.b16 %v1485
    %v1586 = vunpack.c.l.b16 %v1486
    %v1587 = vunpack.c.h.b16 %v1486
    %v1588 = vunpack.c.l.b16 %v1487
    %v1589 = vunpack.c.h.b16 %v1487
    %v1590 = vunpack.c.l.b16 %v1488
    %v1591 = vunpack.c.h.b16 %v1488
    %v1592 = vunpack.c.l.b16 %v1489
    %v1593 = vunpack.c.h.b16 %v1489
    %v1594 = vunpack.c.l.b16 %v1490
    %v1595 = vunpack.c.h.b16 %v1490
    %v1596 = vunpack.c.l.b16 %v1491
    %v1597 = vunpack.c.h.b16 %v1491
    %v1598 = vunpack.c.l.b16 %v1492
    %v1599 = vunpack.c.h.b16 %v1492
    %v1600 = vpack.c.b16 %v1556, %v1552
    %v1601 = vpack.c.b16 %v1557, %v1553
    %v1602 = vpack.c.b16 %v1558, %v1554
    %v1603 = vpack.c.b16 %v1559, %v1555
    %v1604 = vpack.c.b16 %v1564, %v1560
    %v1605 = vpack.c.b16 %v1565, %v1561
    %v1606 = vpack.c.b16 %v1566, %v1562
    %v1607 = vpack.c.b16 %v1567, %v1563
    %v1608 = vpack.c.b16 %v1572, %v1568
    %v1609 = vpack.c.b16 %v1573, %v1569
    %v1610 = vpack.c.b16 %v1574, %v1570
    %v1611 = vpack.c.b16 %v1575, %v1571
    %v1612 = vpack.c.b16 %v1580, %v1576
    %v1613 = vpack.c.b16 %v1581, %v1577
    %v1614 = vpack.c.b16 %v1582, %v1578
    %v1615 = vpack.c.b16 %v1583, %v1579
    %v1616 = vpack.c.b16 %v1588, %v1584
    %v1617 = vpack.c.b16 %v1589, %v1585
    %v1618 = vpack.c.b16 %v1590, %v1586
    %v1619 = vpack.c.b16 %v1591, %v1587
    %v1620 = vpack.c.b16 %v1596, %v1592
    %v1621 = vpack.c.b16 %v1597, %v1593
    %v1622 = vpack.c.b16 %v1598, %v1594
    %v1623 = vpack.c.b16 %v1599, %v1595
    %v1649 = vsel %vm801, %v1526, 0
    %v1652 = vsel %vm801, %v1527, 0
    %1654 = vmatprep.subr.bf16.mxu0 0
    %1655 = vmatpush1.bf16.msra.mxu0 0
    %1656 = vmatprep.subr.bf16.mxu0 0
    %1657 = vmatpush1.bf16.msra.mxu0 0
    %1658 = vmatprep.subr.bf16.mxu0 %v1621
    %1659 = vmatpush1.bf16.msra.mxu0 %v1620
    %1660 = vmatprep.subr.bf16.mxu0 %v1617
    %1661 = vmatpush1.bf16.msra.mxu0 %v1616
    %1662 = vmatprep.subr.bf16.mxu0 %v1613
    %1663 = vmatpush1.bf16.msra.mxu0 %v1612
    %1664 = vmatprep.subr.bf16.mxu0 %v1609
    %1665 = vmatpush1.bf16.msra.mxu0 %v1608
    %1666 = vmatprep.subr.bf16.mxu0 %v1605
    %1667 = vmatpush1.bf16.msra.mxu0 %v1604
    %1668 = vmatprep.subr.bf16.mxu0 %v1601
    %1669 = vmatpush1.bf16.msra.mxu0 %v1600
    %1670 = vmatprep.subr.bf16.mxu0 0
    %1671 = vmatpush2.bf16.msra.mxu0 0
    %1672 = vmatprep.subr.bf16.mxu0 0
    %1673 = vmatpush2.bf16.msra.mxu0 0
    %1674 = vmatprep.subr.bf16.mxu0 0
    %1675 = vmatpush2.bf16.msra.mxu0 0
    %1676 = vmatprep.subr.bf16.mxu0 0
    %1677 = vmatpush2.bf16.msra.mxu0 0
    %1678 = vmatprep.subr.bf16.mxu0 0
    %1679 = vmatpush2.bf16.msra.mxu0 0
    %1680 = vmatprep.subr.bf16.mxu0 0
    %1681 = vmatpush2.bf16.msra.mxu0 0
    %1682 = vmatprep.subr.bf16.mxu0 0
    %1683 = vmatpush2.bf16.msra.mxu0 0
    %1684 = vmatprep.subr.bf16.mxu0 0
    %1685 = vmatpush2.bf16.msra.mxu0 0
    %1686 = vmatprep.mubr.bf16.mxu0 0
    %1687 = vmatmul.mubr.bf16.gmra.mxu0 %v1649
    %v1688 = vpop.f32.mrf.mxu0
    %v1689 = vadd.f32 %v1501, %v1688
    %v1690 = vpop.f32.mrf.mxu0
    %v1691 = vadd.f32 %v1501, %v1690
    %v1692 = vpop.f32.mrf.mxu0
    %v1693 = vadd.f32 %v1506, %v1692
    %v1694 = vpop.f32.mrf.mxu0
    %v1695 = vadd.f32 %v1506, %v1694
    %1696 = vmatprep.mubr.bf16.mxu0 0
    %1697 = vmatmul.mubr.bf16.gmra.mxu0 %v1652
    %v1698 = vpop.f32.mrf.mxu0
    %v1699 = vadd.f32 %v1511, %v1698
    %v1700 = vpop.f32.mrf.mxu0
    %v1701 = vadd.f32 %v1511, %v1700
    %v1702 = vpop.f32.mrf.mxu0
    %v1703 = vadd.f32 %v1516, %v1702
    %v1704 = vpop.f32.mrf.mxu0
    %v1705 = vadd.f32 %v1516, %v1704
    %1706 = vdwg.mxu0
    %1707 = vmatprep.subr.bf16.mxu0 0
    %1708 = vmatpush1.bf16.msra.mxu0 0
    %1709 = vmatprep.subr.bf16.mxu0 0
    %1710 = vmatpush1.bf16.msra.mxu0 0
    %1711 = vmatprep.subr.bf16.mxu0 %v1623
    %1712 = vmatpush1.bf16.msra.mxu0 %v1622
    %1713 = vmatprep.subr.bf16.mxu0 %v1619
    %1714 = vmatpush1.bf16.msra.mxu0 %v1618
    %1715 = vmatprep.subr.bf16.mxu0 %v1615
    %1716 = vmatpush1.bf16.msra.mxu0 %v1614
    %1717 = vmatprep.subr.bf16.mxu0 %v1611
    %1718 = vmatpush1.bf16.msra.mxu0 %v1610
    %1719 = vmatprep.subr.bf16.mxu0 %v1607
    %1720 = vmatpush1.bf16.msra.mxu0 %v1606
    %1721 = vmatprep.subr.bf16.mxu0 %v1603
    %1722 = vmatpush1.bf16.msra.mxu0 %v1602
    %1723 = vmatprep.subr.bf16.mxu0 0
    %1724 = vmatpush2.bf16.msra.mxu0 0
    %1725 = vmatprep.subr.bf16.mxu0 0
    %1726 = vmatpush2.bf16.msra.mxu0 0
    %1727 = vmatprep.subr.bf16.mxu0 0
    %1728 = vmatpush2.bf16.msra.mxu0 0
    %1729 = vmatprep.subr.bf16.mxu0 0
    %1730 = vmatpush2.bf16.msra.mxu0 0
    %1731 = vmatprep.subr.bf16.mxu0 0
    %1732 = vmatpush2.bf16.msra.mxu0 0
    %1733 = vmatprep.subr.bf16.mxu0 0
    %1734 = vmatpush2.bf16.msra.mxu0 0
    %1735 = vmatprep.subr.bf16.mxu0 0
    %1736 = vmatpush2.bf16.msra.mxu0 0
    %1737 = vmatprep.subr.bf16.mxu0 0
    %1738 = vmatpush2.bf16.msra.mxu0 0
    %1739 = vmatprep.mubr.bf16.mxu0 0
    %1740 = vmatmul.mubr.bf16.gmra.mxu0 %v1649
    %v1741 = vpop.f32.mrf.mxu0
    %v1742 = vadd.f32 %v1501, %v1741
    %v1743 = vpop.f32.mrf.mxu0
    %v1744 = vadd.f32 %v1501, %v1743
    %v1745 = vpop.f32.mrf.mxu0
    %v1746 = vadd.f32 %v1506, %v1745
    %v1747 = vpop.f32.mrf.mxu0
    %v1748 = vadd.f32 %v1506, %v1747
    %1749 = vmatprep.mubr.bf16.mxu0 0
    %1750 = vmatmul.mubr.bf16.gmra.mxu0 %v1652
    %v1751 = vpop.f32.mrf.mxu0
    %v1752 = vadd.f32 %v1511, %v1751
    %v1753 = vpop.f32.mrf.mxu0
    %v1754 = vadd.f32 %v1511, %v1753
    %v1755 = vpop.f32.mrf.mxu0
    %v1756 = vadd.f32 %v1516, %v1755
    %v1757 = vpop.f32.mrf.mxu0
    %v1758 = vadd.f32 %v1516, %v1757
    %1759 = vdwg.mxu0
    %v1760 = vmax.f32 %v1689, 0.0
    %v1761 = vmax.f32 %v1691, 0.0
    %v1762 = vmax.f32 %v1742, 0.0
    %v1763 = vmax.f32 %v1744, 0.0
    %v1764 = vmax.f32 %v1693, 0.0
    %v1765 = vmax.f32 %v1695, 0.0
    %v1766 = vmax.f32 %v1746, 0.0
    %v1767 = vmax.f32 %v1748, 0.0
    %v1768 = vmax.f32 %v1699, 0.0
    %v1769 = vmax.f32 %v1701, 0.0
    %v1770 = vmax.f32 %v1752, 0.0
    %v1771 = vmax.f32 %v1754, 0.0
    %v1772 = vmax.f32 %v1703, 0.0
    %v1773 = vmax.f32 %v1705, 0.0
    %v1774 = vmax.f32 %v1756, 0.0
    %v1775 = vmax.f32 %v1758, 0.0
    %s1776 = scalar_lea.vmem %s6, 16
    %v1777 = vld [vmem:[%s1776] sm:$0xf]
    %v1778 = vld [vmem:[%s1776 + $0x4] sm:$0xf]
    %v1779 = vld [vmem:[%s1776 + $0x8] sm:$0xf]
    %v1780 = vld [vmem:[%s1776 + $0xc] sm:$0xf]
    %v1781 = vpack.c.bf16 %v1764, %v1760
    %v1782 = vpack.c.bf16 %v1765, %v1761
    %v1783 = vpack.c.bf16 %v1766, %v1762
    %v1784 = vpack.c.bf16 %v1767, %v1763
    %v1785 = vpack.c.bf16 %v1772, %v1768
    %v1786 = vpack.c.bf16 %v1773, %v1769
    %v1787 = vpack.c.bf16 %v1774, %v1770
    %v1788 = vpack.c.bf16 %v1775, %v1771
    %s1789 = scalar_lea.vmem %s7, 32
    %v1790 = vld [vmem:[%s1789] sm:$0xff]
    %v1791 = vld [vmem:[%s1789 + $0x8] sm:$0xff]
    %v1792 = vld [vmem:[%s1789 + $0x10] sm:$0xff]
    %v1793 = vld [vmem:[%s1789 + $0x18] sm:$0xff]
    %1795 = vset.pattern.permute.xlu0 0
    %1796 = vperm.xlu0 %1795, %v1790
    %v1797 = vpop.permute.xlu0 %1796
    %1800 = vset.pattern.permute.xlu0 0
    %1801 = vperm.xlu0 %1800, %v1791
    %v1802 = vpop.permute.xlu0 %1801
    %1805 = vset.pattern.permute.xlu0 0
    %1806 = vperm.xlu0 %1805, %v1792
    %v1807 = vpop.permute.xlu0 %1806
    %1810 = vset.pattern.permute.xlu0 0
    %1811 = vperm.xlu0 %1810, %v1793
    %v1812 = vpop.permute.xlu0 %1811
    %v1818 = vunpack.c.l.b16 %v1777
    %v1819 = vunpack.c.l.b16 %v1778
    %v1820 = vunpack.c.l.b16 %v1779
    %v1821 = vunpack.c.l.b16 %v1780
    %v1822 = vpack.c.b16 %v1819, %v1818
    %v1823 = vpack.c.b16 %v1821, %v1820
    %v1825 = vsel %vm976, %v1822, 0
    %v1828 = vsel %vm976, %v1823, 0
    %1830 = vmatprep.subr.bf16.mxu0 0
    %1831 = vmatpush1.bf16.msra.mxu0 0
    %1832 = vmatprep.subr.bf16.mxu0 0
    %1833 = vmatpush1.bf16.msra.mxu0 0
    %1834 = vmatprep.subr.bf16.mxu0 0
    %1835 = vmatpush1.bf16.msra.mxu0 0
    %1836 = vmatprep.subr.bf16.mxu0 0
    %1837 = vmatpush1.bf16.msra.mxu0 0
    %1838 = vmatprep.subr.bf16.mxu0 0
    %1839 = vmatpush1.bf16.msra.mxu0 0
    %1840 = vmatprep.subr.bf16.mxu0 0
    %1841 = vmatpush1.bf16.msra.mxu0 0
    %1842 = vmatprep.subr.bf16.mxu0 %v1786
    %1843 = vmatpush1.bf16.msra.mxu0 %v1785
    %1844 = vmatprep.subr.bf16.mxu0 %v1782
    %1845 = vmatpush1.bf16.msra.mxu0 %v1781
    %1846 = vmatprep.subr.bf16.mxu0 0
    %1847 = vmatpush2.bf16.msra.mxu0 0
    %1848 = vmatprep.subr.bf16.mxu0 0
    %1849 = vmatpush2.bf16.msra.mxu0 0
    %1850 = vmatprep.subr.bf16.mxu0 0
    %1851 = vmatpush2.bf16.msra.mxu0 0
    %1852 = vmatprep.subr.bf16.mxu0 0
    %1853 = vmatpush2.bf16.msra.mxu0 0
    %1854 = vmatprep.subr.bf16.mxu0 0
    %1855 = vmatpush2.bf16.msra.mxu0 0
    %1856 = vmatprep.subr.bf16.mxu0 0
    %1857 = vmatpush2.bf16.msra.mxu0 0
    %1858 = vmatprep.subr.bf16.mxu0 0
    %1859 = vmatpush2.bf16.msra.mxu0 0
    %1860 = vmatprep.subr.bf16.mxu0 0
    %1861 = vmatpush2.bf16.msra.mxu0 0
    %1862 = vmatprep.mubr.bf16.mxu0 0
    %1863 = vmatmul.mubr.bf16.gmra.mxu0 %v1825
    %v1864 = vpop.f32.mrf.mxu0
    %v1865 = vadd.f32 %v1797, %v1864
    %v1866 = vpop.f32.mrf.mxu0
    %v1867 = vadd.f32 %v1797, %v1866
    %v1868 = vpop.f32.mrf.mxu0
    %v1869 = vadd.f32 %v1802, %v1868
    %v1870 = vpop.f32.mrf.mxu0
    %v1871 = vadd.f32 %v1802, %v1870
    %1872 = vmatprep.mubr.bf16.mxu0 0
    %1873 = vmatmul.mubr.bf16.gmra.mxu0 %v1828
    %v1874 = vpop.f32.mrf.mxu0
    %v1875 = vadd.f32 %v1807, %v1874
    %v1876 = vpop.f32.mrf.mxu0
    %v1877 = vadd.f32 %v1807, %v1876
    %v1878 = vpop.f32.mrf.mxu0
    %v1879 = vadd.f32 %v1812, %v1878
    %v1880 = vpop.f32.mrf.mxu0
    %v1881 = vadd.f32 %v1812, %v1880
    %1882 = vdwg.mxu0
    %1883 = vmatprep.subr.bf16.mxu0 0
    %1884 = vmatpush1.bf16.msra.mxu0 0
    %1885 = vmatprep.subr.bf16.mxu0 0
    %1886 = vmatpush1.bf16.msra.mxu0 0
    %1887 = vmatprep.subr.bf16.mxu0 0
    %1888 = vmatpush1.bf16.msra.mxu0 0
    %1889 = vmatprep.subr.bf16.mxu0 0
    %1890 = vmatpush1.bf16.msra.mxu0 0
    %1891 = vmatprep.subr.bf16.mxu0 0
    %1892 = vmatpush1.bf16.msra.mxu0 0
    %1893 = vmatprep.subr.bf16.mxu0 0
    %1894 = vmatpush1.bf16.msra.mxu0 0
    %1895 = vmatprep.subr.bf16.mxu0 %v1788
    %1896 = vmatpush1.bf16.msra.mxu0 %v1787
    %1897 = vmatprep.subr.bf16.mxu0 %v1784
    %1898 = vmatpush1.bf16.msra.mxu0 %v1783
    %1899 = vmatprep.subr.bf16.mxu0 0
    %1900 = vmatpush2.bf16.msra.mxu0 0
    %1901 = vmatprep.subr.bf16.mxu0 0
    %1902 = vmatpush2.bf16.msra.mxu0 0
    %1903 = vmatprep.subr.bf16.mxu0 0
    %1904 = vmatpush2.bf16.msra.mxu0 0
    %1905 = vmatprep.subr.bf16.mxu0 0
    %1906 = vmatpush2.bf16.msra.mxu0 0
    %1907 = vmatprep.subr.bf16.mxu0 0
    %1908 = vmatpush2.bf16.msra.mxu0 0
    %1909 = vmatprep.subr.bf16.mxu0 0
    %1910 = vmatpush2.bf16.msra.mxu0 0
    %1911 = vmatprep.subr.bf16.mxu0 0
    %1912 = vmatpush2.bf16.msra.mxu0 0
    %1913 = vmatprep.subr.bf16.mxu0 0
    %1914 = vmatpush2.bf16.msra.mxu0 0
    %1915 = vmatprep.mubr.bf16.mxu0 0
    %1916 = vmatmul.mubr.bf16.gmra.mxu0 %v1825
    %v1917 = vpop.f32.mrf.mxu0
    %v1918 = vadd.f32 %v1797, %v1917
    %v1919 = vpop.f32.mrf.mxu0
    %v1920 = vadd.f32 %v1797, %v1919
    %v1921 = vpop.f32.mrf.mxu0
    %v1922 = vadd.f32 %v1802, %v1921
    %v1923 = vpop.f32.mrf.mxu0
    %v1924 = vadd.f32 %v1802, %v1923
    %1925 = vmatprep.mubr.bf16.mxu0 0
    %1926 = vmatmul.mubr.bf16.gmra.mxu0 %v1828
    %v1927 = vpop.f32.mrf.mxu0
    %v1928 = vadd.f32 %v1807, %v1927
    %v1929 = vpop.f32.mrf.mxu0
    %v1930 = vadd.f32 %v1807, %v1929
    %v1931 = vpop.f32.mrf.mxu0
    %v1932 = vadd.f32 %v1812, %v1931
    %v1933 = vpop.f32.mrf.mxu0
    %v1934 = vadd.f32 %v1812, %v1933
    %1935 = vdwg.mxu0
    %v1936 = vadd.f32 %v1126, %v1865
    %v1937 = vadd.f32 %v1127, %v1867
    %v1938 = vadd.f32 %v1128, %v1918
    %v1939 = vadd.f32 %v1129, %v1920
    %v1940 = vadd.f32 %v1130, %v1869
    %v1941 = vadd.f32 %v1131, %v1871
    %v1942 = vadd.f32 %v1132, %v1922
    %v1943 = vadd.f32 %v1133, %v1924
    %v1944 = vadd.f32 %v1134, %v1875
    %v1945 = vadd.f32 %v1135, %v1877
    %v1946 = vadd.f32 %v1136, %v1928
    %v1947 = vadd.f32 %v1137, %v1930
    %v1948 = vadd.f32 %v1138, %v1879
    %v1949 = vadd.f32 %v1139, %v1881
    %v1950 = vadd.f32 %v1140, %v1932
    %v1951 = vadd.f32 %v1141, %v1934
    %v1952 = vmul.f32 %v1936, %v1109
    %v1953 = vmul.f32 %v1937, %v1113
    %v1954 = vmul.f32 %v1938, %v1117
    %v1955 = vmul.f32 %v1939, %v1121
    %v1956 = vmul.f32 %v1940, %v1109
    %v1957 = vmul.f32 %v1941, %v1113
    %v1958 = vmul.f32 %v1942, %v1117
    %v1959 = vmul.f32 %v1943, %v1121
    %v1960 = vmul.f32 %v1944, %v1109
    %v1961 = vmul.f32 %v1945, %v1113
    %v1962 = vmul.f32 %v1946, %v1117
    %v1963 = vmul.f32 %v1947, %v1121
    %v1964 = vmul.f32 %v1948, %v1109
    %v1965 = vmul.f32 %v1949, %v1113
    %v1966 = vmul.f32 %v1950, %v1117
    %v1967 = vmul.f32 %v1951, %v1121
    %1968 = vrot.lane.b32.xlu0 %v1952, 4
    %v1969 = vpop.permute.xlu0 %1968
    %1970 = vrot.lane.b32.xlu0 %v1956, 4
    %v1971 = vpop.permute.xlu0 %1970
    %1972 = vrot.lane.b32.xlu0 %v1960, 4
    %v1973 = vpop.permute.xlu0 %1972
    %1974 = vrot.lane.b32.xlu0 %v1964, 4
    %v1975 = vpop.permute.xlu0 %1974
    %1976 = vrot.lane.b32.xlu0 %v1953, 4
    %v1977 = vpop.permute.xlu0 %1976
    %1978 = vrot.lane.b32.xlu0 %v1957, 4
    %v1979 = vpop.permute.xlu0 %1978
    %1980 = vrot.lane.b32.xlu0 %v1961, 4
    %v1981 = vpop.permute.xlu0 %1980
    %1982 = vrot.lane.b32.xlu0 %v1965, 4
    %v1983 = vpop.permute.xlu0 %1982
    %1984 = vrot.lane.b32.xlu0 %v1954, 4
    %v1985 = vpop.permute.xlu0 %1984
    %1986 = vrot.lane.b32.xlu0 %v1958, 4
    %v1987 = vpop.permute.xlu0 %1986
    %1988 = vrot.lane.b32.xlu0 %v1962, 4
    %v1989 = vpop.permute.xlu0 %1988
    %1990 = vrot.lane.b32.xlu0 %v1966, 4
    %v1991 = vpop.permute.xlu0 %1990
    %1992 = vrot.lane.b32.xlu0 %v1955, 4
    %v1993 = vpop.permute.xlu0 %1992
    %1994 = vrot.lane.b32.xlu0 %v1959, 4
    %v1995 = vpop.permute.xlu0 %1994
    %1996 = vrot.lane.b32.xlu0 %v1963, 4
    %v1997 = vpop.permute.xlu0 %1996
    %1998 = vrot.lane.b32.xlu0 %v1967, 4
    %v1999 = vpop.permute.xlu0 %1998
    %vm2000 = vcmp.lt.s32.totalorder %v42, 4
    %v2001 = vsel %vm2000, %v1985, %v1993
    %v2002 = vsel %vm2000, %v1987, %v1995
    %v2003 = vsel %vm2000, %v1989, %v1997
    %v2004 = vsel %vm2000, %v1991, %v1999
    %v2005 = vsel %vm2000, %v1977, %v1985
    %v2006 = vsel %vm2000, %v1979, %v1987
    %v2007 = vsel %vm2000, %v1981, %v1989
    %v2008 = vsel %vm2000, %v1983, %v1991
    %v2009 = vsel %vm2000, %v1969, %v1977
    %v2010 = vsel %vm2000, %v1971, %v1979
    %v2011 = vsel %vm2000, %v1973, %v1981
    %v2012 = vsel %vm2000, %v1975, %v1983
    %v2013 = vsel %vm2000, %v1993, %v1969
    %v2014 = vsel %vm2000, %v1995, %v1971
    %v2015 = vsel %vm2000, %v1997, %v1973
    %v2016 = vsel %vm2000, %v1999, %v1975
    %vm2017 = vcmp.ge.s32.totalorder %v90, 4
    %vm2018 = vcmp.ge.s32.totalorder %v91, 4
    %vm2019 = vcmp.ge.s32.totalorder %v92, 4
    %vm2020 = vcmp.ge.s32.totalorder %v93, 4
    %v2021 = vsel %vm2017, 1, 0
    %v2022 = vsel %vm2018, 1, 0
    %v2023 = vsel %vm2019, 1, 0
    %v2024 = vsel %vm2020, 1, 0
    %vm2025 = vcmp.eq.s32.totalorder %v2021, 1
    %vm2026 = vcmp.eq.s32.totalorder %v2022, 1
    %vm2027 = vcmp.eq.s32.totalorder %v2023, 1
    %vm2028 = vcmp.eq.s32.totalorder %v2024, 1
    %v2029 = vsel %vm2025, %v2013, 0.0
    %v2030 = vsel %vm2026, %v2009, 0.0
    %v2031 = vsel %vm2027, %v2005, 0.0
    %v2032 = vsel %vm2028, %v2001, 0.0
    %v2033 = vsel %vm2025, %v2014, 0.0
    %v2034 = vsel %vm2026, %v2010, 0.0
    %v2035 = vsel %vm2027, %v2006, 0.0
    %v2036 = vsel %vm2028, %v2002, 0.0
    %v2037 = vsel %vm2025, %v2015, 0.0
    %v2038 = vsel %vm2026, %v2011, 0.0
    %v2039 = vsel %vm2027, %v2007, 0.0
    %v2040 = vsel %vm2028, %v2003, 0.0
    %v2041 = vsel %vm2025, %v2016, 0.0
    %v2042 = vsel %vm2026, %v2012, 0.0
    %v2043 = vsel %vm2027, %v2008, 0.0
    %v2044 = vsel %vm2028, %v2004, 0.0
    %v2045 = vpack.c.bf16 %v2033, %v2029
    %v2046 = vpack.c.bf16 %v2034, %v2030
    %v2047 = vpack.c.bf16 %v2035, %v2031
    %v2048 = vpack.c.bf16 %v2036, %v2032
    %v2049 = vpack.c.bf16 %v2041, %v2037
    %v2050 = vpack.c.bf16 %v2042, %v2038
    %v2051 = vpack.c.bf16 %v2043, %v2039
    %v2052 = vpack.c.bf16 %v2044, %v2040
    %v2061 = vunpack.c.l.b16 %v2045
    %v2062 = vunpack.c.l.b16 %v2046
    %v2063 = vunpack.c.l.b16 %v2047
    %v2064 = vunpack.c.l.b16 %v2048
    %v2065 = vunpack.c.h.b16 %v2045
    %v2066 = vunpack.c.h.b16 %v2046
    %v2067 = vunpack.c.h.b16 %v2047
    %v2068 = vunpack.c.h.b16 %v2048
    %v2069 = vunpack.c.l.b16 %v2049
    %v2070 = vunpack.c.l.b16 %v2050
    %v2071 = vunpack.c.l.b16 %v2051
    %v2072 = vunpack.c.l.b16 %v2052
    %v2073 = vunpack.c.h.b16 %v2049
    %v2074 = vunpack.c.h.b16 %v2050
    %v2075 = vunpack.c.h.b16 %v2051
    %v2076 = vunpack.c.h.b16 %v2052
    %v2077 = vpack.c.b16 %v2062, %v2061
    %v2078 = vpack.c.b16 %v2064, %v2063
    %v2079 = vpack.c.b16 %v2066, %v2065
    %v2080 = vpack.c.b16 %v2068, %v2067
    %v2081 = vpack.c.b16 %v2070, %v2069
    %v2082 = vpack.c.b16 %v2072, %v2071
    %v2083 = vpack.c.b16 %v2074, %v2073
    %v2084 = vpack.c.b16 %v2076, %v2075
    %2093 = vst [vmem:[#allocation2] sm:$0xff] %v2077
    %2094 = vst [vmem:[#allocation2 + $0x8] sm:$0xff] %v2078
    %2095 = vst [vmem:[#allocation2 + $0x10] sm:$0xff] %v2079
    %2096 = vst [vmem:[#allocation2 + $0x18] sm:$0xff] %v2080
    %2097 = vst [vmem:[#allocation2 + $0x20] sm:$0xff] %v2081
    %2098 = vst [vmem:[#allocation2 + $0x28] sm:$0xff] %v2082
    %2099 = vst [vmem:[#allocation2 + $0x30] sm:$0xff] %v2083
    %2100 = vst [vmem:[#allocation2 + $0x38] sm:$0xff] %v2084
    %v2101 = vpack.c.bf16 %v1956, %v1952
    %v2102 = vpack.c.bf16 %v1957, %v1953
    %v2103 = vpack.c.bf16 %v1958, %v1954
    %v2104 = vpack.c.bf16 %v1959, %v1955
    %v2105 = vpack.c.bf16 %v1964, %v1960
    %v2106 = vpack.c.bf16 %v1965, %v1961
    %v2107 = vpack.c.bf16 %v1966, %v1962
    %v2108 = vpack.c.bf16 %v1967, %v1963
    %v2117 = vunpack.c.l.b16 %v2101
    %v2118 = vunpack.c.l.b16 %v2102
    %v2119 = vunpack.c.l.b16 %v2103
    %v2120 = vunpack.c.l.b16 %v2104
    %v2121 = vunpack.c.h.b16 %v2101
    %v2122 = vunpack.c.h.b16 %v2102
    %v2123 = vunpack.c.h.b16 %v2103
    %v2124 = vunpack.c.h.b16 %v2104
    %v2125 = vunpack.c.l.b16 %v2105
    %v2126 = vunpack.c.l.b16 %v2106
    %v2127 = vunpack.c.l.b16 %v2107
    %v2128 = vunpack.c.l.b16 %v2108
    %v2129 = vunpack.c.h.b16 %v2105
    %v2130 = vunpack.c.h.b16 %v2106
    %v2131 = vunpack.c.h.b16 %v2107
    %v2132 = vunpack.c.h.b16 %v2108
    %v2133 = vpack.c.b16 %v2118, %v2117
    %v2134 = vpack.c.b16 %v2120, %v2119
    %v2135 = vpack.c.b16 %v2122, %v2121
    %v2136 = vpack.c.b16 %v2124, %v2123
    %v2137 = vpack.c.b16 %v2126, %v2125
    %v2138 = vpack.c.b16 %v2128, %v2127
    %v2139 = vpack.c.b16 %v2130, %v2129
    %v2140 = vpack.c.b16 %v2132, %v2131
    %2149 = vst [vmem:[#allocation2 + $0x40] sm:$0xff] %v2133
    %2150 = vst [vmem:[#allocation2 + $0x48] sm:$0xff] %v2134
    %2151 = vst [vmem:[#allocation2 + $0x50] sm:$0xff] %v2135
    %2152 = vst [vmem:[#allocation2 + $0x58] sm:$0xff] %v2136
    %2153 = vst [vmem:[#allocation2 + $0x60] sm:$0xff] %v2137
    %2154 = vst [vmem:[#allocation2 + $0x68] sm:$0xff] %v2138
    %2155 = vst [vmem:[#allocation2 + $0x70] sm:$0xff] %v2139
    %2156 = vst [vmem:[#allocation2 + $0x78] sm:$0xff] %v2140
    %2157 = vrot.lane.b32.xlu0 %v1952, 124
    %v2158 = vpop.permute.xlu0 %2157
    %2159 = vrot.lane.b32.xlu0 %v1956, 124
    %v2160 = vpop.permute.xlu0 %2159
    %2161 = vrot.lane.b32.xlu0 %v1960, 124
    %v2162 = vpop.permute.xlu0 %2161
    %2163 = vrot.lane.b32.xlu0 %v1964, 124
    %v2164 = vpop.permute.xlu0 %2163
    %2165 = vrot.lane.b32.xlu0 %v1953, 124
    %v2166 = vpop.permute.xlu0 %2165
    %2167 = vrot.lane.b32.xlu0 %v1957, 124
    %v2168 = vpop.permute.xlu0 %2167
    %2169 = vrot.lane.b32.xlu0 %v1961, 124
    %v2170 = vpop.permute.xlu0 %2169
    %2171 = vrot.lane.b32.xlu0 %v1965, 124
    %v2172 = vpop.permute.xlu0 %2171
    %2173 = vrot.lane.b32.xlu0 %v1954, 124
    %v2174 = vpop.permute.xlu0 %2173
    %2175 = vrot.lane.b32.xlu0 %v1958, 124
    %v2176 = vpop.permute.xlu0 %2175
    %2177 = vrot.lane.b32.xlu0 %v1962, 124
    %v2178 = vpop.permute.xlu0 %2177
    %2179 = vrot.lane.b32.xlu0 %v1966, 124
    %v2180 = vpop.permute.xlu0 %2179
    %2181 = vrot.lane.b32.xlu0 %v1955, 124
    %v2182 = vpop.permute.xlu0 %2181
    %2183 = vrot.lane.b32.xlu0 %v1959, 124
    %v2184 = vpop.permute.xlu0 %2183
    %2185 = vrot.lane.b32.xlu0 %v1963, 124
    %v2186 = vpop.permute.xlu0 %2185
    %2187 = vrot.lane.b32.xlu0 %v1967, 124
    %v2188 = vpop.permute.xlu0 %2187
    %vm2189 = vcmp.lt.s32.totalorder %v42, 124
    %v2190 = vsel %vm2189, %v2174, %v2182
    %v2191 = vsel %vm2189, %v2176, %v2184
    %v2192 = vsel %vm2189, %v2178, %v2186
    %v2193 = vsel %vm2189, %v2180, %v2188
    %v2194 = vsel %vm2189, %v2166, %v2174
    %v2195 = vsel %vm2189, %v2168, %v2176
    %v2196 = vsel %vm2189, %v2170, %v2178
    %v2197 = vsel %vm2189, %v2172, %v2180
    %v2198 = vsel %vm2189, %v2158, %v2166
    %v2199 = vsel %vm2189, %v2160, %v2168
    %v2200 = vsel %vm2189, %v2162, %v2170
    %v2201 = vsel %vm2189, %v2164, %v2172
    %v2202 = vsel %vm2189, %v2182, %v2158
    %v2203 = vsel %vm2189, %v2184, %v2160
    %v2204 = vsel %vm2189, %v2186, %v2162
    %v2205 = vsel %vm2189, %v2188, %v2164
    %vm2206 = vcmp.lt.s32.totalorder %v90, 252
    %vm2207 = vcmp.lt.s32.totalorder %v91, 252
    %vm2208 = vcmp.lt.s32.totalorder %v92, 252
    %vm2209 = vcmp.lt.s32.totalorder %v93, 252
    %v2210 = vsel %vm2206, 1, 0
    %v2211 = vsel %vm2207, 1, 0
    %v2212 = vsel %vm2208, 1, 0
    %v2213 = vsel %vm2209, 1, 0
    %vm2214 = vcmp.eq.s32.totalorder %v2210, 1
    %vm2215 = vcmp.eq.s32.totalorder %v2211, 1
    %vm2216 = vcmp.eq.s32.totalorder %v2212, 1
    %vm2217 = vcmp.eq.s32.totalorder %v2213, 1
    %v2218 = vsel %vm2214, %v2198, 0.0
    %v2219 = vsel %vm2215, %v2194, 0.0
    %v2220 = vsel %vm2216, %v2190, 0.0
    %v2221 = vsel %vm2217, %v2202, 0.0
    %v2222 = vsel %vm2214, %v2199, 0.0
    %v2223 = vsel %vm2215, %v2195, 0.0
    %v2224 = vsel %vm2216, %v2191, 0.0
    %v2225 = vsel %vm2217, %v2203, 0.0
    %v2226 = vsel %vm2214, %v2200, 0.0
    %v2227 = vsel %vm2215, %v2196, 0.0
    %v2228 = vsel %vm2216, %v2192, 0.0
    %v2229 = vsel %vm2217, %v2204, 0.0
    %v2230 = vsel %vm2214, %v2201, 0.0
    %v2231 = vsel %vm2215, %v2197, 0.0
    %v2232 = vsel %vm2216, %v2193, 0.0
    %v2233 = vsel %vm2217, %v2205, 0.0
    %v2234 = vpack.c.bf16 %v2222, %v2218
    %v2235 = vpack.c.bf16 %v2223, %v2219
    %v2236 = vpack.c.bf16 %v2224, %v2220
    %v2237 = vpack.c.bf16 %v2225, %v2221
    %v2238 = vpack.c.bf16 %v2230, %v2226
    %v2239 = vpack.c.bf16 %v2231, %v2227
    %v2240 = vpack.c.bf16 %v2232, %v2228
    %v2241 = vpack.c.bf16 %v2233, %v2229
    %v2250 = vunpack.c.l.b16 %v2234
    %v2251 = vunpack.c.l.b16 %v2235
    %v2252 = vunpack.c.l.b16 %v2236
    %v2253 = vunpack.c.l.b16 %v2237
    %v2254 = vunpack.c.h.b16 %v2234
    %v2255 = vunpack.c.h.b16 %v2235
    %v2256 = vunpack.c.h.b16 %v2236
    %v2257 = vunpack.c.h.b16 %v2237
    %v2258 = vunpack.c.l.b16 %v2238
    %v2259 = vunpack.c.l.b16 %v2239
    %v2260 = vunpack.c.l.b16 %v2240
    %v2261 = vunpack.c.l.b16 %v2241
    %v2262 = vunpack.c.h.b16 %v2238
    %v2263 = vunpack.c.h.b16 %v2239
    %v2264 = vunpack.c.h.b16 %v2240
    %v2265 = vunpack.c.h.b16 %v2241
    %v2266 = vpack.c.b16 %v2251, %v2250
    %v2267 = vpack.c.b16 %v2253, %v2252
    %v2268 = vpack.c.b16 %v2255, %v2254
    %v2269 = vpack.c.b16 %v2257, %v2256
    %v2270 = vpack.c.b16 %v2259, %v2258
    %v2271 = vpack.c.b16 %v2261, %v2260
    %v2272 = vpack.c.b16 %v2263, %v2262
    %v2273 = vpack.c.b16 %v2265, %v2264
    %2282 = vst [vmem:[#allocation2 + $0x80] sm:$0xff] %v2266
    %2283 = vst [vmem:[#allocation2 + $0x88] sm:$0xff] %v2267
    %2284 = vst [vmem:[#allocation2 + $0x90] sm:$0xff] %v2268
    %2285 = vst [vmem:[#allocation2 + $0x98] sm:$0xff] %v2269
    %2286 = vst [vmem:[#allocation2 + $0xa0] sm:$0xff] %v2270
    %2287 = vst [vmem:[#allocation2 + $0xa8] sm:$0xff] %v2271
    %2288 = vst [vmem:[#allocation2 + $0xb0] sm:$0xff] %v2272
    %2289 = vst [vmem:[#allocation2 + $0xb8] sm:$0xff] %v2273
    %s2290 = scalar_lea.vmem %s4, 32
    %v2291 = vld [vmem:[%s2290] sm:$0xf]
    %v2292 = vld [vmem:[%s2290 + $0x4] sm:$0xf]
    %v2293 = vld [vmem:[%s2290 + $0x8] sm:$0xf]
    %v2294 = vld [vmem:[%s2290 + $0xc] sm:$0xf]
    %v2295 = vld [vmem:[#allocation2] sm:$0xff]
    %v2296 = vld [vmem:[#allocation2 + $0x8] sm:$0xff]
    %v2297 = vld [vmem:[#allocation2 + $0x10] sm:$0xff]
    %v2298 = vld [vmem:[#allocation2 + $0x18] sm:$0xff]
    %v2299 = vld [vmem:[#allocation2 + $0x20] sm:$0xff]
    %v2300 = vld [vmem:[#allocation2 + $0x28] sm:$0xff]
    %v2301 = vld [vmem:[#allocation2 + $0x30] sm:$0xff]
    %v2302 = vld [vmem:[#allocation2 + $0x38] sm:$0xff]
    %v2303 = vld [vmem:[#allocation2 + $0x40] sm:$0xff]
    %v2304 = vld [vmem:[#allocation2 + $0x48] sm:$0xff]
    %v2305 = vld [vmem:[#allocation2 + $0x50] sm:$0xff]
    %v2306 = vld [vmem:[#allocation2 + $0x58] sm:$0xff]
    %v2307 = vld [vmem:[#allocation2 + $0x60] sm:$0xff]
    %v2308 = vld [vmem:[#allocation2 + $0x68] sm:$0xff]
    %v2309 = vld [vmem:[#allocation2 + $0x70] sm:$0xff]
    %v2310 = vld [vmem:[#allocation2 + $0x78] sm:$0xff]
    %v2311 = vld [vmem:[#allocation2 + $0x80] sm:$0xff]
    %v2312 = vld [vmem:[#allocation2 + $0x88] sm:$0xff]
    %v2313 = vld [vmem:[#allocation2 + $0x90] sm:$0xff]
    %v2314 = vld [vmem:[#allocation2 + $0x98] sm:$0xff]
    %v2315 = vld [vmem:[#allocation2 + $0xa0] sm:$0xff]
    %v2316 = vld [vmem:[#allocation2 + $0xa8] sm:$0xff]
    %v2317 = vld [vmem:[#allocation2 + $0xb0] sm:$0xff]
    %v2318 = vld [vmem:[#allocation2 + $0xb8] sm:$0xff]
    %s2319 = scalar_lea.vmem %s5, 64
    %v2320 = vld [vmem:[%s2319] sm:$0xff]
    %v2321 = vld [vmem:[%s2319 + $0x8] sm:$0xff]
    %v2322 = vld [vmem:[%s2319 + $0x10] sm:$0xff]
    %v2323 = vld [vmem:[%s2319 + $0x18] sm:$0xff]
    %2325 = vset.pattern.permute.xlu0 0
    %2326 = vperm.xlu0 %2325, %v2320
    %v2327 = vpop.permute.xlu0 %2326
    %2330 = vset.pattern.permute.xlu0 0
    %2331 = vperm.xlu0 %2330, %v2321
    %v2332 = vpop.permute.xlu0 %2331
    %2335 = vset.pattern.permute.xlu0 0
    %2336 = vperm.xlu0 %2335, %v2322
    %v2337 = vpop.permute.xlu0 %2336
    %2340 = vset.pattern.permute.xlu0 0
    %2341 = vperm.xlu0 %2340, %v2323
    %v2342 = vpop.permute.xlu0 %2341
    %v2348 = vunpack.c.l.b16 %v2291
    %v2349 = vunpack.c.l.b16 %v2292
    %v2350 = vunpack.c.l.b16 %v2293
    %v2351 = vunpack.c.l.b16 %v2294
    %v2352 = vpack.c.b16 %v2349, %v2348
    %v2353 = vpack.c.b16 %v2351, %v2350
    %v2378 = vunpack.c.l.b16 %v2295
    %v2379 = vunpack.c.h.b16 %v2295
    %v2380 = vunpack.c.l.b16 %v2296
    %v2381 = vunpack.c.h.b16 %v2296
    %v2382 = vunpack.c.l.b16 %v2297
    %v2383 = vunpack.c.h.b16 %v2297
    %v2384 = vunpack.c.l.b16 %v2298
    %v2385 = vunpack.c.h.b16 %v2298
    %v2386 = vunpack.c.l.b16 %v2299
    %v2387 = vunpack.c.h.b16 %v2299
    %v2388 = vunpack.c.l.b16 %v2300
    %v2389 = vunpack.c.h.b16 %v2300
    %v2390 = vunpack.c.l.b16 %v2301
    %v2391 = vunpack.c.h.b16 %v2301
    %v2392 = vunpack.c.l.b16 %v2302
    %v2393 = vunpack.c.h.b16 %v2302
    %v2394 = vunpack.c.l.b16 %v2303
    %v2395 = vunpack.c.h.b16 %v2303
    %v2396 = vunpack.c.l.b16 %v2304
    %v2397 = vunpack.c.h.b16 %v2304
    %v2398 = vunpack.c.l.b16 %v2305
    %v2399 = vunpack.c.h.b16 %v2305
    %v2400 = vunpack.c.l.b16 %v2306
    %v2401 = vunpack.c.h.b16 %v2306
    %v2402 = vunpack.c.l.b16 %v2307
    %v2403 = vunpack.c.h.b16 %v2307
    %v2404 = vunpack.c.l.b16 %v2308
    %v2405 = vunpack.c.h.b16 %v2308
    %v2406 = vunpack.c.l.b16 %v2309
    %v2407 = vunpack.c.h.b16 %v2309
    %v2408 = vunpack.c.l.b16 %v2310
    %v2409 = vunpack.c.h.b16 %v2310
    %v2410 = vunpack.c.l.b16 %v2311
    %v2411 = vunpack.c.h.b16 %v2311
    %v2412 = vunpack.c.l.b16 %v2312
    %v2413 = vunpack.c.h.b16 %v2312
    %v2414 = vunpack.c.l.b16 %v2313
    %v2415 = vunpack.c.h.b16 %v2313
    %v2416 = vunpack.c.l.b16 %v2314
    %v2417 = vunpack.c.h.b16 %v2314
    %v2418 = vunpack.c.l.b16 %v2315
    %v2419 = vunpack.c.h.b16 %v2315
    %v2420 = vunpack.c.l.b16 %v2316
    %v2421 = vunpack.c.h.b16 %v2316
    %v2422 = vunpack.c.l.b16 %v2317
    %v2423 = vunpack.c.h.b16 %v2317
    %v2424 = vunpack.c.l.b16 %v2318
    %v2425 = vunpack.c.h.b16 %v2318
    %v2426 = vpack.c.b16 %v2382, %v2378
    %v2427 = vpack.c.b16 %v2383, %v2379
    %v2428 = vpack.c.b16 %v2384, %v2380
    %v2429 = vpack.c.b16 %v2385, %v2381
    %v2430 = vpack.c.b16 %v2390, %v2386
    %v2431 = vpack.c.b16 %v2391, %v2387
    %v2432 = vpack.c.b16 %v2392, %v2388
    %v2433 = vpack.c.b16 %v2393, %v2389
    %v2434 = vpack.c.b16 %v2398, %v2394
    %v2435 = vpack.c.b16 %v2399, %v2395
    %v2436 = vpack.c.b16 %v2400, %v2396
    %v2437 = vpack.c.b16 %v2401, %v2397
    %v2438 = vpack.c.b16 %v2406, %v2402
    %v2439 = vpack.c.b16 %v2407, %v2403
    %v2440 = vpack.c.b16 %v2408, %v2404
    %v2441 = vpack.c.b16 %v2409, %v2405
    %v2442 = vpack.c.b16 %v2414, %v2410
    %v2443 = vpack.c.b16 %v2415, %v2411
    %v2444 = vpack.c.b16 %v2416, %v2412
    %v2445 = vpack.c.b16 %v2417, %v2413
    %v2446 = vpack.c.b16 %v2422, %v2418
    %v2447 = vpack.c.b16 %v2423, %v2419
    %v2448 = vpack.c.b16 %v2424, %v2420
    %v2449 = vpack.c.b16 %v2425, %v2421
    %v2475 = vsel %vm801, %v2352, 0
    %v2478 = vsel %vm801, %v2353, 0
    %2480 = vmatprep.subr.bf16.mxu0 0
    %2481 = vmatpush1.bf16.msra.mxu0 0
    %2482 = vmatprep.subr.bf16.mxu0 0
    %2483 = vmatpush1.bf16.msra.mxu0 0
    %2484 = vmatprep.subr.bf16.mxu0 %v2447
    %2485 = vmatpush1.bf16.msra.mxu0 %v2446
    %2486 = vmatprep.subr.bf16.mxu0 %v2443
    %2487 = vmatpush1.bf16.msra.mxu0 %v2442
    %2488 = vmatprep.subr.bf16.mxu0 %v2439
    %2489 = vmatpush1.bf16.msra.mxu0 %v2438
    %2490 = vmatprep.subr.bf16.mxu0 %v2435
    %2491 = vmatpush1.bf16.msra.mxu0 %v2434
    %2492 = vmatprep.subr.bf16.mxu0 %v2431
    %2493 = vmatpush1.bf16.msra.mxu0 %v2430
    %2494 = vmatprep.subr.bf16.mxu0 %v2427
    %2495 = vmatpush1.bf16.msra.mxu0 %v2426
    %2496 = vmatprep.subr.bf16.mxu0 0
    %2497 = vmatpush2.bf16.msra.mxu0 0
    %2498 = vmatprep.subr.bf16.mxu0 0
    %2499 = vmatpush2.bf16.msra.mxu0 0
    %2500 = vmatprep.subr.bf16.mxu0 0
    %2501 = vmatpush2.bf16.msra.mxu0 0
    %2502 = vmatprep.subr.bf16.mxu0 0
    %2503 = vmatpush2.bf16.msra.mxu0 0
    %2504 = vmatprep.subr.bf16.mxu0 0
    %2505 = vmatpush2.bf16.msra.mxu0 0
    %2506 = vmatprep.subr.bf16.mxu0 0
    %2507 = vmatpush2.bf16.msra.mxu0 0
    %2508 = vmatprep.subr.bf16.mxu0 0
    %2509 = vmatpush2.bf16.msra.mxu0 0
    %2510 = vmatprep.subr.bf16.mxu0 0
    %2511 = vmatpush2.bf16.msra.mxu0 0
    %2512 = vmatprep.mubr.bf16.mxu0 0
    %2513 = vmatmul.mubr.bf16.gmra.mxu0 %v2475
    %v2514 = vpop.f32.mrf.mxu0
    %v2515 = vadd.f32 %v2327, %v2514
    %v2516 = vpop.f32.mrf.mxu0
    %v2517 = vadd.f32 %v2327, %v2516
    %v2518 = vpop.f32.mrf.mxu0
    %v2519 = vadd.f32 %v2332, %v2518
    %v2520 = vpop.f32.mrf.mxu0
    %v2521 = vadd.f32 %v2332, %v2520
    %2522 = vmatprep.mubr.bf16.mxu0 0
    %2523 = vmatmul.mubr.bf16.gmra.mxu0 %v2478
    %v2524 = vpop.f32.mrf.mxu0
    %v2525 = vadd.f32 %v2337, %v2524
    %v2526 = vpop.f32.mrf.mxu0
    %v2527 = vadd.f32 %v2337, %v2526
    %v2528 = vpop.f32.mrf.mxu0
    %v2529 = vadd.f32 %v2342, %v2528
    %v2530 = vpop.f32.mrf.mxu0
    %v2531 = vadd.f32 %v2342, %v2530
    %2532 = vdwg.mxu0
    %2533 = vmatprep.subr.bf16.mxu0 0
    %2534 = vmatpush1.bf16.msra.mxu0 0
    %2535 = vmatprep.subr.bf16.mxu0 0
    %2536 = vmatpush1.bf16.msra.mxu0 0
    %2537 = vmatprep.subr.bf16.mxu0 %v2449
    %2538 = vmatpush1.bf16.msra.mxu0 %v2448
    %2539 = vmatprep.subr.bf16.mxu0 %v2445
    %2540 = vmatpush1.bf16.msra.mxu0 %v2444
    %2541 = vmatprep.subr.bf16.mxu0 %v2441
    %2542 = vmatpush1.bf16.msra.mxu0 %v2440
    %2543 = vmatprep.subr.bf16.mxu0 %v2437
    %2544 = vmatpush1.bf16.msra.mxu0 %v2436
    %2545 = vmatprep.subr.bf16.mxu0 %v2433
    %2546 = vmatpush1.bf16.msra.mxu0 %v2432
    %2547 = vmatprep.subr.bf16.mxu0 %v2429
    %2548 = vmatpush1.bf16.msra.mxu0 %v2428
    %2549 = vmatprep.subr.bf16.mxu0 0
    %2550 = vmatpush2.bf16.msra.mxu0 0
    %2551 = vmatprep.subr.bf16.mxu0 0
    %2552 = vmatpush2.bf16.msra.mxu0 0
    %2553 = vmatprep.subr.bf16.mxu0 0
    %2554 = vmatpush2.bf16.msra.mxu0 0
    %2555 = vmatprep.subr.bf16.mxu0 0
    %2556 = vmatpush2.bf16.msra.mxu0 0
    %2557 = vmatprep.subr.bf16.mxu0 0
    %2558 = vmatpush2.bf16.msra.mxu0 0
    %2559 = vmatprep.subr.bf16.mxu0 0
    %2560 = vmatpush2.bf16.msra.mxu0 0
    %2561 = vmatprep.subr.bf16.mxu0 0
    %2562 = vmatpush2.bf16.msra.mxu0 0
    %2563 = vmatprep.subr.bf16.mxu0 0
    %2564 = vmatpush2.bf16.msra.mxu0 0
    %2565 = vmatprep.mubr.bf16.mxu0 0
    %2566 = vmatmul.mubr.bf16.gmra.mxu0 %v2475
    %v2567 = vpop.f32.mrf.mxu0
    %v2568 = vadd.f32 %v2327, %v2567
    %v2569 = vpop.f32.mrf.mxu0
    %v2570 = vadd.f32 %v2327, %v2569
    %v2571 = vpop.f32.mrf.mxu0
    %v2572 = vadd.f32 %v2332, %v2571
    %v2573 = vpop.f32.mrf.mxu0
    %v2574 = vadd.f32 %v2332, %v2573
    %2575 = vmatprep.mubr.bf16.mxu0 0
    %2576 = vmatmul.mubr.bf16.gmra.mxu0 %v2478
    %v2577 = vpop.f32.mrf.mxu0
    %v2578 = vadd.f32 %v2337, %v2577
    %v2579 = vpop.f32.mrf.mxu0
    %v2580 = vadd.f32 %v2337, %v2579
    %v2581 = vpop.f32.mrf.mxu0
    %v2582 = vadd.f32 %v2342, %v2581
    %v2583 = vpop.f32.mrf.mxu0
    %v2584 = vadd.f32 %v2342, %v2583
    %2585 = vdwg.mxu0
    %v2586 = vmax.f32 %v2515, 0.0
    %v2587 = vmax.f32 %v2517, 0.0
    %v2588 = vmax.f32 %v2568, 0.0
    %v2589 = vmax.f32 %v2570, 0.0
    %v2590 = vmax.f32 %v2519, 0.0
    %v2591 = vmax.f32 %v2521, 0.0
    %v2592 = vmax.f32 %v2572, 0.0
    %v2593 = vmax.f32 %v2574, 0.0
    %v2594 = vmax.f32 %v2525, 0.0
    %v2595 = vmax.f32 %v2527, 0.0
    %v2596 = vmax.f32 %v2578, 0.0
    %v2597 = vmax.f32 %v2580, 0.0
    %v2598 = vmax.f32 %v2529, 0.0
    %v2599 = vmax.f32 %v2531, 0.0
    %v2600 = vmax.f32 %v2582, 0.0
    %v2601 = vmax.f32 %v2584, 0.0
    %s2602 = scalar_lea.vmem %s6, 32
    %v2603 = vld [vmem:[%s2602] sm:$0xf]
    %v2604 = vld [vmem:[%s2602 + $0x4] sm:$0xf]
    %v2605 = vld [vmem:[%s2602 + $0x8] sm:$0xf]
    %v2606 = vld [vmem:[%s2602 + $0xc] sm:$0xf]
    %v2607 = vpack.c.bf16 %v2590, %v2586
    %v2608 = vpack.c.bf16 %v2591, %v2587
    %v2609 = vpack.c.bf16 %v2592, %v2588
    %v2610 = vpack.c.bf16 %v2593, %v2589
    %v2611 = vpack.c.bf16 %v2598, %v2594
    %v2612 = vpack.c.bf16 %v2599, %v2595
    %v2613 = vpack.c.bf16 %v2600, %v2596
    %v2614 = vpack.c.bf16 %v2601, %v2597
    %s2615 = scalar_lea.vmem %s7, 64
    %v2616 = vld [vmem:[%s2615] sm:$0xff]
    %v2617 = vld [vmem:[%s2615 + $0x8] sm:$0xff]
    %v2618 = vld [vmem:[%s2615 + $0x10] sm:$0xff]
    %v2619 = vld [vmem:[%s2615 + $0x18] sm:$0xff]
    %2621 = vset.pattern.permute.xlu0 0
    %2622 = vperm.xlu0 %2621, %v2616
    %v2623 = vpop.permute.xlu0 %2622
    %2626 = vset.pattern.permute.xlu0 0
    %2627 = vperm.xlu0 %2626, %v2617
    %v2628 = vpop.permute.xlu0 %2627
    %2631 = vset.pattern.permute.xlu0 0
    %2632 = vperm.xlu0 %2631, %v2618
    %v2633 = vpop.permute.xlu0 %2632
    %2636 = vset.pattern.permute.xlu0 0
    %2637 = vperm.xlu0 %2636, %v2619
    %v2638 = vpop.permute.xlu0 %2637
    %v2644 = vunpack.c.l.b16 %v2603
    %v2645 = vunpack.c.l.b16 %v2604
    %v2646 = vunpack.c.l.b16 %v2605
    %v2647 = vunpack.c.l.b16 %v2606
    %v2648 = vpack.c.b16 %v2645, %v2644
    %v2649 = vpack.c.b16 %v2647, %v2646
    %v2651 = vsel %vm976, %v2648, 0
    %v2654 = vsel %vm976, %v2649, 0
    %2656 = vmatprep.subr.bf16.mxu0 0
    %2657 = vmatpush1.bf16.msra.mxu0 0
    %2658 = vmatprep.subr.bf16.mxu0 0
    %2659 = vmatpush1.bf16.msra.mxu0 0
    %2660 = vmatprep.subr.bf16.mxu0 0
    %2661 = vmatpush1.bf16.msra.mxu0 0
    %2662 = vmatprep.subr.bf16.mxu0 0
    %2663 = vmatpush1.bf16.msra.mxu0 0
    %2664 = vmatprep.subr.bf16.mxu0 0
    %2665 = vmatpush1.bf16.msra.mxu0 0
    %2666 = vmatprep.subr.bf16.mxu0 0
    %2667 = vmatpush1.bf16.msra.mxu0 0
    %2668 = vmatprep.subr.bf16.mxu0 %v2612
    %2669 = vmatpush1.bf16.msra.mxu0 %v2611
    %2670 = vmatprep.subr.bf16.mxu0 %v2608
    %2671 = vmatpush1.bf16.msra.mxu0 %v2607
    %2672 = vmatprep.subr.bf16.mxu0 0
    %2673 = vmatpush2.bf16.msra.mxu0 0
    %2674 = vmatprep.subr.bf16.mxu0 0
    %2675 = vmatpush2.bf16.msra.mxu0 0
    %2676 = vmatprep.subr.bf16.mxu0 0
    %2677 = vmatpush2.bf16.msra.mxu0 0
    %2678 = vmatprep.subr.bf16.mxu0 0
    %2679 = vmatpush2.bf16.msra.mxu0 0
    %2680 = vmatprep.subr.bf16.mxu0 0
    %2681 = vmatpush2.bf16.msra.mxu0 0
    %2682 = vmatprep.subr.bf16.mxu0 0
    %2683 = vmatpush2.bf16.msra.mxu0 0
    %2684 = vmatprep.subr.bf16.mxu0 0
    %2685 = vmatpush2.bf16.msra.mxu0 0
    %2686 = vmatprep.subr.bf16.mxu0 0
    %2687 = vmatpush2.bf16.msra.mxu0 0
    %2688 = vmatprep.mubr.bf16.mxu0 0
    %2689 = vmatmul.mubr.bf16.gmra.mxu0 %v2651
    %v2690 = vpop.f32.mrf.mxu0
    %v2691 = vadd.f32 %v2623, %v2690
    %v2692 = vpop.f32.mrf.mxu0
    %v2693 = vadd.f32 %v2623, %v2692
    %v2694 = vpop.f32.mrf.mxu0
    %v2695 = vadd.f32 %v2628, %v2694
    %v2696 = vpop.f32.mrf.mxu0
    %v2697 = vadd.f32 %v2628, %v2696
    %2698 = vmatprep.mubr.bf16.mxu0 0
    %2699 = vmatmul.mubr.bf16.gmra.mxu0 %v2654
    %v2700 = vpop.f32.mrf.mxu0
    %v2701 = vadd.f32 %v2633, %v2700
    %v2702 = vpop.f32.mrf.mxu0
    %v2703 = vadd.f32 %v2633, %v2702
    %v2704 = vpop.f32.mrf.mxu0
    %v2705 = vadd.f32 %v2638, %v2704
    %v2706 = vpop.f32.mrf.mxu0
    %v2707 = vadd.f32 %v2638, %v2706
    %2708 = vdwg.mxu0
    %2709 = vmatprep.subr.bf16.mxu0 0
    %2710 = vmatpush1.bf16.msra.mxu0 0
    %2711 = vmatprep.subr.bf16.mxu0 0
    %2712 = vmatpush1.bf16.msra.mxu0 0
    %2713 = vmatprep.subr.bf16.mxu0 0
    %2714 = vmatpush1.bf16.msra.mxu0 0
    %2715 = vmatprep.subr.bf16.mxu0 0
    %2716 = vmatpush1.bf16.msra.mxu0 0
    %2717 = vmatprep.subr.bf16.mxu0 0
    %2718 = vmatpush1.bf16.msra.mxu0 0
    %2719 = vmatprep.subr.bf16.mxu0 0
    %2720 = vmatpush1.bf16.msra.mxu0 0
    %2721 = vmatprep.subr.bf16.mxu0 %v2614
    %2722 = vmatpush1.bf16.msra.mxu0 %v2613
    %2723 = vmatprep.subr.bf16.mxu0 %v2610
    %2724 = vmatpush1.bf16.msra.mxu0 %v2609
    %2725 = vmatprep.subr.bf16.mxu0 0
    %2726 = vmatpush2.bf16.msra.mxu0 0
    %2727 = vmatprep.subr.bf16.mxu0 0
    %2728 = vmatpush2.bf16.msra.mxu0 0
    %2729 = vmatprep.subr.bf16.mxu0 0
    %2730 = vmatpush2.bf16.msra.mxu0 0
    %2731 = vmatprep.subr.bf16.mxu0 0
    %2732 = vmatpush2.bf16.msra.mxu0 0
    %2733 = vmatprep.subr.bf16.mxu0 0
    %2734 = vmatpush2.bf16.msra.mxu0 0
    %2735 = vmatprep.subr.bf16.mxu0 0
    %2736 = vmatpush2.bf16.msra.mxu0 0
    %2737 = vmatprep.subr.bf16.mxu0 0
    %2738 = vmatpush2.bf16.msra.mxu0 0
    %2739 = vmatprep.subr.bf16.mxu0 0
    %2740 = vmatpush2.bf16.msra.mxu0 0
    %2741 = vmatprep.mubr.bf16.mxu0 0
    %2742 = vmatmul.mubr.bf16.gmra.mxu0 %v2651
    %v2743 = vpop.f32.mrf.mxu0
    %v2744 = vadd.f32 %v2623, %v2743
    %v2745 = vpop.f32.mrf.mxu0
    %v2746 = vadd.f32 %v2623, %v2745
    %v2747 = vpop.f32.mrf.mxu0
    %v2748 = vadd.f32 %v2628, %v2747
    %v2749 = vpop.f32.mrf.mxu0
    %v2750 = vadd.f32 %v2628, %v2749
    %2751 = vmatprep.mubr.bf16.mxu0 0
    %2752 = vmatmul.mubr.bf16.gmra.mxu0 %v2654
    %v2753 = vpop.f32.mrf.mxu0
    %v2754 = vadd.f32 %v2633, %v2753
    %v2755 = vpop.f32.mrf.mxu0
    %v2756 = vadd.f32 %v2633, %v2755
    %v2757 = vpop.f32.mrf.mxu0
    %v2758 = vadd.f32 %v2638, %v2757
    %v2759 = vpop.f32.mrf.mxu0
    %v2760 = vadd.f32 %v2638, %v2759
    %2761 = vdwg.mxu0
    %v2762 = vadd.f32 %v1952, %v2691
    %v2763 = vadd.f32 %v1953, %v2693
    %v2764 = vadd.f32 %v1954, %v2744
    %v2765 = vadd.f32 %v1955, %v2746
    %v2766 = vadd.f32 %v1956, %v2695
    %v2767 = vadd.f32 %v1957, %v2697
    %v2768 = vadd.f32 %v1958, %v2748
    %v2769 = vadd.f32 %v1959, %v2750
    %v2770 = vadd.f32 %v1960, %v2701
    %v2771 = vadd.f32 %v1961, %v2703
    %v2772 = vadd.f32 %v1962, %v2754
    %v2773 = vadd.f32 %v1963, %v2756
    %v2774 = vadd.f32 %v1964, %v2705
    %v2775 = vadd.f32 %v1965, %v2707
    %v2776 = vadd.f32 %v1966, %v2758
    %v2777 = vadd.f32 %v1967, %v2760
    %v2778 = vmul.f32 %v2762, %v1109
    %v2779 = vmul.f32 %v2763, %v1113
    %v2780 = vmul.f32 %v2764, %v1117
    %v2781 = vmul.f32 %v2765, %v1121
    %v2782 = vmul.f32 %v2766, %v1109
    %v2783 = vmul.f32 %v2767, %v1113
    %v2784 = vmul.f32 %v2768, %v1117
    %v2785 = vmul.f32 %v2769, %v1121
    %v2786 = vmul.f32 %v2770, %v1109
    %v2787 = vmul.f32 %v2771, %v1113
    %v2788 = vmul.f32 %v2772, %v1117
    %v2789 = vmul.f32 %v2773, %v1121
    %v2790 = vmul.f32 %v2774, %v1109
    %v2791 = vmul.f32 %v2775, %v1113
    %v2792 = vmul.f32 %v2776, %v1117
    %v2793 = vmul.f32 %v2777, %v1121
    %2794 = vrot.lane.b32.xlu0 %v2778, 8
    %v2795 = vpop.permute.xlu0 %2794
    %2796 = vrot.lane.b32.xlu0 %v2782, 8
    %v2797 = vpop.permute.xlu0 %2796
    %2798 = vrot.lane.b32.xlu0 %v2786, 8
    %v2799 = vpop.permute.xlu0 %2798
    %2800 = vrot.lane.b32.xlu0 %v2790, 8
    %v2801 = vpop.permute.xlu0 %2800
    %2802 = vrot.lane.b32.xlu0 %v2779, 8
    %v2803 = vpop.permute.xlu0 %2802
    %2804 = vrot.lane.b32.xlu0 %v2783, 8
    %v2805 = vpop.permute.xlu0 %2804
    %2806 = vrot.lane.b32.xlu0 %v2787, 8
    %v2807 = vpop.permute.xlu0 %2806
    %2808 = vrot.lane.b32.xlu0 %v2791, 8
    %v2809 = vpop.permute.xlu0 %2808
    %2810 = vrot.lane.b32.xlu0 %v2780, 8
    %v2811 = vpop.permute.xlu0 %2810
    %2812 = vrot.lane.b32.xlu0 %v2784, 8
    %v2813 = vpop.permute.xlu0 %2812
    %2814 = vrot.lane.b32.xlu0 %v2788, 8
    %v2815 = vpop.permute.xlu0 %2814
    %2816 = vrot.lane.b32.xlu0 %v2792, 8
    %v2817 = vpop.permute.xlu0 %2816
    %2818 = vrot.lane.b32.xlu0 %v2781, 8
    %v2819 = vpop.permute.xlu0 %2818
    %2820 = vrot.lane.b32.xlu0 %v2785, 8
    %v2821 = vpop.permute.xlu0 %2820
    %2822 = vrot.lane.b32.xlu0 %v2789, 8
    %v2823 = vpop.permute.xlu0 %2822
    %2824 = vrot.lane.b32.xlu0 %v2793, 8
    %v2825 = vpop.permute.xlu0 %2824
    %vm2826 = vcmp.lt.s32.totalorder %v42, 8
    %v2827 = vsel %vm2826, %v2811, %v2819
    %v2828 = vsel %vm2826, %v2813, %v2821
    %v2829 = vsel %vm2826, %v2815, %v2823
    %v2830 = vsel %vm2826, %v2817, %v2825
    %v2831 = vsel %vm2826, %v2803, %v2811
    %v2832 = vsel %vm2826, %v2805, %v2813
    %v2833 = vsel %vm2826, %v2807, %v2815
    %v2834 = vsel %vm2826, %v2809, %v2817
    %v2835 = vsel %vm2826, %v2795, %v2803
    %v2836 = vsel %vm2826, %v2797, %v2805
    %v2837 = vsel %vm2826, %v2799, %v2807
    %v2838 = vsel %vm2826, %v2801, %v2809
    %v2839 = vsel %vm2826, %v2819, %v2795
    %v2840 = vsel %vm2826, %v2821, %v2797
    %v2841 = vsel %vm2826, %v2823, %v2799
    %v2842 = vsel %vm2826, %v2825, %v2801
    %vm2843 = vcmp.ge.s32.totalorder %v90, 8
    %vm2844 = vcmp.ge.s32.totalorder %v91, 8
    %vm2845 = vcmp.ge.s32.totalorder %v92, 8
    %vm2846 = vcmp.ge.s32.totalorder %v93, 8
    %v2847 = vsel %vm2843, 1, 0
    %v2848 = vsel %vm2844, 1, 0
    %v2849 = vsel %vm2845, 1, 0
    %v2850 = vsel %vm2846, 1, 0
    %vm2851 = vcmp.eq.s32.totalorder %v2847, 1
    %vm2852 = vcmp.eq.s32.totalorder %v2848, 1
    %vm2853 = vcmp.eq.s32.totalorder %v2849, 1
    %vm2854 = vcmp.eq.s32.totalorder %v2850, 1
    %v2855 = vsel %vm2851, %v2839, 0.0
    %v2856 = vsel %vm2852, %v2835, 0.0
    %v2857 = vsel %vm2853, %v2831, 0.0
    %v2858 = vsel %vm2854, %v2827, 0.0
    %v2859 = vsel %vm2851, %v2840, 0.0
    %v2860 = vsel %vm2852, %v2836, 0.0
    %v2861 = vsel %vm2853, %v2832, 0.0
    %v2862 = vsel %vm2854, %v2828, 0.0
    %v2863 = vsel %vm2851, %v2841, 0.0
    %v2864 = vsel %vm2852, %v2837, 0.0
    %v2865 = vsel %vm2853, %v2833, 0.0
    %v2866 = vsel %vm2854, %v2829, 0.0
    %v2867 = vsel %vm2851, %v2842, 0.0
    %v2868 = vsel %vm2852, %v2838, 0.0
    %v2869 = vsel %vm2853, %v2834, 0.0
    %v2870 = vsel %vm2854, %v2830, 0.0
    %v2871 = vpack.c.bf16 %v2859, %v2855
    %v2872 = vpack.c.bf16 %v2860, %v2856
    %v2873 = vpack.c.bf16 %v2861, %v2857
    %v2874 = vpack.c.bf16 %v2862, %v2858
    %v2875 = vpack.c.bf16 %v2867, %v2863
    %v2876 = vpack.c.bf16 %v2868, %v2864
    %v2877 = vpack.c.bf16 %v2869, %v2865
    %v2878 = vpack.c.bf16 %v2870, %v2866
    %v2887 = vunpack.c.l.b16 %v2871
    %v2888 = vunpack.c.l.b16 %v2872
    %v2889 = vunpack.c.l.b16 %v2873
    %v2890 = vunpack.c.l.b16 %v2874
    %v2891 = vunpack.c.h.b16 %v2871
    %v2892 = vunpack.c.h.b16 %v2872
    %v2893 = vunpack.c.h.b16 %v2873
    %v2894 = vunpack.c.h.b16 %v2874
    %v2895 = vunpack.c.l.b16 %v2875
    %v2896 = vunpack.c.l.b16 %v2876
    %v2897 = vunpack.c.l.b16 %v2877
    %v2898 = vunpack.c.l.b16 %v2878
    %v2899 = vunpack.c.h.b16 %v2875
    %v2900 = vunpack.c.h.b16 %v2876
    %v2901 = vunpack.c.h.b16 %v2877
    %v2902 = vunpack.c.h.b16 %v2878
    %v2903 = vpack.c.b16 %v2888, %v2887
    %v2904 = vpack.c.b16 %v2890, %v2889
    %v2905 = vpack.c.b16 %v2892, %v2891
    %v2906 = vpack.c.b16 %v2894, %v2893
    %v2907 = vpack.c.b16 %v2896, %v2895
    %v2908 = vpack.c.b16 %v2898, %v2897
    %v2909 = vpack.c.b16 %v2900, %v2899
    %v2910 = vpack.c.b16 %v2902, %v2901
    %2919 = vst [vmem:[#allocation2] sm:$0xff] %v2903
    %2920 = vst [vmem:[#allocation2 + $0x8] sm:$0xff] %v2904
    %2921 = vst [vmem:[#allocation2 + $0x10] sm:$0xff] %v2905
    %2922 = vst [vmem:[#allocation2 + $0x18] sm:$0xff] %v2906
    %2923 = vst [vmem:[#allocation2 + $0x20] sm:$0xff] %v2907
    %2924 = vst [vmem:[#allocation2 + $0x28] sm:$0xff] %v2908
    %2925 = vst [vmem:[#allocation2 + $0x30] sm:$0xff] %v2909
    %2926 = vst [vmem:[#allocation2 + $0x38] sm:$0xff] %v2910
    %v2927 = vpack.c.bf16 %v2782, %v2778
    %v2928 = vpack.c.bf16 %v2783, %v2779
    %v2929 = vpack.c.bf16 %v2784, %v2780
    %v2930 = vpack.c.bf16 %v2785, %v2781
    %v2931 = vpack.c.bf16 %v2790, %v2786
    %v2932 = vpack.c.bf16 %v2791, %v2787
    %v2933 = vpack.c.bf16 %v2792, %v2788
    %v2934 = vpack.c.bf16 %v2793, %v2789
    %v2943 = vunpack.c.l.b16 %v2927
    %v2944 = vunpack.c.l.b16 %v2928
    %v2945 = vunpack.c.l.b16 %v2929
    %v2946 = vunpack.c.l.b16 %v2930
    %v2947 = vunpack.c.h.b16 %v2927
    %v2948 = vunpack.c.h.b16 %v2928
    %v2949 = vunpack.c.h.b16 %v2929
    %v2950 = vunpack.c.h.b16 %v2930
    %v2951 = vunpack.c.l.b16 %v2931
    %v2952 = vunpack.c.l.b16 %v2932
    %v2953 = vunpack.c.l.b16 %v2933
    %v2954 = vunpack.c.l.b16 %v2934
    %v2955 = vunpack.c.h.b16 %v2931
    %v2956 = vunpack.c.h.b16 %v2932
    %v2957 = vunpack.c.h.b16 %v2933
    %v2958 = vunpack.c.h.b16 %v2934
    %v2959 = vpack.c.b16 %v2944, %v2943
    %v2960 = vpack.c.b16 %v2946, %v2945
    %v2961 = vpack.c.b16 %v2948, %v2947
    %v2962 = vpack.c.b16 %v2950, %v2949
    %v2963 = vpack.c.b16 %v2952, %v2951
    %v2964 = vpack.c.b16 %v2954, %v2953
    %v2965 = vpack.c.b16 %v2956, %v2955
    %v2966 = vpack.c.b16 %v2958, %v2957
    %2975 = vst [vmem:[#allocation2 + $0x40] sm:$0xff] %v2959
    %2976 = vst [vmem:[#allocation2 + $0x48] sm:$0xff] %v2960
    %2977 = vst [vmem:[#allocation2 + $0x50] sm:$0xff] %v2961
    %2978 = vst [vmem:[#allocation2 + $0x58] sm:$0xff] %v2962
    %2979 = vst [vmem:[#allocation2 + $0x60] sm:$0xff] %v2963
    %2980 = vst [vmem:[#allocation2 + $0x68] sm:$0xff] %v2964
    %2981 = vst [vmem:[#allocation2 + $0x70] sm:$0xff] %v2965
    %2982 = vst [vmem:[#allocation2 + $0x78] sm:$0xff] %v2966
    %2983 = vrot.lane.b32.xlu0 %v2778, 120
    %v2984 = vpop.permute.xlu0 %2983
    %2985 = vrot.lane.b32.xlu0 %v2782, 120
    %v2986 = vpop.permute.xlu0 %2985
    %2987 = vrot.lane.b32.xlu0 %v2786, 120
    %v2988 = vpop.permute.xlu0 %2987
    %2989 = vrot.lane.b32.xlu0 %v2790, 120
    %v2990 = vpop.permute.xlu0 %2989
    %2991 = vrot.lane.b32.xlu0 %v2779, 120
    %v2992 = vpop.permute.xlu0 %2991
    %2993 = vrot.lane.b32.xlu0 %v2783, 120
    %v2994 = vpop.permute.xlu0 %2993
    %2995 = vrot.lane.b32.xlu0 %v2787, 120
    %v2996 = vpop.permute.xlu0 %2995
    %2997 = vrot.lane.b32.xlu0 %v2791, 120
    %v2998 = vpop.permute.xlu0 %2997
    %2999 = vrot.lane.b32.xlu0 %v2780, 120
    %v3000 = vpop.permute.xlu0 %2999
    %3001 = vrot.lane.b32.xlu0 %v2784, 120
    %v3002 = vpop.permute.xlu0 %3001
    %3003 = vrot.lane.b32.xlu0 %v2788, 120
    %v3004 = vpop.permute.xlu0 %3003
    %3005 = vrot.lane.b32.xlu0 %v2792, 120
    %v3006 = vpop.permute.xlu0 %3005
    %3007 = vrot.lane.b32.xlu0 %v2781, 120
    %v3008 = vpop.permute.xlu0 %3007
    %3009 = vrot.lane.b32.xlu0 %v2785, 120
    %v3010 = vpop.permute.xlu0 %3009
    %3011 = vrot.lane.b32.xlu0 %v2789, 120
    %v3012 = vpop.permute.xlu0 %3011
    %3013 = vrot.lane.b32.xlu0 %v2793, 120
    %v3014 = vpop.permute.xlu0 %3013
    %vm3015 = vcmp.lt.s32.totalorder %v42, 120
    %v3016 = vsel %vm3015, %v3000, %v3008
    %v3017 = vsel %vm3015, %v3002, %v3010
    %v3018 = vsel %vm3015, %v3004, %v3012
    %v3019 = vsel %vm3015, %v3006, %v3014
    %v3020 = vsel %vm3015, %v2992, %v3000
    %v3021 = vsel %vm3015, %v2994, %v3002
    %v3022 = vsel %vm3015, %v2996, %v3004
    %v3023 = vsel %vm3015, %v2998, %v3006
    %v3024 = vsel %vm3015, %v2984, %v2992
    %v3025 = vsel %vm3015, %v2986, %v2994
    %v3026 = vsel %vm3015, %v2988, %v2996
    %v3027 = vsel %vm3015, %v2990, %v2998
    %v3028 = vsel %vm3015, %v3008, %v2984
    %v3029 = vsel %vm3015, %v3010, %v2986
    %v3030 = vsel %vm3015, %v3012, %v2988
    %v3031 = vsel %vm3015, %v3014, %v2990
    %vm3032 = vcmp.lt.s32.totalorder %v90, 248
    %vm3033 = vcmp.lt.s32.totalorder %v91, 248
    %vm3034 = vcmp.lt.s32.totalorder %v92, 248
    %vm3035 = vcmp.lt.s32.totalorder %v93, 248
    %v3036 = vsel %vm3032, 1, 0
    %v3037 = vsel %vm3033, 1, 0
    %v3038 = vsel %vm3034, 1, 0
    %v3039 = vsel %vm3035, 1, 0
    %vm3040 = vcmp.eq.s32.totalorder %v3036, 1
    %vm3041 = vcmp.eq.s32.totalorder %v3037, 1
    %vm3042 = vcmp.eq.s32.totalorder %v3038, 1
    %vm3043 = vcmp.eq.s32.totalorder %v3039, 1
    %v3044 = vsel %vm3040, %v3024, 0.0
    %v3045 = vsel %vm3041, %v3020, 0.0
    %v3046 = vsel %vm3042, %v3016, 0.0
    %v3047 = vsel %vm3043, %v3028, 0.0
    %v3048 = vsel %vm3040, %v3025, 0.0
    %v3049 = vsel %vm3041, %v3021, 0.0
    %v3050 = vsel %vm3042, %v3017, 0.0
    %v3051 = vsel %vm3043, %v3029, 0.0
    %v3052 = vsel %vm3040, %v3026, 0.0
    %v3053 = vsel %vm3041, %v3022, 0.0
    %v3054 = vsel %vm3042, %v3018, 0.0
    %v3055 = vsel %vm3043, %v3030, 0.0
    %v3056 = vsel %vm3040, %v3027, 0.0
    %v3057 = vsel %vm3041, %v3023, 0.0
    %v3058 = vsel %vm3042, %v3019, 0.0
    %v3059 = vsel %vm3043, %v3031, 0.0
    %v3060 = vpack.c.bf16 %v3048, %v3044
    %v3061 = vpack.c.bf16 %v3049, %v3045
    %v3062 = vpack.c.bf16 %v3050, %v3046
    %v3063 = vpack.c.bf16 %v3051, %v3047
    %v3064 = vpack.c.bf16 %v3056, %v3052
    %v3065 = vpack.c.bf16 %v3057, %v3053
    %v3066 = vpack.c.bf16 %v3058, %v3054
    %v3067 = vpack.c.bf16 %v3059, %v3055
    %v3076 = vunpack.c.l.b16 %v3060
    %v3077 = vunpack.c.l.b16 %v3061
    %v3078 = vunpack.c.l.b16 %v3062
    %v3079 = vunpack.c.l.b16 %v3063
    %v3080 = vunpack.c.h.b16 %v3060
    %v3081 = vunpack.c.h.b16 %v3061
    %v3082 = vunpack.c.h.b16 %v3062
    %v3083 = vunpack.c.h.b16 %v3063
    %v3084 = vunpack.c.l.b16 %v3064
    %v3085 = vunpack.c.l.b16 %v3065
    %v3086 = vunpack.c.l.b16 %v3066
    %v3087 = vunpack.c.l.b16 %v3067
    %v3088 = vunpack.c.h.b16 %v3064
    %v3089 = vunpack.c.h.b16 %v3065
    %v3090 = vunpack.c.h.b16 %v3066
    %v3091 = vunpack.c.h.b16 %v3067
    %v3092 = vpack.c.b16 %v3077, %v3076
    %v3093 = vpack.c.b16 %v3079, %v3078
    %v3094 = vpack.c.b16 %v3081, %v3080
    %v3095 = vpack.c.b16 %v3083, %v3082
    %v3096 = vpack.c.b16 %v3085, %v3084
    %v3097 = vpack.c.b16 %v3087, %v3086
    %v3098 = vpack.c.b16 %v3089, %v3088
    %v3099 = vpack.c.b16 %v3091, %v3090
    %3108 = vst [vmem:[#allocation2 + $0x80] sm:$0xff] %v3092
    %3109 = vst [vmem:[#allocation2 + $0x88] sm:$0xff] %v3093
    %3110 = vst [vmem:[#allocation2 + $0x90] sm:$0xff] %v3094
    %3111 = vst [vmem:[#allocation2 + $0x98] sm:$0xff] %v3095
    %3112 = vst [vmem:[#allocation2 + $0xa0] sm:$0xff] %v3096
    %3113 = vst [vmem:[#allocation2 + $0xa8] sm:$0xff] %v3097
    %3114 = vst [vmem:[#allocation2 + $0xb0] sm:$0xff] %v3098
    %3115 = vst [vmem:[#allocation2 + $0xb8] sm:$0xff] %v3099
    %s3116 = scalar_lea.vmem %s4, 48
    %v3117 = vld [vmem:[%s3116] sm:$0xf]
    %v3118 = vld [vmem:[%s3116 + $0x4] sm:$0xf]
    %v3119 = vld [vmem:[%s3116 + $0x8] sm:$0xf]
    %v3120 = vld [vmem:[%s3116 + $0xc] sm:$0xf]
    %v3121 = vld [vmem:[#allocation2] sm:$0xff]
    %v3122 = vld [vmem:[#allocation2 + $0x8] sm:$0xff]
    %v3123 = vld [vmem:[#allocation2 + $0x10] sm:$0xff]
    %v3124 = vld [vmem:[#allocation2 + $0x18] sm:$0xff]
    %v3125 = vld [vmem:[#allocation2 + $0x20] sm:$0xff]
    %v3126 = vld [vmem:[#allocation2 + $0x28] sm:$0xff]
    %v3127 = vld [vmem:[#allocation2 + $0x30] sm:$0xff]
    %v3128 = vld [vmem:[#allocation2 + $0x38] sm:$0xff]
    %v3129 = vld [vmem:[#allocation2 + $0x40] sm:$0xff]
    %v3130 = vld [vmem:[#allocation2 + $0x48] sm:$0xff]
    %v3131 = vld [vmem:[#allocation2 + $0x50] sm:$0xff]
    %v3132 = vld [vmem:[#allocation2 + $0x58] sm:$0xff]
    %v3133 = vld [vmem:[#allocation2 + $0x60] sm:$0xff]
    %v3134 = vld [vmem:[#allocation2 + $0x68] sm:$0xff]
    %v3135 = vld [vmem:[#allocation2 + $0x70] sm:$0xff]
    %v3136 = vld [vmem:[#allocation2 + $0x78] sm:$0xff]
    %v3137 = vld [vmem:[#allocation2 + $0x80] sm:$0xff]
    %v3138 = vld [vmem:[#allocation2 + $0x88] sm:$0xff]
    %v3139 = vld [vmem:[#allocation2 + $0x90] sm:$0xff]
    %v3140 = vld [vmem:[#allocation2 + $0x98] sm:$0xff]
    %v3141 = vld [vmem:[#allocation2 + $0xa0] sm:$0xff]
    %v3142 = vld [vmem:[#allocation2 + $0xa8] sm:$0xff]
    %v3143 = vld [vmem:[#allocation2 + $0xb0] sm:$0xff]
    %v3144 = vld [vmem:[#allocation2 + $0xb8] sm:$0xff]
    %s3145 = scalar_lea.vmem %s5, 96
    %v3146 = vld [vmem:[%s3145] sm:$0xff]
    %v3147 = vld [vmem:[%s3145 + $0x8] sm:$0xff]
    %v3148 = vld [vmem:[%s3145 + $0x10] sm:$0xff]
    %v3149 = vld [vmem:[%s3145 + $0x18] sm:$0xff]
    %3151 = vset.pattern.permute.xlu0 0
    %3152 = vperm.xlu0 %3151, %v3146
    %v3153 = vpop.permute.xlu0 %3152
    %3156 = vset.pattern.permute.xlu0 0
    %3157 = vperm.xlu0 %3156, %v3147
    %v3158 = vpop.permute.xlu0 %3157
    %3161 = vset.pattern.permute.xlu0 0
    %3162 = vperm.xlu0 %3161, %v3148
    %v3163 = vpop.permute.xlu0 %3162
    %3166 = vset.pattern.permute.xlu0 0
    %3167 = vperm.xlu0 %3166, %v3149
    %v3168 = vpop.permute.xlu0 %3167
    %v3174 = vunpack.c.l.b16 %v3117
    %v3175 = vunpack.c.l.b16 %v3118
    %v3176 = vunpack.c.l.b16 %v3119
    %v3177 = vunpack.c.l.b16 %v3120
    %v3178 = vpack.c.b16 %v3175, %v3174
    %v3179 = vpack.c.b16 %v3177, %v3176
    %v3204 = vunpack.c.l.b16 %v3121
    %v3205 = vunpack.c.h.b16 %v3121
    %v3206 = vunpack.c.l.b16 %v3122
    %v3207 = vunpack.c.h.b16 %v3122
    %v3208 = vunpack.c.l.b16 %v3123
    %v3209 = vunpack.c.h.b16 %v3123
    %v3210 = vunpack.c.l.b16 %v3124
    %v3211 = vunpack.c.h.b16 %v3124
    %v3212 = vunpack.c.l.b16 %v3125
    %v3213 = vunpack.c.h.b16 %v3125
    %v3214 = vunpack.c.l.b16 %v3126
    %v3215 = vunpack.c.h.b16 %v3126
    %v3216 = vunpack.c.l.b16 %v3127
    %v3217 = vunpack.c.h.b16 %v3127
    %v3218 = vunpack.c.l.b16 %v3128
    %v3219 = vunpack.c.h.b16 %v3128
    %v3220 = vunpack.c.l.b16 %v3129
    %v3221 = vunpack.c.h.b16 %v3129
    %v3222 = vunpack.c.l.b16 %v3130
    %v3223 = vunpack.c.h.b16 %v3130
    %v3224 = vunpack.c.l.b16 %v3131
    %v3225 = vunpack.c.h.b16 %v3131
    %v3226 = vunpack.c.l.b16 %v3132
    %v3227 = vunpack.c.h.b16 %v3132
    %v3228 = vunpack.c.l.b16 %v3133
    %v3229 = vunpack.c.h.b16 %v3133
    %v3230 = vunpack.c.l.b16 %v3134
    %v3231 = vunpack.c.h.b16 %v3134
    %v3232 = vunpack.c.l.b16 %v3135
    %v3233 = vunpack.c.h.b16 %v3135
    %v3234 = vunpack.c.l.b16 %v3136
    %v3235 = vunpack.c.h.b16 %v3136
    %v3236 = vunpack.c.l.b16 %v3137
    %v3237 = vunpack.c.h.b16 %v3137
    %v3238 = vunpack.c.l.b16 %v3138
    %v3239 = vunpack.c.h.b16 %v3138
    %v3240 = vunpack.c.l.b16 %v3139
    %v3241 = vunpack.c.h.b16 %v3139
    %v3242 = vunpack.c.l.b16 %v3140
    %v3243 = vunpack.c.h.b16 %v3140
    %v3244 = vunpack.c.l.b16 %v3141
    %v3245 = vunpack.c.h.b16 %v3141
    %v3246 = vunpack.c.l.b16 %v3142
    %v3247 = vunpack.c.h.b16 %v3142
    %v3248 = vunpack.c.l.b16 %v3143
    %v3249 = vunpack.c.h.b16 %v3143
    %v3250 = vunpack.c.l.b16 %v3144
    %v3251 = vunpack.c.h.b16 %v3144
    %v3252 = vpack.c.b16 %v3208, %v3204
    %v3253 = vpack.c.b16 %v3209, %v3205
    %v3254 = vpack.c.b16 %v3210, %v3206
    %v3255 = vpack.c.b16 %v3211, %v3207
    %v3256 = vpack.c.b16 %v3216, %v3212
    %v3257 = vpack.c.b16 %v3217, %v3213
    %v3258 = vpack.c.b16 %v3218, %v3214
    %v3259 = vpack.c.b16 %v3219, %v3215
    %v3260 = vpack.c.b16 %v3224, %v3220
    %v3261 = vpack.c.b16 %v3225, %v3221
    %v3262 = vpack.c.b16 %v3226, %v3222
    %v3263 = vpack.c.b16 %v3227, %v3223
    %v3264 = vpack.c.b16 %v3232, %v3228
    %v3265 = vpack.c.b16 %v3233, %v3229
    %v3266 = vpack.c.b16 %v3234, %v3230
    %v3267 = vpack.c.b16 %v3235, %v3231
    %v3268 = vpack.c.b16 %v3240, %v3236
    %v3269 = vpack.c.b16 %v3241, %v3237
    %v3270 = vpack.c.b16 %v3242, %v3238
    %v3271 = vpack.c.b16 %v3243, %v3239
    %v3272 = vpack.c.b16 %v3248, %v3244
    %v3273 = vpack.c.b16 %v3249, %v3245
    %v3274 = vpack.c.b16 %v3250, %v3246
    %v3275 = vpack.c.b16 %v3251, %v3247
    %v3301 = vsel %vm801, %v3178, 0
    %v3304 = vsel %vm801, %v3179, 0
    %3306 = vmatprep.subr.bf16.mxu0 0
    %3307 = vmatpush1.bf16.msra.mxu0 0
    %3308 = vmatprep.subr.bf16.mxu0 0
    %3309 = vmatpush1.bf16.msra.mxu0 0
    %3310 = vmatprep.subr.bf16.mxu0 %v3273
    %3311 = vmatpush1.bf16.msra.mxu0 %v3272
    %3312 = vmatprep.subr.bf16.mxu0 %v3269
    %3313 = vmatpush1.bf16.msra.mxu0 %v3268
    %3314 = vmatprep.subr.bf16.mxu0 %v3265
    %3315 = vmatpush1.bf16.msra.mxu0 %v3264
    %3316 = vmatprep.subr.bf16.mxu0 %v3261
    %3317 = vmatpush1.bf16.msra.mxu0 %v3260
    %3318 = vmatprep.subr.bf16.mxu0 %v3257
    %3319 = vmatpush1.bf16.msra.mxu0 %v3256
    %3320 = vmatprep.subr.bf16.mxu0 %v3253
    %3321 = vmatpush1.bf16.msra.mxu0 %v3252
    %3322 = vmatprep.subr.bf16.mxu0 0
    %3323 = vmatpush2.bf16.msra.mxu0 0
    %3324 = vmatprep.subr.bf16.mxu0 0
    %3325 = vmatpush2.bf16.msra.mxu0 0
    %3326 = vmatprep.subr.bf16.mxu0 0
    %3327 = vmatpush2.bf16.msra.mxu0 0
    %3328 = vmatprep.subr.bf16.mxu0 0
    %3329 = vmatpush2.bf16.msra.mxu0 0
    %3330 = vmatprep.subr.bf16.mxu0 0
    %3331 = vmatpush2.bf16.msra.mxu0 0
    %3332 = vmatprep.subr.bf16.mxu0 0
    %3333 = vmatpush2.bf16.msra.mxu0 0
    %3334 = vmatprep.subr.bf16.mxu0 0
    %3335 = vmatpush2.bf16.msra.mxu0 0
    %3336 = vmatprep.subr.bf16.mxu0 0
    %3337 = vmatpush2.bf16.msra.mxu0 0
    %3338 = vmatprep.mubr.bf16.mxu0 0
    %3339 = vmatmul.mubr.bf16.gmra.mxu0 %v3301
    %v3340 = vpop.f32.mrf.mxu0
    %v3341 = vadd.f32 %v3153, %v3340
    %v3342 = vpop.f32.mrf.mxu0
    %v3343 = vadd.f32 %v3153, %v3342
    %v3344 = vpop.f32.mrf.mxu0
    %v3345 = vadd.f32 %v3158, %v3344
    %v3346 = vpop.f32.mrf.mxu0
    %v3347 = vadd.f32 %v3158, %v3346
    %3348 = vmatprep.mubr.bf16.mxu0 0
    %3349 = vmatmul.mubr.bf16.gmra.mxu0 %v3304
    %v3350 = vpop.f32.mrf.mxu0
    %v3351 = vadd.f32 %v3163, %v3350
    %v3352 = vpop.f32.mrf.mxu0
    %v3353 = vadd.f32 %v3163, %v3352
    %v3354 = vpop.f32.mrf.mxu0
    %v3355 = vadd.f32 %v3168, %v3354
    %v3356 = vpop.f32.mrf.mxu0
    %v3357 = vadd.f32 %v3168, %v3356
    %3358 = vdwg.mxu0
    %3359 = vmatprep.subr.bf16.mxu0 0
    %3360 = vmatpush1.bf16.msra.mxu0 0
    %3361 = vmatprep.subr.bf16.mxu0 0
    %3362 = vmatpush1.bf16.msra.mxu0 0
    %3363 = vmatprep.subr.bf16.mxu0 %v3275
    %3364 = vmatpush1.bf16.msra.mxu0 %v3274
    %3365 = vmatprep.subr.bf16.mxu0 %v3271
    %3366 = vmatpush1.bf16.msra.mxu0 %v3270
    %3367 = vmatprep.subr.bf16.mxu0 %v3267
    %3368 = vmatpush1.bf16.msra.mxu0 %v3266
    %3369 = vmatprep.subr.bf16.mxu0 %v3263
    %3370 = vmatpush1.bf16.msra.mxu0 %v3262
    %3371 = vmatprep.subr.bf16.mxu0 %v3259
    %3372 = vmatpush1.bf16.msra.mxu0 %v3258
    %3373 = vmatprep.subr.bf16.mxu0 %v3255
    %3374 = vmatpush1.bf16.msra.mxu0 %v3254
    %3375 = vmatprep.subr.bf16.mxu0 0
    %3376 = vmatpush2.bf16.msra.mxu0 0
    %3377 = vmatprep.subr.bf16.mxu0 0
    %3378 = vmatpush2.bf16.msra.mxu0 0
    %3379 = vmatprep.subr.bf16.mxu0 0
    %3380 = vmatpush2.bf16.msra.mxu0 0
    %3381 = vmatprep.subr.bf16.mxu0 0
    %3382 = vmatpush2.bf16.msra.mxu0 0
    %3383 = vmatprep.subr.bf16.mxu0 0
    %3384 = vmatpush2.bf16.msra.mxu0 0
    %3385 = vmatprep.subr.bf16.mxu0 0
    %3386 = vmatpush2.bf16.msra.mxu0 0
    %3387 = vmatprep.subr.bf16.mxu0 0
    %3388 = vmatpush2.bf16.msra.mxu0 0
    %3389 = vmatprep.subr.bf16.mxu0 0
    %3390 = vmatpush2.bf16.msra.mxu0 0
    %3391 = vmatprep.mubr.bf16.mxu0 0
    %3392 = vmatmul.mubr.bf16.gmra.mxu0 %v3301
    %v3393 = vpop.f32.mrf.mxu0
    %v3394 = vadd.f32 %v3153, %v3393
    %v3395 = vpop.f32.mrf.mxu0
    %v3396 = vadd.f32 %v3153, %v3395
    %v3397 = vpop.f32.mrf.mxu0
    %v3398 = vadd.f32 %v3158, %v3397
    %v3399 = vpop.f32.mrf.mxu0
    %v3400 = vadd.f32 %v3158, %v3399
    %3401 = vmatprep.mubr.bf16.mxu0 0
    %3402 = vmatmul.mubr.bf16.gmra.mxu0 %v3304
    %v3403 = vpop.f32.mrf.mxu0
    %v3404 = vadd.f32 %v3163, %v3403
    %v3405 = vpop.f32.mrf.mxu0
    %v3406 = vadd.f32 %v3163, %v3405
    %v3407 = vpop.f32.mrf.mxu0
    %v3408 = vadd.f32 %v3168, %v3407
    %v3409 = vpop.f32.mrf.mxu0
    %v3410 = vadd.f32 %v3168, %v3409
    %3411 = vdwg.mxu0
    %v3412 = vmax.f32 %v3341, 0.0
    %v3413 = vmax.f32 %v3343, 0.0
    %v3414 = vmax.f32 %v3394, 0.0
    %v3415 = vmax.f32 %v3396, 0.0
    %v3416 = vmax.f32 %v3345, 0.0
    %v3417 = vmax.f32 %v3347, 0.0
    %v3418 = vmax.f32 %v3398, 0.0
    %v3419 = vmax.f32 %v3400, 0.0
    %v3420 = vmax.f32 %v3351, 0.0
    %v3421 = vmax.f32 %v3353, 0.0
    %v3422 = vmax.f32 %v3404, 0.0
    %v3423 = vmax.f32 %v3406, 0.0
    %v3424 = vmax.f32 %v3355, 0.0
    %v3425 = vmax.f32 %v3357, 0.0
    %v3426 = vmax.f32 %v3408, 0.0
    %v3427 = vmax.f32 %v3410, 0.0
    %s3428 = scalar_lea.vmem %s6, 48
    %v3429 = vld [vmem:[%s3428] sm:$0xf]
    %v3430 = vld [vmem:[%s3428 + $0x4] sm:$0xf]
    %v3431 = vld [vmem:[%s3428 + $0x8] sm:$0xf]
    %v3432 = vld [vmem:[%s3428 + $0xc] sm:$0xf]
    %v3433 = vpack.c.bf16 %v3416, %v3412
    %v3434 = vpack.c.bf16 %v3417, %v3413
    %v3435 = vpack.c.bf16 %v3418, %v3414
    %v3436 = vpack.c.bf16 %v3419, %v3415
    %v3437 = vpack.c.bf16 %v3424, %v3420
    %v3438 = vpack.c.bf16 %v3425, %v3421
    %v3439 = vpack.c.bf16 %v3426, %v3422
    %v3440 = vpack.c.bf16 %v3427, %v3423
    %s3441 = scalar_lea.vmem %s7, 96
    %v3442 = vld [vmem:[%s3441] sm:$0xff]
    %v3443 = vld [vmem:[%s3441 + $0x8] sm:$0xff]
    %v3444 = vld [vmem:[%s3441 + $0x10] sm:$0xff]
    %v3445 = vld [vmem:[%s3441 + $0x18] sm:$0xff]
    %3447 = vset.pattern.permute.xlu0 0
    %3448 = vperm.xlu0 %3447, %v3442
    %v3449 = vpop.permute.xlu0 %3448
    %3452 = vset.pattern.permute.xlu0 0
    %3453 = vperm.xlu0 %3452, %v3443
    %v3454 = vpop.permute.xlu0 %3453
    %3457 = vset.pattern.permute.xlu0 0
    %3458 = vperm.xlu0 %3457, %v3444
    %v3459 = vpop.permute.xlu0 %3458
    %3462 = vset.pattern.permute.xlu0 0
    %3463 = vperm.xlu0 %3462, %v3445
    %v3464 = vpop.permute.xlu0 %3463
    %v3470 = vunpack.c.l.b16 %v3429
    %v3471 = vunpack.c.l.b16 %v3430
    %v3472 = vunpack.c.l.b16 %v3431
    %v3473 = vunpack.c.l.b16 %v3432
    %v3474 = vpack.c.b16 %v3471, %v3470
    %v3475 = vpack.c.b16 %v3473, %v3472
    %v3477 = vsel %vm976, %v3474, 0
    %v3480 = vsel %vm976, %v3475, 0
    %3482 = vmatprep.subr.bf16.mxu0 0
    %3483 = vmatpush1.bf16.msra.mxu0 0
    %3484 = vmatprep.subr.bf16.mxu0 0
    %3485 = vmatpush1.bf16.msra.mxu0 0
    %3486 = vmatprep.subr.bf16.mxu0 0
    %3487 = vmatpush1.bf16.msra.mxu0 0
    %3488 = vmatprep.subr.bf16.mxu0 0
    %3489 = vmatpush1.bf16.msra.mxu0 0
    %3490 = vmatprep.subr.bf16.mxu0 0
    %3491 = vmatpush1.bf16.msra.mxu0 0
    %3492 = vmatprep.subr.bf16.mxu0 0
    %3493 = vmatpush1.bf16.msra.mxu0 0
    %3494 = vmatprep.subr.bf16.mxu0 %v3438
    %3495 = vmatpush1.bf16.msra.mxu0 %v3437
    %3496 = vmatprep.subr.bf16.mxu0 %v3434
    %3497 = vmatpush1.bf16.msra.mxu0 %v3433
    %3498 = vmatprep.subr.bf16.mxu0 0
    %3499 = vmatpush2.bf16.msra.mxu0 0
    %3500 = vmatprep.subr.bf16.mxu0 0
    %3501 = vmatpush2.bf16.msra.mxu0 0
    %3502 = vmatprep.subr.bf16.mxu0 0
    %3503 = vmatpush2.bf16.msra.mxu0 0
    %3504 = vmatprep.subr.bf16.mxu0 0
    %3505 = vmatpush2.bf16.msra.mxu0 0
    %3506 = vmatprep.subr.bf16.mxu0 0
    %3507 = vmatpush2.bf16.msra.mxu0 0
    %3508 = vmatprep.subr.bf16.mxu0 0
    %3509 = vmatpush2.bf16.msra.mxu0 0
    %3510 = vmatprep.subr.bf16.mxu0 0
    %3511 = vmatpush2.bf16.msra.mxu0 0
    %3512 = vmatprep.subr.bf16.mxu0 0
    %3513 = vmatpush2.bf16.msra.mxu0 0
    %3514 = vmatprep.mubr.bf16.mxu0 0
    %3515 = vmatmul.mubr.bf16.gmra.mxu0 %v3477
    %v3516 = vpop.f32.mrf.mxu0
    %v3517 = vadd.f32 %v3449, %v3516
    %v3518 = vpop.f32.mrf.mxu0
    %v3519 = vadd.f32 %v3449, %v3518
    %v3520 = vpop.f32.mrf.mxu0
    %v3521 = vadd.f32 %v3454, %v3520
    %v3522 = vpop.f32.mrf.mxu0
    %v3523 = vadd.f32 %v3454, %v3522
    %3524 = vmatprep.mubr.bf16.mxu0 0
    %3525 = vmatmul.mubr.bf16.gmra.mxu0 %v3480
    %v3526 = vpop.f32.mrf.mxu0
    %v3527 = vadd.f32 %v3459, %v3526
    %v3528 = vpop.f32.mrf.mxu0
    %v3529 = vadd.f32 %v3459, %v3528
    %v3530 = vpop.f32.mrf.mxu0
    %v3531 = vadd.f32 %v3464, %v3530
    %v3532 = vpop.f32.mrf.mxu0
    %v3533 = vadd.f32 %v3464, %v3532
    %3534 = vdwg.mxu0
    %3535 = vmatprep.subr.bf16.mxu0 0
    %3536 = vmatpush1.bf16.msra.mxu0 0
    %3537 = vmatprep.subr.bf16.mxu0 0
    %3538 = vmatpush1.bf16.msra.mxu0 0
    %3539 = vmatprep.subr.bf16.mxu0 0
    %3540 = vmatpush1.bf16.msra.mxu0 0
    %3541 = vmatprep.subr.bf16.mxu0 0
    %3542 = vmatpush1.bf16.msra.mxu0 0
    %3543 = vmatprep.subr.bf16.mxu0 0
    %3544 = vmatpush1.bf16.msra.mxu0 0
    %3545 = vmatprep.subr.bf16.mxu0 0
    %3546 = vmatpush1.bf16.msra.mxu0 0
    %3547 = vmatprep.subr.bf16.mxu0 %v3440
    %3548 = vmatpush1.bf16.msra.mxu0 %v3439
    %3549 = vmatprep.subr.bf16.mxu0 %v3436
    %3550 = vmatpush1.bf16.msra.mxu0 %v3435
    %3551 = vmatprep.subr.bf16.mxu0 0
    %3552 = vmatpush2.bf16.msra.mxu0 0
    %3553 = vmatprep.subr.bf16.mxu0 0
    %3554 = vmatpush2.bf16.msra.mxu0 0
    %3555 = vmatprep.subr.bf16.mxu0 0
    %3556 = vmatpush2.bf16.msra.mxu0 0
    %3557 = vmatprep.subr.bf16.mxu0 0
    %3558 = vmatpush2.bf16.msra.mxu0 0
    %3559 = vmatprep.subr.bf16.mxu0 0
    %3560 = vmatpush2.bf16.msra.mxu0 0
    %3561 = vmatprep.subr.bf16.mxu0 0
    %3562 = vmatpush2.bf16.msra.mxu0 0
    %3563 = vmatprep.subr.bf16.mxu0 0
    %3564 = vmatpush2.bf16.msra.mxu0 0
    %3565 = vmatprep.subr.bf16.mxu0 0
    %3566 = vmatpush2.bf16.msra.mxu0 0
    %3567 = vmatprep.mubr.bf16.mxu0 0
    %3568 = vmatmul.mubr.bf16.gmra.mxu0 %v3477
    %v3569 = vpop.f32.mrf.mxu0
    %v3570 = vadd.f32 %v3449, %v3569
    %v3571 = vpop.f32.mrf.mxu0
    %v3572 = vadd.f32 %v3449, %v3571
    %v3573 = vpop.f32.mrf.mxu0
    %v3574 = vadd.f32 %v3454, %v3573
    %v3575 = vpop.f32.mrf.mxu0
    %v3576 = vadd.f32 %v3454, %v3575
    %3577 = vmatprep.mubr.bf16.mxu0 0
    %3578 = vmatmul.mubr.bf16.gmra.mxu0 %v3480
    %v3579 = vpop.f32.mrf.mxu0
    %v3580 = vadd.f32 %v3459, %v3579
    %v3581 = vpop.f32.mrf.mxu0
    %v3582 = vadd.f32 %v3459, %v3581
    %v3583 = vpop.f32.mrf.mxu0
    %v3584 = vadd.f32 %v3464, %v3583
    %v3585 = vpop.f32.mrf.mxu0
    %v3586 = vadd.f32 %v3464, %v3585
    %3587 = vdwg.mxu0
    %v3588 = vadd.f32 %v2778, %v3517
    %v3589 = vadd.f32 %v2779, %v3519
    %v3590 = vadd.f32 %v2780, %v3570
    %v3591 = vadd.f32 %v2781, %v3572
    %v3592 = vadd.f32 %v2782, %v3521
    %v3593 = vadd.f32 %v2783, %v3523
    %v3594 = vadd.f32 %v2784, %v3574
    %v3595 = vadd.f32 %v2785, %v3576
    %v3596 = vadd.f32 %v2786, %v3527
    %v3597 = vadd.f32 %v2787, %v3529
    %v3598 = vadd.f32 %v2788, %v3580
    %v3599 = vadd.f32 %v2789, %v3582
    %v3600 = vadd.f32 %v2790, %v3531
    %v3601 = vadd.f32 %v2791, %v3533
    %v3602 = vadd.f32 %v2792, %v3584
    %v3603 = vadd.f32 %v2793, %v3586
    %v3604 = vmul.f32 %v3588, %v1109
    %v3605 = vmul.f32 %v3589, %v1113
    %v3606 = vmul.f32 %v3590, %v1117
    %v3607 = vmul.f32 %v3591, %v1121
    %v3608 = vmul.f32 %v3592, %v1109
    %v3609 = vmul.f32 %v3593, %v1113
    %v3610 = vmul.f32 %v3594, %v1117
    %v3611 = vmul.f32 %v3595, %v1121
    %v3612 = vmul.f32 %v3596, %v1109
    %v3613 = vmul.f32 %v3597, %v1113
    %v3614 = vmul.f32 %v3598, %v1117
    %v3615 = vmul.f32 %v3599, %v1121
    %v3616 = vmul.f32 %v3600, %v1109
    %v3617 = vmul.f32 %v3601, %v1113
    %v3618 = vmul.f32 %v3602, %v1117
    %v3619 = vmul.f32 %v3603, %v1121
    %3620 = vst [vmem:[#allocation3] sm:$0xff] %v3604
    %3621 = vst [vmem:[#allocation3 + $0x8] sm:$0xff] %v3605
    %3622 = vst [vmem:[#allocation3 + $0x10] sm:$0xff] %v3606
    %3623 = vst [vmem:[#allocation3 + $0x18] sm:$0xff] %v3607
    %3624 = vst [vmem:[#allocation3 + $0x20] sm:$0xff] %v3608
    %3625 = vst [vmem:[#allocation3 + $0x28] sm:$0xff] %v3609
    %3626 = vst [vmem:[#allocation3 + $0x30] sm:$0xff] %v3610
    %3627 = vst [vmem:[#allocation3 + $0x38] sm:$0xff] %v3611
    %3628 = vst [vmem:[#allocation3 + $0x40] sm:$0xff] %v3612
    %3629 = vst [vmem:[#allocation3 + $0x48] sm:$0xff] %v3613
    %3630 = vst [vmem:[#allocation3 + $0x50] sm:$0xff] %v3614
    %3631 = vst [vmem:[#allocation3 + $0x58] sm:$0xff] %v3615
    %3632 = vst [vmem:[#allocation3 + $0x60] sm:$0xff] %v3616
    %3633 = vst [vmem:[#allocation3 + $0x68] sm:$0xff] %v3617
    %3634 = vst [vmem:[#allocation3 + $0x70] sm:$0xff] %v3618
    %3635 = vst [vmem:[#allocation3 + $0x78] sm:$0xff] %v3619
    %v3636 = vld [vmem:[%s8] sm:$0xf]
    %v3637 = vpack.c.bf16 %v3608, %v3604
    %v3638 = vpack.c.bf16 %v3609, %v3605
    %v3639 = vpack.c.bf16 %v3610, %v3606
    %v3640 = vpack.c.bf16 %v3611, %v3607
    %v3641 = vpack.c.bf16 %v3616, %v3612
    %v3642 = vpack.c.bf16 %v3617, %v3613
    %v3643 = vpack.c.bf16 %v3618, %v3614
    %v3644 = vpack.c.bf16 %v3619, %v3615
    %v3645 = vld [vmem:[%s9] sm:$0xff]
    %3647 = vset.pattern.permute.xlu0 0
    %3648 = vperm.xlu0 %3647, %v3645
    %v3649 = vpop.permute.xlu0 %3648
    %v3652 = vsel %vm976, %v3636, 0
    %3654 = vmatprep.subr.bf16.mxu0 0
    %3655 = vmatpush1.bf16.msra.mxu0 0
    %3656 = vmatprep.subr.bf16.mxu0 0
    %3657 = vmatpush1.bf16.msra.mxu0 0
    %3658 = vmatprep.subr.bf16.mxu0 0
    %3659 = vmatpush1.bf16.msra.mxu0 0
    %3660 = vmatprep.subr.bf16.mxu0 0
    %3661 = vmatpush1.bf16.msra.mxu0 0
    %3662 = vmatprep.subr.bf16.mxu0 0
    %3663 = vmatpush1.bf16.msra.mxu0 0
    %3664 = vmatprep.subr.bf16.mxu0 0
    %3665 = vmatpush1.bf16.msra.mxu0 0
    %3666 = vmatprep.subr.bf16.mxu0 %v3642
    %3667 = vmatpush1.bf16.msra.mxu0 %v3641
    %3668 = vmatprep.subr.bf16.mxu0 %v3638
    %3669 = vmatpush1.bf16.msra.mxu0 %v3637
    %3670 = vmatprep.subr.bf16.mxu0 0
    %3671 = vmatpush2.bf16.msra.mxu0 0
    %3672 = vmatprep.subr.bf16.mxu0 0
    %3673 = vmatpush2.bf16.msra.mxu0 0
    %3674 = vmatprep.subr.bf16.mxu0 0
    %3675 = vmatpush2.bf16.msra.mxu0 0
    %3676 = vmatprep.subr.bf16.mxu0 0
    %3677 = vmatpush2.bf16.msra.mxu0 0
    %3678 = vmatprep.subr.bf16.mxu0 0
    %3679 = vmatpush2.bf16.msra.mxu0 0
    %3680 = vmatprep.subr.bf16.mxu0 0
    %3681 = vmatpush2.bf16.msra.mxu0 0
    %3682 = vmatprep.subr.bf16.mxu0 0
    %3683 = vmatpush2.bf16.msra.mxu0 0
    %3684 = vmatprep.subr.bf16.mxu0 0
    %3685 = vmatpush2.bf16.msra.mxu0 0
    %3686 = vmatprep.mubr.bf16.mxu0 0
    %3687 = vmatmul.mubr.bf16.gmra.mxu0 %v3652
    %v3688 = vpop.f32.mrf.mxu0
    %v3689 = vadd.f32 %v3649, %v3688
    %v3690 = vpop.f32.mrf.mxu0
    %v3691 = vadd.f32 %v3649, %v3690
    %v3692 = vpop.f32.mrf.mxu0
    %v3693 = vpop.f32.mrf.mxu0
    %3694 = vdwg.mxu0
    %3695 = vmatprep.subr.bf16.mxu0 0
    %3696 = vmatpush1.bf16.msra.mxu0 0
    %3697 = vmatprep.subr.bf16.mxu0 0
    %3698 = vmatpush1.bf16.msra.mxu0 0
    %3699 = vmatprep.subr.bf16.mxu0 0
    %3700 = vmatpush1.bf16.msra.mxu0 0
    %3701 = vmatprep.subr.bf16.mxu0 0
    %3702 = vmatpush1.bf16.msra.mxu0 0
    %3703 = vmatprep.subr.bf16.mxu0 0
    %3704 = vmatpush1.bf16.msra.mxu0 0
    %3705 = vmatprep.subr.bf16.mxu0 0
    %3706 = vmatpush1.bf16.msra.mxu0 0
    %3707 = vmatprep.subr.bf16.mxu0 %v3644
    %3708 = vmatpush1.bf16.msra.mxu0 %v3643
    %3709 = vmatprep.subr.bf16.mxu0 %v3640
    %3710 = vmatpush1.bf16.msra.mxu0 %v3639
    %3711 = vmatprep.subr.bf16.mxu0 0
    %3712 = vmatpush2.bf16.msra.mxu0 0
    %3713 = vmatprep.subr.bf16.mxu0 0
    %3714 = vmatpush2.bf16.msra.mxu0 0
    %3715 = vmatprep.subr.bf16.mxu0 0
    %3716 = vmatpush2.bf16.msra.mxu0 0
    %3717 = vmatprep.subr.bf16.mxu0 0
    %3718 = vmatpush2.bf16.msra.mxu0 0
    %3719 = vmatprep.subr.bf16.mxu0 0
    %3720 = vmatpush2.bf16.msra.mxu0 0
    %3721 = vmatprep.subr.bf16.mxu0 0
    %3722 = vmatpush2.bf16.msra.mxu0 0
    %3723 = vmatprep.subr.bf16.mxu0 0
    %3724 = vmatpush2.bf16.msra.mxu0 0
    %3725 = vmatprep.subr.bf16.mxu0 0
    %3726 = vmatpush2.bf16.msra.mxu0 0
    %3727 = vmatprep.mubr.bf16.mxu0 0
    %3728 = vmatmul.mubr.bf16.gmra.mxu0 %v3652
    %v3729 = vpop.f32.mrf.mxu0
    %v3730 = vadd.f32 %v3649, %v3729
    %v3731 = vpop.f32.mrf.mxu0
    %v3732 = vadd.f32 %v3649, %v3731
    %v3733 = vpop.f32.mrf.mxu0
    %v3734 = vpop.f32.mrf.mxu0
    %3735 = vdwg.mxu0
    %v3736 = vmul.f32 %v3689, %v1109
    %v3737 = vmul.f32 %v3691, %v1113
    %v3738 = vmul.f32 %v3730, %v1117
    %v3739 = vmul.f32 %v3732, %v1121
    %3740 = vst [vmem:[#allocation5] sm:$0xff] %v3736
    %3741 = vst [vmem:[#allocation5 + $0x8] sm:$0xff] %v3737
    %3742 = vst [vmem:[#allocation5 + $0x10] sm:$0xff] %v3738
    %3743 = vst [vmem:[#allocation5 + $0x18] sm:$0xff] %v3739
    // Predicated region
    $region42: #{tpu_custom_call.1} parent=1 // pred_check
      _
    $region43: #{tpu_custom_call.1} parent=1 // pred_check_branch
      %3745 = sbr.rel (0) target = $region45
    $region44: #{tpu_custom_call.1} parent=1 // pred_region
      %s3747 = ssub.s32 2048, 2048
      %3748 = vsyncadd [#allocation4], %s3747
      %s3749 = sshll.u32 [#allocation3], 4
      %s3750 = int_to_ptr.vmem [resolvable:$true] %s3749
      %3755 = dma.vmem_to_hbm [thread:$0]  %s3750, 2048, %s10, [#allocation4], 512, 512, 32
    $region45: #{tpu_custom_call.1} parent=1 // pred_fallthru
      _
    // Predicated region
    $region46: #{tpu_custom_call.1} parent=1 // pred_check
      _
    $region47: #{tpu_custom_call.1} parent=1 // pred_check_branch
      %3757 = sbr.rel (0) target = $region49
    $region48: #{tpu_custom_call.1} parent=1 // pred_region
      %s3759 = ssub.s32 512, 512
      %3760 = vsyncadd [#allocation6], %s3759
      %s3762 = sshll.u32 [#allocation5], 4
      %s3763 = int_to_ptr.vmem [resolvable:$true] %s3762
      %3765 = dma.vmem_to_hbm [thread:$0]  %s3763, 512, %s11, [#allocation6]
    $region49: #{tpu_custom_call.1} parent=1 // pred_fallthru
      _
    // Predicated region
    $region50: #{tpu_custom_call.1} parent=1 // pred_check
      _
    $region51: #{tpu_custom_call.1} parent=1 // pred_check_branch
      %3767 = sbr.rel (0) target = $region53
    $region52: #{tpu_custom_call.1} parent=1 // pred_region
      %3768 = dma.done [#allocation4], 2048
    $region53: #{tpu_custom_call.1} parent=1 // pred_fallthru
      _
    // Predicated region
    $region54: #{tpu_custom_call.1} parent=1 // pred_check
      _
    $region55: #{tpu_custom_call.1} parent=1 // pred_check_branch
      %3770 = sbr.rel (0) target = $region57
    $region56: #{tpu_custom_call.1} parent=1 // pred_region
      %3771 = dma.done [#allocation6], 512
    $region57: #{tpu_custom_call.1} parent=1 // pred_fallthru
      _
    %3772 = vsyncpa [#allocation4], 1
    %3773 = vsyncpa [#allocation6], 1

</llo_original>
